<compile_context>
chip_gen: v6e
topology: v6e:2x2x1
jax: 0.10.0
libtpu: 0.0.40
codegen_flags: <defaults>
</compile_context>

<pallas_src>
import math

import jax
import jax.numpy as jnp
from jax.experimental import pallas as pl
from jax.experimental.pallas import tpu as pltpu

# ---------------- model config (small, consistent with Args) ----------------
D_MODEL = 32
N_LAYER = 2
VOCAB = 40                        # already a multiple of pad_vocab_size_multiple=8
V_PAD = 128                       # lane-dense padded vocab per batch block
D_CONV = 4
D_STATE = 16
EXPAND = 2
D_INNER = EXPAND * D_MODEL        # 64
DT_RANK = math.ceil(D_MODEL / 16)  # 2
EPS = 1e-5

BATCH = 2
SEQ = 8
BD = BATCH * D_MODEL              # 64  residual-stream lanes
LANES = BATCH * D_INNER           # 128 conv/SSM lanes


def _shift_down(v, n):
    """Shift rows toward higher indices by n timesteps, zero-filling the top."""
    if n == 0:
        return v
    zeros = jnp.zeros((n, v.shape[1]), v.dtype)
    return jnp.concatenate([zeros, v[:v.shape[0] - n, :]], axis=0)


# ---------------------------------------------------------------------------
# Fused kernel: all residual Mamba blocks + final RMSNorm + tied lm_head.
# ---------------------------------------------------------------------------
def fused_mamba_kernel(x_ref, avg_ref, win_ref, cw_ref, cb_ref, wxdt_ref,
                       bdt_ref, a_ref, d_ref, wout_ref, head_ref, o_ref):
    avg = avg_ref[...]                                  # (BD, BD) block-diag 1/D_MODEL
    x = x_ref[...]                                      # (SEQ, BD) residual stream, f32

    def rms_normalize(v):
        # Segmented RMS mean over each batch's D_MODEL lanes via a
        # block-diagonal averaging matmul (one MXU push, no lane reduce /
        # reshape).  Norm weights are folded into the following matmul.
        ms = jnp.dot(v * v, avg, preferred_element_type=jnp.float32)
        return v * jax.lax.rsqrt(ms + EPS)

    def bcast_state_cols(row):
        # row: (1, BATCH*D_STATE) lane vector -> (D_STATE, LANES) with the
        # d_state values on sublanes, broadcast across each batch's d_inner
        # lanes (per-timestep B / C operand for the scan).
        m = jnp.broadcast_to(row[:, :, None], (1, BATCH * D_STATE, D_INNER))[0]
        return jnp.concatenate(
            [m[b * D_STATE:(b + 1) * D_STATE] for b in range(BATCH)], axis=1)

    for i in range(N_LAYER):                            # statically unrolled layers
        # RMSNorm (weight folded into in_proj) + block-diagonal in_proj
        xn = rms_normalize(x).astype(jnp.bfloat16)
        xz = jnp.dot(xn, win_ref[i],
                     preferred_element_type=jnp.float32)        # (SEQ, 2*LANES)
        xc0 = xz[:, :LANES]                             # conv path, batch-in-lanes
        z = xz[:, LANES:]                               # gate path, batch-in-lanes

        # Depthwise causal conv1d: K zero-fill row shifts.  Batches occupy
        # disjoint lane groups, so no cross-sequence masking is needed.
        cw = cw_ref[i]                                  # (D_CONV, LANES)
        conv = jnp.broadcast_to(cb_ref[i], (SEQ, LANES))
        for k in range(D_CONV):
            conv = conv + _shift_down(xc0, D_CONV - 1 - k) * cw[k:k + 1, :]
        xc = conv * jax.nn.sigmoid(conv)                # SiLU

        # Fused x_proj + dt_proj (dt_proj composed into the weight).
        # Output columns = [delta (LANES) | B (BATCH*N) | C (BATCH*N)].
        xdbl = jnp.dot(xc.astype(jnp.bfloat16), wxdt_ref[i],
                       preferred_element_type=jnp.float32)      # (SEQ, LANES+2*B*N)
        delta = xdbl[:, :LANES] + bdt_ref[i]
        delta = jnp.where(delta > 20.0, delta,
                          jnp.log1p(jnp.exp(jnp.minimum(delta, 20.0))))  # softplus
        dxc = delta * xc                                # (SEQ, LANES)

        # Selective scan; state h = (D_STATE, LANES) = (16, 128) (2 vregs).
        # A_bar / Bx / C are built per timestep -> no big live intermediates,
        # and the exp goes to the EUP interleaved with the scan FMAs.
        a_bd = a_ref[i]                                 # (D_STATE, LANES) = -exp(A_log)
        h = jnp.zeros((D_STATE, LANES), jnp.float32)
        ys = []
        for l in range(SEQ):
            a_bar = jnp.exp(delta[l:l + 1, :] * a_bd)                       # (N, LANES)
            b_l = bcast_state_cols(xdbl[l:l + 1, LANES:LANES + BATCH * D_STATE])
            c_l = bcast_state_cols(xdbl[l:l + 1, LANES + BATCH * D_STATE:])
            h = a_bar * h + b_l * dxc[l:l + 1, :]
            ys.append(jnp.sum(h * c_l, axis=0, keepdims=True))              # (1, LANES)
        y = jnp.concatenate(ys, axis=0)                 # (SEQ, LANES)

        y = y + xc * d_ref[i]                           # skip term D * x
        y = y * (z * jax.nn.sigmoid(z))                 # gate with SiLU(z)
        out = jnp.dot(y.astype(jnp.bfloat16), wout_ref[i],
                      preferred_element_type=jnp.float32)        # (SEQ, BD)
        x = x + out                                     # residual

    # Final RMSNorm (weight folded into the tied head) + lane-dense lm_head.
    xf = rms_normalize(x).astype(jnp.bfloat16)
    o_ref[...] = jnp.dot(xf, head_ref[...], preferred_element_type=jnp.float32)


# ---------------------------------------------------------------------------
# Wrapper
# ---------------------------------------------------------------------------
def mamba_lm_forward(input_ids, emb, params):
    B, L = input_ids.shape
    x = jnp.take(emb, input_ids, axis=0)                           # gather glue (B, L, D)
    x = jnp.transpose(x, (1, 0, 2)).reshape(L, B * D_MODEL)        # (SEQ, BD) batch-in-lanes

    operands = (x,) + params

    def full_spec(a):
        nd = a.ndim
        return pl.BlockSpec(a.shape, lambda i, _nd=nd: (0,) * _nd)

    out = pl.pallas_call(
        fused_mamba_kernel,
        out_shape=jax.ShapeDtypeStruct((SEQ, BATCH * V_PAD), jnp.float32),
        grid=(1,),
        in_specs=[full_spec(a) for a in operands],
        out_specs=pl.BlockSpec((SEQ, BATCH * V_PAD), lambda i: (0, 0)),
        compiler_params=pltpu.CompilerParams(dimension_semantics=("arbitrary",)),
    )(*operands)
    logits = out.reshape(SEQ, BATCH, V_PAD)
    logits = jnp.transpose(logits, (1, 0, 2))[:, :, :VOCAB]        # un-pad vocab
    return logits


# ---------------------------------------------------------------------------
# Raw weights (PyTorch layouts) and kernel packing (block-diag, bf16, folds).
# ---------------------------------------------------------------------------
def init_raw(key):
    keys = jax.random.split(key, 2 + N_LAYER)
    emb = jax.random.normal(keys[0], (VOCAB, D_MODEL), jnp.float32) * 0.02
    layers = []
    for i in range(N_LAYER):
        ks = jax.random.split(keys[1 + i], 8)
        layers.append(dict(
            norm=1.0 + 0.1 * jax.random.normal(ks[0], (D_MODEL,), jnp.float32),
            w_in=jax.random.normal(ks[1], (2 * D_INNER, D_MODEL), jnp.float32) * 0.05,
            conv_w=jax.random.normal(ks[2], (D_INNER, D_CONV), jnp.float32) * 0.2,
            conv_b=jax.random.normal(ks[3], (D_INNER,), jnp.float32) * 0.1,
            w_x=jax.random.normal(ks[4], (DT_RANK + 2 * D_STATE, D_INNER), jnp.float32) * 0.05,
            w_dt=jax.random.normal(ks[5], (D_INNER, DT_RANK), jnp.float32) * 0.1,
            b_dt=jax.random.normal(ks[6], (D_INNER,), jnp.float32) * 0.1,
            A_log=jnp.log(jnp.tile(jnp.arange(1, D_STATE + 1, dtype=jnp.float32)[None, :],
                                   (D_INNER, 1))),
            D=jnp.ones((D_INNER,), jnp.float32),
            w_out=jax.random.normal(ks[7], (D_MODEL, D_INNER), jnp.float32) * 0.05,
        ))
    norm_f = 1.0 + 0.1 * jax.random.normal(keys[-1], (D_MODEL,), jnp.float32)
    return dict(emb=emb, layers=layers, norm_f=norm_f)


def pack_params(raw):
    def tile_lanes(v):                                  # (D_INNER,) -> (1, LANES)
        return jnp.tile(v.reshape(1, -1), (1, BATCH))

    # block-diagonal per-batch averaging matrix for the segmented RMS mean
    avg = jnp.zeros((BD, BD), jnp.float32)
    blk = jnp.full((D_MODEL, D_MODEL), 1.0 / D_MODEL, jnp.float32)
    for b in range(BATCH):
        avg = avg.at[b * D_MODEL:(b + 1) * D_MODEL, b * D_MODEL:(b + 1) * D_MODEL].set(blk)

    win_l, cw_l, cb_l, wxdt_l, bdt_l, a_l, d_l, wout_l = ([] for _ in range(8))
    for lw in raw["layers"]:
        # in_proj with RMSNorm weight folded in; block-diag per batch;
        # columns: [xc (LANES, batch-in-lanes) | z (LANES, batch-in-lanes)]
        w_in_t = lw["norm"][:, None] * lw["w_in"].T                 # (D, 2*d_inner)
        win = jnp.zeros((BD, 2 * LANES), jnp.float32)
        for b in range(BATCH):
            r = slice(b * D_MODEL, (b + 1) * D_MODEL)
            win = win.at[r, b * D_INNER:(b + 1) * D_INNER].set(w_in_t[:, :D_INNER])
            win = win.at[r, LANES + b * D_INNER:LANES + (b + 1) * D_INNER].set(w_in_t[:, D_INNER:])
        win_l.append(win.astype(jnp.bfloat16))

        cw_l.append(jnp.tile(lw["conv_w"].T, (1, BATCH)))           # (K, LANES)
        cb_l.append(tile_lanes(lw["conv_b"]))

        # x_proj with dt_proj composed in: columns [delta(LANES) | B(B*N) | C(B*N)]
        w_x_t = lw["w_x"].T                                         # (d_inner, R+2N)
        w_delta = w_x_t[:, :DT_RANK] @ lw["w_dt"].T                 # (d_inner, d_inner)
        wxdt = jnp.zeros((LANES, LANES + 2 * BATCH * D_STATE), jnp.float32)
        for b in range(BATCH):
            r = slice(b * D_INNER, (b + 1) * D_INNER)
            wxdt = wxdt.at[r, b * D_INNER:(b + 1) * D_INNER].set(w_delta)
            ob = LANES + b * D_STATE
            wxdt = wxdt.at[r, ob:ob + D_STATE].set(w_x_t[:, DT_RANK:DT_RANK + D_STATE])
            oc = LANES + BATCH * D_STATE + b * D_STATE
            wxdt = wxdt.at[r, oc:oc + D_STATE].set(w_x_t[:, DT_RANK + D_STATE:])
        wxdt_l.append(wxdt.astype(jnp.bfloat16))

        bdt_l.append(tile_lanes(lw["b_dt"]))
        a_l.append(jnp.tile((-jnp.exp(lw["A_log"])).T, (1, BATCH)))  # (N, LANES)
        d_l.append(tile_lanes(lw["D"]))

        wout = jnp.zeros((LANES, BD), jnp.float32)                  # block-diag out_proj
        for b in range(BATCH):
            wout = wout.at[b * D_INNER:(b + 1) * D_INNER,
                           b * D_MODEL:(b + 1) * D_MODEL].set(lw["w_out"].T)
        wout_l.append(wout.astype(jnp.bfloat16))

    # tied lm_head with final RMSNorm weight folded in, vocab lane-padded
    head_blk = jnp.zeros((D_MODEL, V_PAD), jnp.float32).at[:, :VOCAB].set(
        raw["norm_f"][:, None] * raw["emb"].T)
    head = jnp.zeros((BD, BATCH * V_PAD), jnp.float32)
    for b in range(BATCH):
        head = head.at[b * D_MODEL:(b + 1) * D_MODEL, b * V_PAD:(b + 1) * V_PAD].set(head_blk)

    return (avg,
            jnp.stack(win_l), jnp.stack(cw_l), jnp.stack(cb_l),
            jnp.stack(wxdt_l), jnp.stack(bdt_l), jnp.stack(a_l),
            jnp.stack(d_l), jnp.stack(wout_l), head.astype(jnp.bfloat16))


# ---------------------------------------------------------------------------
# Pure-JAX f32 reference (same math as the PyTorch module) for correctness
# ---------------------------------------------------------------------------
def ref_forward(ids, raw):
    emb = raw["emb"]
    x = jnp.take(emb, ids, axis=0)                      # (B, L, D)
    for i in range(N_LAYER):
        lw = raw["layers"][i]
        xin = x
        xn = xin * jax.lax.rsqrt(jnp.mean(xin ** 2, -1, keepdims=True) + EPS) * lw["norm"]
        xz = xn @ lw["w_in"].T
        xc, z = xz[..., :D_INNER], xz[..., D_INNER:]
        xp = jnp.pad(xc, ((0, 0), (D_CONV - 1, 0), (0, 0)))
        conv = jnp.zeros_like(xc) + lw["conv_b"]
        for k in range(D_CONV):
            conv = conv + xp[:, k:k + SEQ, :] * lw["conv_w"][:, k]
        xc = jax.nn.silu(conv)
        xdbl = xc @ lw["w_x"].T
        dlt = xdbl[..., :DT_RANK]
        Bm = xdbl[..., DT_RANK:DT_RANK + D_STATE]
        Cm = xdbl[..., DT_RANK + D_STATE:]
        delta = jax.nn.softplus(dlt @ lw["w_dt"].T + lw["b_dt"])
        A = -jnp.exp(lw["A_log"])                        # (d_inner, N)
        A_bar = jnp.exp(jnp.einsum('bld,dn->bldn', delta, A))
        Bx = jnp.einsum('bld,bln,bld->bldn', delta, Bm, xc)
        h = jnp.zeros((BATCH, D_INNER, D_STATE), jnp.float32)
        ys = []
        for l in range(SEQ):
            h = A_bar[:, l] * h + Bx[:, l]
            ys.append(jnp.einsum('bdn,bn->bd', h, Cm[:, l]))
        y = jnp.stack(ys, axis=1)
        y = y + xc * lw["D"]
        y = y * jax.nn.silu(z)
        x = y @ lw["w_out"].T + xin
    xn = x * jax.lax.rsqrt(jnp.mean(x ** 2, -1, keepdims=True) + EPS) * raw["norm_f"]
    return xn @ emb.T                                    # tied weights


if __name__ == "__main__":
    key = jax.random.PRNGKey(0)
    pkey, ikey = jax.random.split(key)
    raw = init_raw(pkey)
    params = pack_params(raw)
    input_ids = jax.random.randint(ikey, (BATCH, SEQ), 0, VOCAB, dtype=jnp.int32)

    fwd = jax.jit(mamba_lm_forward)
    logits = jax.block_until_ready(fwd(input_ids, raw["emb"], params))

    ref = ref_forward(input_ids, raw)
    assert logits.shape == (BATCH, SEQ, VOCAB)
    max_err = float(jnp.max(jnp.abs(logits - ref)))
    # bf16 MXU operands in-kernel -> bf16-level tolerance vs. the pure-f32 reference
    assert jnp.allclose(logits, ref, atol=1e-2, rtol=1e-2), max_err

    print("KERNEL_OK")
</pallas_src>

<mosaic_0001>
module attributes {stable_mosaic.version = 11 : i64} {
  func.func @fused_mamba_kernel(%arg0: i32, %arg1: memref<8x64xf32, #tpu.memory_space<vmem>>, %arg2: memref<64x64xf32, #tpu.memory_space<vmem>>, %arg3: memref<2x64x256xbf16, #tpu.memory_space<vmem>>, %arg4: memref<2x4x128xf32, #tpu.memory_space<vmem>>, %arg5: memref<2x1x128xf32, #tpu.memory_space<vmem>>, %arg6: memref<2x128x192xbf16, #tpu.memory_space<vmem>>, %arg7: memref<2x1x128xf32, #tpu.memory_space<vmem>>, %arg8: memref<2x16x128xf32, #tpu.memory_space<vmem>>, %arg9: memref<2x1x128xf32, #tpu.memory_space<vmem>>, %arg10: memref<2x128x64xbf16, #tpu.memory_space<vmem>>, %arg11: memref<64x256xbf16, #tpu.memory_space<vmem>>, %arg12: memref<8x256xf32, #tpu.memory_space<vmem>>) attributes {dimension_semantics = [#tpu.dimension_semantics<arbitrary>], iteration_bounds = array<i64: 1>, scalar_prefetch = 0 : i64, scratch_operands = 0 : i64, tpu.core_type = #tpu.core_type<tc>, window_params = [{pipeline_mode = #tpu.pipeline_mode<synchronous>, transform_indices = @transform_0, window_bounds = array<i64: 8, 64>}, {pipeline_mode = #tpu.pipeline_mode<synchronous>, transform_indices = @transform_1, window_bounds = array<i64: 64, 64>}, {pipeline_mode = #tpu.pipeline_mode<synchronous>, transform_indices = @transform_2, window_bounds = array<i64: 2, 64, 256>}, {pipeline_mode = #tpu.pipeline_mode<synchronous>, transform_indices = @transform_3, window_bounds = array<i64: 2, 4, 128>}, {pipeline_mode = #tpu.pipeline_mode<synchronous>, transform_indices = @transform_4, window_bounds = array<i64: 2, 1, 128>}, {pipeline_mode = #tpu.pipeline_mode<synchronous>, transform_indices = @transform_5, window_bounds = array<i64: 2, 128, 192>}, {pipeline_mode = #tpu.pipeline_mode<synchronous>, transform_indices = @transform_6, window_bounds = array<i64: 2, 1, 128>}, {pipeline_mode = #tpu.pipeline_mode<synchronous>, transform_indices = @transform_7, window_bounds = array<i64: 2, 16, 128>}, {pipeline_mode = #tpu.pipeline_mode<synchronous>, transform_indices = @transform_8, window_bounds = array<i64: 2, 1, 128>}, {pipeline_mode = #tpu.pipeline_mode<synchronous>, transform_indices = @transform_9, window_bounds = array<i64: 2, 128, 64>}, {pipeline_mode = #tpu.pipeline_mode<synchronous>, transform_indices = @transform_10, window_bounds = array<i64: 64, 256>}, {pipeline_mode = #tpu.pipeline_mode<synchronous>, transform_indices = @transform_11, window_bounds = array<i64: 8, 256>}]} {
    %c0 = arith.constant 0 : index
    %c0_0 = arith.constant 0 : index
    %0 = vector.load %arg2[%c0, %c0_0] : memref<64x64xf32, #tpu.memory_space<vmem>>, vector<64x64xf32>
    %c0_1 = arith.constant 0 : index
    %c0_2 = arith.constant 0 : index
    %1 = vector.load %arg1[%c0_1, %c0_2] : memref<8x64xf32, #tpu.memory_space<vmem>>, vector<8x64xf32>
    %2 = arith.mulf %1, %1 : vector<8x64xf32>
    %cst = arith.constant dense<0.000000e+00> : vector<8x64xf32>
    %3 = tpu.matmul %2, %0, %cst {dimension_numbers = #tpu.dot_dimension_numbers<[1], [0], [0], [1], [0, 0, 1, 1], [], []>} : vector<8x64xf32>, vector<64x64xf32>, vector<8x64xf32> -> vector<8x64xf32>
    %cst_3 = arith.constant 9.99999974E-6 : f32
    %4 = vector.broadcast %cst_3 : f32 to vector<8x64xf32>
    %5 = arith.addf %3, %4 : vector<8x64xf32>
    %6 = math.rsqrt %5 : vector<8x64xf32>
    %7 = arith.mulf %1, %6 : vector<8x64xf32>
    %8 = arith.truncf %7 : vector<8x64xf32> to vector<8x64xbf16>
    %c0_4 = arith.constant 0 : index
    %c0_5 = arith.constant 0 : index
    %c0_6 = arith.constant 0 : index
    %9 = vector.load %arg3[%c0_4, %c0_5, %c0_6] : memref<2x64x256xbf16, #tpu.memory_space<vmem>>, vector<1x64x256xbf16>
    %10 = vector.shape_cast %9 : vector<1x64x256xbf16> to vector<64x256xbf16>
    %cst_7 = arith.constant dense<0.000000e+00> : vector<8x256xf32>
    %11 = tpu.matmul %8, %10, %cst_7 {dimension_numbers = #tpu.dot_dimension_numbers<[1], [0], [0], [1], [0, 0, 1, 1], [], []>} : vector<8x64xbf16>, vector<64x256xbf16>, vector<8x256xf32> -> vector<8x256xf32>
    %12 = vector.extract_strided_slice %11 {offsets = [0, 0], sizes = [8, 128], strides = [1, 1]} : vector<8x256xf32> to vector<8x128xf32>
    %13 = vector.extract_strided_slice %11 {offsets = [0, 128], sizes = [8, 128], strides = [1, 1]} : vector<8x256xf32> to vector<8x128xf32>
    %c0_8 = arith.constant 0 : index
    %c0_9 = arith.constant 0 : index
    %c0_10 = arith.constant 0 : index
    %14 = vector.load %arg4[%c0_8, %c0_9, %c0_10] : memref<2x4x128xf32, #tpu.memory_space<vmem>>, vector<1x4x128xf32>
    %15 = vector.shape_cast %14 : vector<1x4x128xf32> to vector<4x128xf32>
    %c0_11 = arith.constant 0 : index
    %c0_12 = arith.constant 0 : index
    %c0_13 = arith.constant 0 : index
    %16 = vector.load %arg5[%c0_11, %c0_12, %c0_13] : memref<2x1x128xf32, #tpu.memory_space<vmem>>, vector<1x1x128xf32>
    %17 = vector.shape_cast %16 : vector<1x1x128xf32> to vector<1x128xf32>
    %18 = vector.shape_cast %17 : vector<1x128xf32> to vector<1x128xf32>
    %19 = vector.broadcast %18 : vector<1x128xf32> to vector<8x128xf32>
    %cst_14 = arith.constant 0.000000e+00 : f32
    %20 = vector.broadcast %cst_14 : f32 to vector<3x128xf32>
    %21 = vector.extract_strided_slice %12 {offsets = [0, 0], sizes = [5, 128], strides = [1, 1]} : vector<8x128xf32> to vector<5x128xf32>
    %22 = tpu.concatenate %20, %21 in 0 : vector<3x128xf32>, vector<5x128xf32> -> vector<8x128xf32>
    %23 = vector.extract_strided_slice %15 {offsets = [0, 0], sizes = [1, 128], strides = [1, 1]} : vector<4x128xf32> to vector<1x128xf32>
    %24 = vector.broadcast %23 : vector<1x128xf32> to vector<8x128xf32>
    %25 = arith.mulf %22, %24 : vector<8x128xf32>
    %26 = arith.addf %19, %25 : vector<8x128xf32>
    %cst_15 = arith.constant 0.000000e+00 : f32
    %27 = vector.broadcast %cst_15 : f32 to vector<2x128xf32>
    %28 = vector.extract_strided_slice %12 {offsets = [0, 0], sizes = [6, 128], strides = [1, 1]} : vector<8x128xf32> to vector<6x128xf32>
    %29 = tpu.concatenate %27, %28 in 0 : vector<2x128xf32>, vector<6x128xf32> -> vector<8x128xf32>
    %30 = vector.extract_strided_slice %15 {offsets = [1, 0], sizes = [1, 128], strides = [1, 1]} : vector<4x128xf32> to vector<1x128xf32>
    %31 = vector.broadcast %30 : vector<1x128xf32> to vector<8x128xf32>
    %32 = arith.mulf %29, %31 : vector<8x128xf32>
    %33 = arith.addf %26, %32 : vector<8x128xf32>
    %cst_16 = arith.constant 0.000000e+00 : f32
    %34 = vector.broadcast %cst_16 : f32 to vector<1x128xf32>
    %35 = vector.extract_strided_slice %12 {offsets = [0, 0], sizes = [7, 128], strides = [1, 1]} : vector<8x128xf32> to vector<7x128xf32>
    %36 = tpu.concatenate %34, %35 in 0 : vector<1x128xf32>, vector<7x128xf32> -> vector<8x128xf32>
    %37 = vector.extract_strided_slice %15 {offsets = [2, 0], sizes = [1, 128], strides = [1, 1]} : vector<4x128xf32> to vector<1x128xf32>
    %38 = vector.broadcast %37 : vector<1x128xf32> to vector<8x128xf32>
    %39 = arith.mulf %36, %38 : vector<8x128xf32>
    %40 = arith.addf %33, %39 : vector<8x128xf32>
    %41 = vector.extract_strided_slice %15 {offsets = [3, 0], sizes = [1, 128], strides = [1, 1]} : vector<4x128xf32> to vector<1x128xf32>
    %42 = vector.broadcast %41 : vector<1x128xf32> to vector<8x128xf32>
    %43 = arith.mulf %12, %42 : vector<8x128xf32>
    %44 = arith.addf %40, %43 : vector<8x128xf32>
    %45 = arith.negf %44 : vector<8x128xf32>
    %46 = math.exp %45 : vector<8x128xf32>
    %cst_17 = arith.constant 1.000000e+00 : f32
    %47 = vector.broadcast %cst_17 : f32 to vector<8x128xf32>
    %48 = arith.addf %47, %46 : vector<8x128xf32>
    %49 = arith.divf %47, %48 : vector<8x128xf32>
    %50 = arith.mulf %44, %49 : vector<8x128xf32>
    %51 = arith.truncf %50 : vector<8x128xf32> to vector<8x128xbf16>
    %c0_18 = arith.constant 0 : index
    %c0_19 = arith.constant 0 : index
    %c0_20 = arith.constant 0 : index
    %52 = vector.load %arg6[%c0_18, %c0_19, %c0_20] : memref<2x128x192xbf16, #tpu.memory_space<vmem>>, vector<1x128x192xbf16>
    %53 = vector.shape_cast %52 : vector<1x128x192xbf16> to vector<128x192xbf16>
    %cst_21 = arith.constant dense<0.000000e+00> : vector<8x192xf32>
    %54 = tpu.matmul %51, %53, %cst_21 {dimension_numbers = #tpu.dot_dimension_numbers<[1], [0], [0], [1], [0, 0, 1, 1], [], []>} : vector<8x128xbf16>, vector<128x192xbf16>, vector<8x192xf32> -> vector<8x192xf32>
    %55 = vector.extract_strided_slice %54 {offsets = [0, 0], sizes = [8, 128], strides = [1, 1]} : vector<8x192xf32> to vector<8x128xf32>
    %c0_22 = arith.constant 0 : index
    %c0_23 = arith.constant 0 : index
    %c0_24 = arith.constant 0 : index
    %56 = vector.load %arg7[%c0_22, %c0_23, %c0_24] : memref<2x1x128xf32, #tpu.memory_space<vmem>>, vector<1x1x128xf32>
    %57 = vector.shape_cast %56 : vector<1x1x128xf32> to vector<1x128xf32>
    %58 = vector.broadcast %57 : vector<1x128xf32> to vector<8x128xf32>
    %59 = arith.addf %55, %58 : vector<8x128xf32>
    %cst_25 = arith.constant 2.000000e+01 : f32
    %60 = vector.broadcast %cst_25 : f32 to vector<8x128xf32>
    %61 = arith.cmpf ogt, %59, %60 : vector<8x128xf32>
    %cst_26 = arith.constant 2.000000e+01 : f32
    %62 = vector.broadcast %cst_26 : f32 to vector<8x128xf32>
    %63 = arith.minimumf %59, %62 : vector<8x128xf32>
    %64 = math.exp %63 : vector<8x128xf32>
    %65 = math.log1p %64 : vector<8x128xf32>
    %66 = arith.select %61, %59, %65 : vector<8x128xi1>, vector<8x128xf32>
    %67 = arith.mulf %66, %50 : vector<8x128xf32>
    %c0_27 = arith.constant 0 : index
    %c0_28 = arith.constant 0 : index
    %c0_29 = arith.constant 0 : index
    %68 = vector.load %arg8[%c0_27, %c0_28, %c0_29] : memref<2x16x128xf32, #tpu.memory_space<vmem>>, vector<1x16x128xf32>
    %69 = vector.shape_cast %68 : vector<1x16x128xf32> to vector<16x128xf32>
    %cst_30 = arith.constant 0.000000e+00 : f32
    %70 = vector.broadcast %cst_30 : f32 to vector<16x128xf32>
    %71 = vector.extract_strided_slice %66 {offsets = [0, 0], sizes = [1, 128], strides = [1, 1]} : vector<8x128xf32> to vector<1x128xf32>
    %72 = vector.broadcast %71 : vector<1x128xf32> to vector<16x128xf32>
    %73 = arith.mulf %72, %69 : vector<16x128xf32>
    %74 = math.exp %73 : vector<16x128xf32>
    %75 = vector.extract_strided_slice %54 {offsets = [0, 128], sizes = [1, 32], strides = [1, 1]} : vector<8x192xf32> to vector<1x32xf32>
    %76 = vector.shape_cast %75 : vector<1x32xf32> to vector<1x32x1xf32>
    %77 = vector.shape_cast %76 : vector<1x32x1xf32> to vector<1x32x1xf32>
    %78 = vector.broadcast %77 : vector<1x32x1xf32> to vector<1x32x64xf32>
    %79 = vector.shape_cast %78 : vector<1x32x64xf32> to vector<32x64xf32>
    %80 = vector.extract_strided_slice %79 {offsets = [0, 0], sizes = [16, 64], strides = [1, 1]} : vector<32x64xf32> to vector<16x64xf32>
    %81 = vector.extract_strided_slice %79 {offsets = [16, 0], sizes = [16, 64], strides = [1, 1]} : vector<32x64xf32> to vector<16x64xf32>
    %82 = tpu.concatenate %80, %81 in 1 : vector<16x64xf32>, vector<16x64xf32> -> vector<16x128xf32>
    %83 = vector.extract_strided_slice %54 {offsets = [0, 160], sizes = [1, 32], strides = [1, 1]} : vector<8x192xf32> to vector<1x32xf32>
    %84 = vector.shape_cast %83 : vector<1x32xf32> to vector<1x32x1xf32>
    %85 = vector.shape_cast %84 : vector<1x32x1xf32> to vector<1x32x1xf32>
    %86 = vector.broadcast %85 : vector<1x32x1xf32> to vector<1x32x64xf32>
    %87 = vector.shape_cast %86 : vector<1x32x64xf32> to vector<32x64xf32>
    %88 = vector.extract_strided_slice %87 {offsets = [0, 0], sizes = [16, 64], strides = [1, 1]} : vector<32x64xf32> to vector<16x64xf32>
    %89 = vector.extract_strided_slice %87 {offsets = [16, 0], sizes = [16, 64], strides = [1, 1]} : vector<32x64xf32> to vector<16x64xf32>
    %90 = tpu.concatenate %88, %89 in 1 : vector<16x64xf32>, vector<16x64xf32> -> vector<16x128xf32>
    %91 = arith.mulf %74, %70 : vector<16x128xf32>
    %92 = vector.extract_strided_slice %67 {offsets = [0, 0], sizes = [1, 128], strides = [1, 1]} : vector<8x128xf32> to vector<1x128xf32>
    %93 = vector.broadcast %92 : vector<1x128xf32> to vector<16x128xf32>
    %94 = arith.mulf %82, %93 : vector<16x128xf32>
    %95 = arith.addf %91, %94 : vector<16x128xf32>
    %96 = arith.mulf %95, %90 : vector<16x128xf32>
    %cst_31 = arith.constant dense<0.000000e+00> : vector<128xf32>
    %97 = vector.multi_reduction <add>, %96, %cst_31 [0] : vector<16x128xf32> to vector<128xf32>
    %98 = vector.shape_cast %97 : vector<128xf32> to vector<1x128xf32>
    %99 = vector.extract_strided_slice %66 {offsets = [1, 0], sizes = [1, 128], strides = [1, 1]} : vector<8x128xf32> to vector<1x128xf32>
    %100 = vector.broadcast %99 : vector<1x128xf32> to vector<16x128xf32>
    %101 = arith.mulf %100, %69 : vector<16x128xf32>
    %102 = math.exp %101 : vector<16x128xf32>
    %103 = vector.extract_strided_slice %54 {offsets = [1, 128], sizes = [1, 32], strides = [1, 1]} : vector<8x192xf32> to vector<1x32xf32>
    %104 = vector.shape_cast %103 : vector<1x32xf32> to vector<1x32x1xf32>
    %105 = vector.shape_cast %104 : vector<1x32x1xf32> to vector<1x32x1xf32>
    %106 = vector.broadcast %105 : vector<1x32x1xf32> to vector<1x32x64xf32>
    %107 = vector.shape_cast %106 : vector<1x32x64xf32> to vector<32x64xf32>
    %108 = vector.extract_strided_slice %107 {offsets = [0, 0], sizes = [16, 64], strides = [1, 1]} : vector<32x64xf32> to vector<16x64xf32>
    %109 = vector.extract_strided_slice %107 {offsets = [16, 0], sizes = [16, 64], strides = [1, 1]} : vector<32x64xf32> to vector<16x64xf32>
    %110 = tpu.concatenate %108, %109 in 1 : vector<16x64xf32>, vector<16x64xf32> -> vector<16x128xf32>
    %111 = vector.extract_strided_slice %54 {offsets = [1, 160], sizes = [1, 32], strides = [1, 1]} : vector<8x192xf32> to vector<1x32xf32>
    %112 = vector.shape_cast %111 : vector<1x32xf32> to vector<1x32x1xf32>
    %113 = vector.shape_cast %112 : vector<1x32x1xf32> to vector<1x32x1xf32>
    %114 = vector.broadcast %113 : vector<1x32x1xf32> to vector<1x32x64xf32>
    %115 = vector.shape_cast %114 : vector<1x32x64xf32> to vector<32x64xf32>
    %116 = vector.extract_strided_slice %115 {offsets = [0, 0], sizes = [16, 64], strides = [1, 1]} : vector<32x64xf32> to vector<16x64xf32>
    %117 = vector.extract_strided_slice %115 {offsets = [16, 0], sizes = [16, 64], strides = [1, 1]} : vector<32x64xf32> to vector<16x64xf32>
    %118 = tpu.concatenate %116, %117 in 1 : vector<16x64xf32>, vector<16x64xf32> -> vector<16x128xf32>
    %119 = arith.mulf %102, %95 : vector<16x128xf32>
    %120 = vector.extract_strided_slice %67 {offsets = [1, 0], sizes = [1, 128], strides = [1, 1]} : vector<8x128xf32> to vector<1x128xf32>
    %121 = vector.broadcast %120 : vector<1x128xf32> to vector<16x128xf32>
    %122 = arith.mulf %110, %121 : vector<16x128xf32>
    %123 = arith.addf %119, %122 : vector<16x128xf32>
    %124 = arith.mulf %123, %118 : vector<16x128xf32>
    %cst_32 = arith.constant dense<0.000000e+00> : vector<128xf32>
    %125 = vector.multi_reduction <add>, %124, %cst_32 [0] : vector<16x128xf32> to vector<128xf32>
    %126 = vector.shape_cast %125 : vector<128xf32> to vector<1x128xf32>
    %127 = vector.extract_strided_slice %66 {offsets = [2, 0], sizes = [1, 128], strides = [1, 1]} : vector<8x128xf32> to vector<1x128xf32>
    %128 = vector.broadcast %127 : vector<1x128xf32> to vector<16x128xf32>
    %129 = arith.mulf %128, %69 : vector<16x128xf32>
    %130 = math.exp %129 : vector<16x128xf32>
    %131 = vector.extract_strided_slice %54 {offsets = [2, 128], sizes = [1, 32], strides = [1, 1]} : vector<8x192xf32> to vector<1x32xf32>
    %132 = vector.shape_cast %131 : vector<1x32xf32> to vector<1x32x1xf32>
    %133 = vector.shape_cast %132 : vector<1x32x1xf32> to vector<1x32x1xf32>
    %134 = vector.broadcast %133 : vector<1x32x1xf32> to vector<1x32x64xf32>
    %135 = vector.shape_cast %134 : vector<1x32x64xf32> to vector<32x64xf32>
    %136 = vector.extract_strided_slice %135 {offsets = [0, 0], sizes = [16, 64], strides = [1, 1]} : vector<32x64xf32> to vector<16x64xf32>
    %137 = vector.extract_strided_slice %135 {offsets = [16, 0], sizes = [16, 64], strides = [1, 1]} : vector<32x64xf32> to vector<16x64xf32>
    %138 = tpu.concatenate %136, %137 in 1 : vector<16x64xf32>, vector<16x64xf32> -> vector<16x128xf32>
    %139 = vector.extract_strided_slice %54 {offsets = [2, 160], sizes = [1, 32], strides = [1, 1]} : vector<8x192xf32> to vector<1x32xf32>
    %140 = vector.shape_cast %139 : vector<1x32xf32> to vector<1x32x1xf32>
    %141 = vector.shape_cast %140 : vector<1x32x1xf32> to vector<1x32x1xf32>
    %142 = vector.broadcast %141 : vector<1x32x1xf32> to vector<1x32x64xf32>
    %143 = vector.shape_cast %142 : vector<1x32x64xf32> to vector<32x64xf32>
    %144 = vector.extract_strided_slice %143 {offsets = [0, 0], sizes = [16, 64], strides = [1, 1]} : vector<32x64xf32> to vector<16x64xf32>
    %145 = vector.extract_strided_slice %143 {offsets = [16, 0], sizes = [16, 64], strides = [1, 1]} : vector<32x64xf32> to vector<16x64xf32>
    %146 = tpu.concatenate %144, %145 in 1 : vector<16x64xf32>, vector<16x64xf32> -> vector<16x128xf32>
    %147 = arith.mulf %130, %123 : vector<16x128xf32>
    %148 = vector.extract_strided_slice %67 {offsets = [2, 0], sizes = [1, 128], strides = [1, 1]} : vector<8x128xf32> to vector<1x128xf32>
    %149 = vector.broadcast %148 : vector<1x128xf32> to vector<16x128xf32>
    %150 = arith.mulf %138, %149 : vector<16x128xf32>
    %151 = arith.addf %147, %150 : vector<16x128xf32>
    %152 = arith.mulf %151, %146 : vector<16x128xf32>
    %cst_33 = arith.constant dense<0.000000e+00> : vector<128xf32>
    %153 = vector.multi_reduction <add>, %152, %cst_33 [0] : vector<16x128xf32> to vector<128xf32>
    %154 = vector.shape_cast %153 : vector<128xf32> to vector<1x128xf32>
    %155 = vector.extract_strided_slice %66 {offsets = [3, 0], sizes = [1, 128], strides = [1, 1]} : vector<8x128xf32> to vector<1x128xf32>
    %156 = vector.broadcast %155 : vector<1x128xf32> to vector<16x128xf32>
    %157 = arith.mulf %156, %69 : vector<16x128xf32>
    %158 = math.exp %157 : vector<16x128xf32>
    %159 = vector.extract_strided_slice %54 {offsets = [3, 128], sizes = [1, 32], strides = [1, 1]} : vector<8x192xf32> to vector<1x32xf32>
    %160 = vector.shape_cast %159 : vector<1x32xf32> to vector<1x32x1xf32>
    %161 = vector.shape_cast %160 : vector<1x32x1xf32> to vector<1x32x1xf32>
    %162 = vector.broadcast %161 : vector<1x32x1xf32> to vector<1x32x64xf32>
    %163 = vector.shape_cast %162 : vector<1x32x64xf32> to vector<32x64xf32>
    %164 = vector.extract_strided_slice %163 {offsets = [0, 0], sizes = [16, 64], strides = [1, 1]} : vector<32x64xf32> to vector<16x64xf32>
    %165 = vector.extract_strided_slice %163 {offsets = [16, 0], sizes = [16, 64], strides = [1, 1]} : vector<32x64xf32> to vector<16x64xf32>
    %166 = tpu.concatenate %164, %165 in 1 : vector<16x64xf32>, vector<16x64xf32> -> vector<16x128xf32>
    %167 = vector.extract_strided_slice %54 {offsets = [3, 160], sizes = [1, 32], strides = [1, 1]} : vector<8x192xf32> to vector<1x32xf32>
    %168 = vector.shape_cast %167 : vector<1x32xf32> to vector<1x32x1xf32>
    %169 = vector.shape_cast %168 : vector<1x32x1xf32> to vector<1x32x1xf32>
    %170 = vector.broadcast %169 : vector<1x32x1xf32> to vector<1x32x64xf32>
    %171 = vector.shape_cast %170 : vector<1x32x64xf32> to vector<32x64xf32>
    %172 = vector.extract_strided_slice %171 {offsets = [0, 0], sizes = [16, 64], strides = [1, 1]} : vector<32x64xf32> to vector<16x64xf32>
    %173 = vector.extract_strided_slice %171 {offsets = [16, 0], sizes = [16, 64], strides = [1, 1]} : vector<32x64xf32> to vector<16x64xf32>
    %174 = tpu.concatenate %172, %173 in 1 : vector<16x64xf32>, vector<16x64xf32> -> vector<16x128xf32>
    %175 = arith.mulf %158, %151 : vector<16x128xf32>
    %176 = vector.extract_strided_slice %67 {offsets = [3, 0], sizes = [1, 128], strides = [1, 1]} : vector<8x128xf32> to vector<1x128xf32>
    %177 = vector.broadcast %176 : vector<1x128xf32> to vector<16x128xf32>
    %178 = arith.mulf %166, %177 : vector<16x128xf32>
    %179 = arith.addf %175, %178 : vector<16x128xf32>
    %180 = arith.mulf %179, %174 : vector<16x128xf32>
    %cst_34 = arith.constant dense<0.000000e+00> : vector<128xf32>
    %181 = vector.multi_reduction <add>, %180, %cst_34 [0] : vector<16x128xf32> to vector<128xf32>
    %182 = vector.shape_cast %181 : vector<128xf32> to vector<1x128xf32>
    %183 = vector.extract_strided_slice %66 {offsets = [4, 0], sizes = [1, 128], strides = [1, 1]} : vector<8x128xf32> to vector<1x128xf32>
    %184 = vector.broadcast %183 : vector<1x128xf32> to vector<16x128xf32>
    %185 = arith.mulf %184, %69 : vector<16x128xf32>
    %186 = math.exp %185 : vector<16x128xf32>
    %187 = vector.extract_strided_slice %54 {offsets = [4, 128], sizes = [1, 32], strides = [1, 1]} : vector<8x192xf32> to vector<1x32xf32>
    %188 = vector.shape_cast %187 : vector<1x32xf32> to vector<1x32x1xf32>
    %189 = vector.shape_cast %188 : vector<1x32x1xf32> to vector<1x32x1xf32>
    %190 = vector.broadcast %189 : vector<1x32x1xf32> to vector<1x32x64xf32>
    %191 = vector.shape_cast %190 : vector<1x32x64xf32> to vector<32x64xf32>
    %192 = vector.extract_strided_slice %191 {offsets = [0, 0], sizes = [16, 64], strides = [1, 1]} : vector<32x64xf32> to vector<16x64xf32>
    %193 = vector.extract_strided_slice %191 {offsets = [16, 0], sizes = [16, 64], strides = [1, 1]} : vector<32x64xf32> to vector<16x64xf32>
    %194 = tpu.concatenate %192, %193 in 1 : vector<16x64xf32>, vector<16x64xf32> -> vector<16x128xf32>
    %195 = vector.extract_strided_slice %54 {offsets = [4, 160], sizes = [1, 32], strides = [1, 1]} : vector<8x192xf32> to vector<1x32xf32>
    %196 = vector.shape_cast %195 : vector<1x32xf32> to vector<1x32x1xf32>
    %197 = vector.shape_cast %196 : vector<1x32x1xf32> to vector<1x32x1xf32>
    %198 = vector.broadcast %197 : vector<1x32x1xf32> to vector<1x32x64xf32>
    %199 = vector.shape_cast %198 : vector<1x32x64xf32> to vector<32x64xf32>
    %200 = vector.extract_strided_slice %199 {offsets = [0, 0], sizes = [16, 64], strides = [1, 1]} : vector<32x64xf32> to vector<16x64xf32>
    %201 = vector.extract_strided_slice %199 {offsets = [16, 0], sizes = [16, 64], strides = [1, 1]} : vector<32x64xf32> to vector<16x64xf32>
    %202 = tpu.concatenate %200, %201 in 1 : vector<16x64xf32>, vector<16x64xf32> -> vector<16x128xf32>
    %203 = arith.mulf %186, %179 : vector<16x128xf32>
    %204 = vector.extract_strided_slice %67 {offsets = [4, 0], sizes = [1, 128], strides = [1, 1]} : vector<8x128xf32> to vector<1x128xf32>
    %205 = vector.broadcast %204 : vector<1x128xf32> to vector<16x128xf32>
    %206 = arith.mulf %194, %205 : vector<16x128xf32>
    %207 = arith.addf %203, %206 : vector<16x128xf32>
    %208 = arith.mulf %207, %202 : vector<16x128xf32>
    %cst_35 = arith.constant dense<0.000000e+00> : vector<128xf32>
    %209 = vector.multi_reduction <add>, %208, %cst_35 [0] : vector<16x128xf32> to vector<128xf32>
    %210 = vector.shape_cast %209 : vector<128xf32> to vector<1x128xf32>
    %211 = vector.extract_strided_slice %66 {offsets = [5, 0], sizes = [1, 128], strides = [1, 1]} : vector<8x128xf32> to vector<1x128xf32>
    %212 = vector.broadcast %211 : vector<1x128xf32> to vector<16x128xf32>
    %213 = arith.mulf %212, %69 : vector<16x128xf32>
    %214 = math.exp %213 : vector<16x128xf32>
    %215 = vector.extract_strided_slice %54 {offsets = [5, 128], sizes = [1, 32], strides = [1, 1]} : vector<8x192xf32> to vector<1x32xf32>
    %216 = vector.shape_cast %215 : vector<1x32xf32> to vector<1x32x1xf32>
    %217 = vector.shape_cast %216 : vector<1x32x1xf32> to vector<1x32x1xf32>
    %218 = vector.broadcast %217 : vector<1x32x1xf32> to vector<1x32x64xf32>
    %219 = vector.shape_cast %218 : vector<1x32x64xf32> to vector<32x64xf32>
    %220 = vector.extract_strided_slice %219 {offsets = [0, 0], sizes = [16, 64], strides = [1, 1]} : vector<32x64xf32> to vector<16x64xf32>
    %221 = vector.extract_strided_slice %219 {offsets = [16, 0], sizes = [16, 64], strides = [1, 1]} : vector<32x64xf32> to vector<16x64xf32>
    %222 = tpu.concatenate %220, %221 in 1 : vector<16x64xf32>, vector<16x64xf32> -> vector<16x128xf32>
    %223 = vector.extract_strided_slice %54 {offsets = [5, 160], sizes = [1, 32], strides = [1, 1]} : vector<8x192xf32> to vector<1x32xf32>
    %224 = vector.shape_cast %223 : vector<1x32xf32> to vector<1x32x1xf32>
    %225 = vector.shape_cast %224 : vector<1x32x1xf32> to vector<1x32x1xf32>
    %226 = vector.broadcast %225 : vector<1x32x1xf32> to vector<1x32x64xf32>
    %227 = vector.shape_cast %226 : vector<1x32x64xf32> to vector<32x64xf32>
    %228 = vector.extract_strided_slice %227 {offsets = [0, 0], sizes = [16, 64], strides = [1, 1]} : vector<32x64xf32> to vector<16x64xf32>
    %229 = vector.extract_strided_slice %227 {offsets = [16, 0], sizes = [16, 64], strides = [1, 1]} : vector<32x64xf32> to vector<16x64xf32>
    %230 = tpu.concatenate %228, %229 in 1 : vector<16x64xf32>, vector<16x64xf32> -> vector<16x128xf32>
    %231 = arith.mulf %214, %207 : vector<16x128xf32>
    %232 = vector.extract_strided_slice %67 {offsets = [5, 0], sizes = [1, 128], strides = [1, 1]} : vector<8x128xf32> to vector<1x128xf32>
    %233 = vector.broadcast %232 : vector<1x128xf32> to vector<16x128xf32>
    %234 = arith.mulf %222, %233 : vector<16x128xf32>
    %235 = arith.addf %231, %234 : vector<16x128xf32>
    %236 = arith.mulf %235, %230 : vector<16x128xf32>
    %cst_36 = arith.constant dense<0.000000e+00> : vector<128xf32>
    %237 = vector.multi_reduction <add>, %236, %cst_36 [0] : vector<16x128xf32> to vector<128xf32>
    %238 = vector.shape_cast %237 : vector<128xf32> to vector<1x128xf32>
    %239 = vector.extract_strided_slice %66 {offsets = [6, 0], sizes = [1, 128], strides = [1, 1]} : vector<8x128xf32> to vector<1x128xf32>
    %240 = vector.broadcast %239 : vector<1x128xf32> to vector<16x128xf32>
    %241 = arith.mulf %240, %69 : vector<16x128xf32>
    %242 = math.exp %241 : vector<16x128xf32>
    %243 = vector.extract_strided_slice %54 {offsets = [6, 128], sizes = [1, 32], strides = [1, 1]} : vector<8x192xf32> to vector<1x32xf32>
    %244 = vector.shape_cast %243 : vector<1x32xf32> to vector<1x32x1xf32>
    %245 = vector.shape_cast %244 : vector<1x32x1xf32> to vector<1x32x1xf32>
    %246 = vector.broadcast %245 : vector<1x32x1xf32> to vector<1x32x64xf32>
    %247 = vector.shape_cast %246 : vector<1x32x64xf32> to vector<32x64xf32>
    %248 = vector.extract_strided_slice %247 {offsets = [0, 0], sizes = [16, 64], strides = [1, 1]} : vector<32x64xf32> to vector<16x64xf32>
    %249 = vector.extract_strided_slice %247 {offsets = [16, 0], sizes = [16, 64], strides = [1, 1]} : vector<32x64xf32> to vector<16x64xf32>
    %250 = tpu.concatenate %248, %249 in 1 : vector<16x64xf32>, vector<16x64xf32> -> vector<16x128xf32>
    %251 = vector.extract_strided_slice %54 {offsets = [6, 160], sizes = [1, 32], strides = [1, 1]} : vector<8x192xf32> to vector<1x32xf32>
    %252 = vector.shape_cast %251 : vector<1x32xf32> to vector<1x32x1xf32>
    %253 = vector.shape_cast %252 : vector<1x32x1xf32> to vector<1x32x1xf32>
    %254 = vector.broadcast %253 : vector<1x32x1xf32> to vector<1x32x64xf32>
    %255 = vector.shape_cast %254 : vector<1x32x64xf32> to vector<32x64xf32>
    %256 = vector.extract_strided_slice %255 {offsets = [0, 0], sizes = [16, 64], strides = [1, 1]} : vector<32x64xf32> to vector<16x64xf32>
    %257 = vector.extract_strided_slice %255 {offsets = [16, 0], sizes = [16, 64], strides = [1, 1]} : vector<32x64xf32> to vector<16x64xf32>
    %258 = tpu.concatenate %256, %257 in 1 : vector<16x64xf32>, vector<16x64xf32> -> vector<16x128xf32>
    %259 = arith.mulf %242, %235 : vector<16x128xf32>
    %260 = vector.extract_strided_slice %67 {offsets = [6, 0], sizes = [1, 128], strides = [1, 1]} : vector<8x128xf32> to vector<1x128xf32>
    %261 = vector.broadcast %260 : vector<1x128xf32> to vector<16x128xf32>
    %262 = arith.mulf %250, %261 : vector<16x128xf32>
    %263 = arith.addf %259, %262 : vector<16x128xf32>
    %264 = arith.mulf %263, %258 : vector<16x128xf32>
    %cst_37 = arith.constant dense<0.000000e+00> : vector<128xf32>
    %265 = vector.multi_reduction <add>, %264, %cst_37 [0] : vector<16x128xf32> to vector<128xf32>
    %266 = vector.shape_cast %265 : vector<128xf32> to vector<1x128xf32>
    %267 = vector.extract_strided_slice %66 {offsets = [7, 0], sizes = [1, 128], strides = [1, 1]} : vector<8x128xf32> to vector<1x128xf32>
    %268 = vector.broadcast %267 : vector<1x128xf32> to vector<16x128xf32>
    %269 = arith.mulf %268, %69 : vector<16x128xf32>
    %270 = math.exp %269 : vector<16x128xf32>
    %271 = vector.extract_strided_slice %54 {offsets = [7, 128], sizes = [1, 32], strides = [1, 1]} : vector<8x192xf32> to vector<1x32xf32>
    %272 = vector.shape_cast %271 : vector<1x32xf32> to vector<1x32x1xf32>
    %273 = vector.shape_cast %272 : vector<1x32x1xf32> to vector<1x32x1xf32>
    %274 = vector.broadcast %273 : vector<1x32x1xf32> to vector<1x32x64xf32>
    %275 = vector.shape_cast %274 : vector<1x32x64xf32> to vector<32x64xf32>
    %276 = vector.extract_strided_slice %275 {offsets = [0, 0], sizes = [16, 64], strides = [1, 1]} : vector<32x64xf32> to vector<16x64xf32>
    %277 = vector.extract_strided_slice %275 {offsets = [16, 0], sizes = [16, 64], strides = [1, 1]} : vector<32x64xf32> to vector<16x64xf32>
    %278 = tpu.concatenate %276, %277 in 1 : vector<16x64xf32>, vector<16x64xf32> -> vector<16x128xf32>
    %279 = vector.extract_strided_slice %54 {offsets = [7, 160], sizes = [1, 32], strides = [1, 1]} : vector<8x192xf32> to vector<1x32xf32>
    %280 = vector.shape_cast %279 : vector<1x32xf32> to vector<1x32x1xf32>
    %281 = vector.shape_cast %280 : vector<1x32x1xf32> to vector<1x32x1xf32>
    %282 = vector.broadcast %281 : vector<1x32x1xf32> to vector<1x32x64xf32>
    %283 = vector.shape_cast %282 : vector<1x32x64xf32> to vector<32x64xf32>
    %284 = vector.extract_strided_slice %283 {offsets = [0, 0], sizes = [16, 64], strides = [1, 1]} : vector<32x64xf32> to vector<16x64xf32>
    %285 = vector.extract_strided_slice %283 {offsets = [16, 0], sizes = [16, 64], strides = [1, 1]} : vector<32x64xf32> to vector<16x64xf32>
    %286 = tpu.concatenate %284, %285 in 1 : vector<16x64xf32>, vector<16x64xf32> -> vector<16x128xf32>
    %287 = arith.mulf %270, %263 : vector<16x128xf32>
    %288 = vector.extract_strided_slice %67 {offsets = [7, 0], sizes = [1, 128], strides = [1, 1]} : vector<8x128xf32> to vector<1x128xf32>
    %289 = vector.broadcast %288 : vector<1x128xf32> to vector<16x128xf32>
    %290 = arith.mulf %278, %289 : vector<16x128xf32>
    %291 = arith.addf %287, %290 : vector<16x128xf32>
    %292 = arith.mulf %291, %286 : vector<16x128xf32>
    %cst_38 = arith.constant dense<0.000000e+00> : vector<128xf32>
    %293 = vector.multi_reduction <add>, %292, %cst_38 [0] : vector<16x128xf32> to vector<128xf32>
    %294 = vector.shape_cast %293 : vector<128xf32> to vector<1x128xf32>
    %295 = tpu.concatenate %98, %126, %154, %182, %210, %238, %266, %294 in 0 : vector<1x128xf32>, vector<1x128xf32>, vector<1x128xf32>, vector<1x128xf32>, vector<1x128xf32>, vector<1x128xf32>, vector<1x128xf32>, vector<1x128xf32> -> vector<8x128xf32>
    %c0_39 = arith.constant 0 : index
    %c0_40 = arith.constant 0 : index
    %c0_41 = arith.constant 0 : index
    %296 = vector.load %arg9[%c0_39, %c0_40, %c0_41] : memref<2x1x128xf32, #tpu.memory_space<vmem>>, vector<1x1x128xf32>
    %297 = vector.shape_cast %296 : vector<1x1x128xf32> to vector<1x128xf32>
    %298 = vector.broadcast %297 : vector<1x128xf32> to vector<8x128xf32>
    %299 = arith.mulf %50, %298 : vector<8x128xf32>
    %300 = arith.addf %295, %299 : vector<8x128xf32>
    %301 = arith.negf %13 : vector<8x128xf32>
    %302 = math.exp %301 : vector<8x128xf32>
    %cst_42 = arith.constant 1.000000e+00 : f32
    %303 = vector.broadcast %cst_42 : f32 to vector<8x128xf32>
    %304 = arith.addf %303, %302 : vector<8x128xf32>
    %305 = arith.divf %303, %304 : vector<8x128xf32>
    %306 = arith.mulf %13, %305 : vector<8x128xf32>
    %307 = arith.mulf %300, %306 : vector<8x128xf32>
    %308 = arith.truncf %307 : vector<8x128xf32> to vector<8x128xbf16>
    %c0_43 = arith.constant 0 : index
    %c0_44 = arith.constant 0 : index
    %c0_45 = arith.constant 0 : index
    %309 = vector.load %arg10[%c0_43, %c0_44, %c0_45] : memref<2x128x64xbf16, #tpu.memory_space<vmem>>, vector<1x128x64xbf16>
    %310 = vector.shape_cast %309 : vector<1x128x64xbf16> to vector<128x64xbf16>
    %cst_46 = arith.constant dense<0.000000e+00> : vector<8x64xf32>
    %311 = tpu.matmul %308, %310, %cst_46 {dimension_numbers = #tpu.dot_dimension_numbers<[1], [0], [0], [1], [0, 0, 1, 1], [], []>} : vector<8x128xbf16>, vector<128x64xbf16>, vector<8x64xf32> -> vector<8x64xf32>
    %312 = arith.addf %1, %311 : vector<8x64xf32>
    %313 = arith.mulf %312, %312 : vector<8x64xf32>
    %cst_47 = arith.constant dense<0.000000e+00> : vector<8x64xf32>
    %314 = tpu.matmul %313, %0, %cst_47 {dimension_numbers = #tpu.dot_dimension_numbers<[1], [0], [0], [1], [0, 0, 1, 1], [], []>} : vector<8x64xf32>, vector<64x64xf32>, vector<8x64xf32> -> vector<8x64xf32>
    %cst_48 = arith.constant 9.99999974E-6 : f32
    %315 = vector.broadcast %cst_48 : f32 to vector<8x64xf32>
    %316 = arith.addf %314, %315 : vector<8x64xf32>
    %317 = math.rsqrt %316 : vector<8x64xf32>
    %318 = arith.mulf %312, %317 : vector<8x64xf32>
    %319 = arith.truncf %318 : vector<8x64xf32> to vector<8x64xbf16>
    %c1 = arith.constant 1 : index
    %c0_49 = arith.constant 0 : index
    %c0_50 = arith.constant 0 : index
    %320 = vector.load %arg3[%c1, %c0_49, %c0_50] : memref<2x64x256xbf16, #tpu.memory_space<vmem>>, vector<1x64x256xbf16>
    %321 = vector.shape_cast %320 : vector<1x64x256xbf16> to vector<64x256xbf16>
    %cst_51 = arith.constant dense<0.000000e+00> : vector<8x256xf32>
    %322 = tpu.matmul %319, %321, %cst_51 {dimension_numbers = #tpu.dot_dimension_numbers<[1], [0], [0], [1], [0, 0, 1, 1], [], []>} : vector<8x64xbf16>, vector<64x256xbf16>, vector<8x256xf32> -> vector<8x256xf32>
    %323 = vector.extract_strided_slice %322 {offsets = [0, 0], sizes = [8, 128], strides = [1, 1]} : vector<8x256xf32> to vector<8x128xf32>
    %324 = vector.extract_strided_slice %322 {offsets = [0, 128], sizes = [8, 128], strides = [1, 1]} : vector<8x256xf32> to vector<8x128xf32>
    %c1_52 = arith.constant 1 : index
    %c0_53 = arith.constant 0 : index
    %c0_54 = arith.constant 0 : index
    %325 = vector.load %arg4[%c1_52, %c0_53, %c0_54] : memref<2x4x128xf32, #tpu.memory_space<vmem>>, vector<1x4x128xf32>
    %326 = vector.shape_cast %325 : vector<1x4x128xf32> to vector<4x128xf32>
    %c1_55 = arith.constant 1 : index
    %c0_56 = arith.constant 0 : index
    %c0_57 = arith.constant 0 : index
    %327 = vector.load %arg5[%c1_55, %c0_56, %c0_57] : memref<2x1x128xf32, #tpu.memory_space<vmem>>, vector<1x1x128xf32>
    %328 = vector.shape_cast %327 : vector<1x1x128xf32> to vector<1x128xf32>
    %329 = vector.shape_cast %328 : vector<1x128xf32> to vector<1x128xf32>
    %330 = vector.broadcast %329 : vector<1x128xf32> to vector<8x128xf32>
    %cst_58 = arith.constant 0.000000e+00 : f32
    %331 = vector.broadcast %cst_58 : f32 to vector<3x128xf32>
    %332 = vector.extract_strided_slice %323 {offsets = [0, 0], sizes = [5, 128], strides = [1, 1]} : vector<8x128xf32> to vector<5x128xf32>
    %333 = tpu.concatenate %331, %332 in 0 : vector<3x128xf32>, vector<5x128xf32> -> vector<8x128xf32>
    %334 = vector.extract_strided_slice %326 {offsets = [0, 0], sizes = [1, 128], strides = [1, 1]} : vector<4x128xf32> to vector<1x128xf32>
    %335 = vector.broadcast %334 : vector<1x128xf32> to vector<8x128xf32>
    %336 = arith.mulf %333, %335 : vector<8x128xf32>
    %337 = arith.addf %330, %336 : vector<8x128xf32>
    %cst_59 = arith.constant 0.000000e+00 : f32
    %338 = vector.broadcast %cst_59 : f32 to vector<2x128xf32>
    %339 = vector.extract_strided_slice %323 {offsets = [0, 0], sizes = [6, 128], strides = [1, 1]} : vector<8x128xf32> to vector<6x128xf32>
    %340 = tpu.concatenate %338, %339 in 0 : vector<2x128xf32>, vector<6x128xf32> -> vector<8x128xf32>
    %341 = vector.extract_strided_slice %326 {offsets = [1, 0], sizes = [1, 128], strides = [1, 1]} : vector<4x128xf32> to vector<1x128xf32>
    %342 = vector.broadcast %341 : vector<1x128xf32> to vector<8x128xf32>
    %343 = arith.mulf %340, %342 : vector<8x128xf32>
    %344 = arith.addf %337, %343 : vector<8x128xf32>
    %cst_60 = arith.constant 0.000000e+00 : f32
    %345 = vector.broadcast %cst_60 : f32 to vector<1x128xf32>
    %346 = vector.extract_strided_slice %323 {offsets = [0, 0], sizes = [7, 128], strides = [1, 1]} : vector<8x128xf32> to vector<7x128xf32>
    %347 = tpu.concatenate %345, %346 in 0 : vector<1x128xf32>, vector<7x128xf32> -> vector<8x128xf32>
    %348 = vector.extract_strided_slice %326 {offsets = [2, 0], sizes = [1, 128], strides = [1, 1]} : vector<4x128xf32> to vector<1x128xf32>
    %349 = vector.broadcast %348 : vector<1x128xf32> to vector<8x128xf32>
    %350 = arith.mulf %347, %349 : vector<8x128xf32>
    %351 = arith.addf %344, %350 : vector<8x128xf32>
    %352 = vector.extract_strided_slice %326 {offsets = [3, 0], sizes = [1, 128], strides = [1, 1]} : vector<4x128xf32> to vector<1x128xf32>
    %353 = vector.broadcast %352 : vector<1x128xf32> to vector<8x128xf32>
    %354 = arith.mulf %323, %353 : vector<8x128xf32>
    %355 = arith.addf %351, %354 : vector<8x128xf32>
    %356 = arith.negf %355 : vector<8x128xf32>
    %357 = math.exp %356 : vector<8x128xf32>
    %cst_61 = arith.constant 1.000000e+00 : f32
    %358 = vector.broadcast %cst_61 : f32 to vector<8x128xf32>
    %359 = arith.addf %358, %357 : vector<8x128xf32>
    %360 = arith.divf %358, %359 : vector<8x128xf32>
    %361 = arith.mulf %355, %360 : vector<8x128xf32>
    %362 = arith.truncf %361 : vector<8x128xf32> to vector<8x128xbf16>
    %c1_62 = arith.constant 1 : index
    %c0_63 = arith.constant 0 : index
    %c0_64 = arith.constant 0 : index
    %363 = vector.load %arg6[%c1_62, %c0_63, %c0_64] : memref<2x128x192xbf16, #tpu.memory_space<vmem>>, vector<1x128x192xbf16>
    %364 = vector.shape_cast %363 : vector<1x128x192xbf16> to vector<128x192xbf16>
    %cst_65 = arith.constant dense<0.000000e+00> : vector<8x192xf32>
    %365 = tpu.matmul %362, %364, %cst_65 {dimension_numbers = #tpu.dot_dimension_numbers<[1], [0], [0], [1], [0, 0, 1, 1], [], []>} : vector<8x128xbf16>, vector<128x192xbf16>, vector<8x192xf32> -> vector<8x192xf32>
    %366 = vector.extract_strided_slice %365 {offsets = [0, 0], sizes = [8, 128], strides = [1, 1]} : vector<8x192xf32> to vector<8x128xf32>
    %c1_66 = arith.constant 1 : index
    %c0_67 = arith.constant 0 : index
    %c0_68 = arith.constant 0 : index
    %367 = vector.load %arg7[%c1_66, %c0_67, %c0_68] : memref<2x1x128xf32, #tpu.memory_space<vmem>>, vector<1x1x128xf32>
    %368 = vector.shape_cast %367 : vector<1x1x128xf32> to vector<1x128xf32>
    %369 = vector.broadcast %368 : vector<1x128xf32> to vector<8x128xf32>
    %370 = arith.addf %366, %369 : vector<8x128xf32>
    %cst_69 = arith.constant 2.000000e+01 : f32
    %371 = vector.broadcast %cst_69 : f32 to vector<8x128xf32>
    %372 = arith.cmpf ogt, %370, %371 : vector<8x128xf32>
    %cst_70 = arith.constant 2.000000e+01 : f32
    %373 = vector.broadcast %cst_70 : f32 to vector<8x128xf32>
    %374 = arith.minimumf %370, %373 : vector<8x128xf32>
    %375 = math.exp %374 : vector<8x128xf32>
    %376 = math.log1p %375 : vector<8x128xf32>
    %377 = arith.select %372, %370, %376 : vector<8x128xi1>, vector<8x128xf32>
    %378 = arith.mulf %377, %361 : vector<8x128xf32>
    %c1_71 = arith.constant 1 : index
    %c0_72 = arith.constant 0 : index
    %c0_73 = arith.constant 0 : index
    %379 = vector.load %arg8[%c1_71, %c0_72, %c0_73] : memref<2x16x128xf32, #tpu.memory_space<vmem>>, vector<1x16x128xf32>
    %380 = vector.shape_cast %379 : vector<1x16x128xf32> to vector<16x128xf32>
    %cst_74 = arith.constant 0.000000e+00 : f32
    %381 = vector.broadcast %cst_74 : f32 to vector<16x128xf32>
    %382 = vector.extract_strided_slice %377 {offsets = [0, 0], sizes = [1, 128], strides = [1, 1]} : vector<8x128xf32> to vector<1x128xf32>
    %383 = vector.broadcast %382 : vector<1x128xf32> to vector<16x128xf32>
    %384 = arith.mulf %383, %380 : vector<16x128xf32>
    %385 = math.exp %384 : vector<16x128xf32>
    %386 = vector.extract_strided_slice %365 {offsets = [0, 128], sizes = [1, 32], strides = [1, 1]} : vector<8x192xf32> to vector<1x32xf32>
    %387 = vector.shape_cast %386 : vector<1x32xf32> to vector<1x32x1xf32>
    %388 = vector.shape_cast %387 : vector<1x32x1xf32> to vector<1x32x1xf32>
    %389 = vector.broadcast %388 : vector<1x32x1xf32> to vector<1x32x64xf32>
    %390 = vector.shape_cast %389 : vector<1x32x64xf32> to vector<32x64xf32>
    %391 = vector.extract_strided_slice %390 {offsets = [0, 0], sizes = [16, 64], strides = [1, 1]} : vector<32x64xf32> to vector<16x64xf32>
    %392 = vector.extract_strided_slice %390 {offsets = [16, 0], sizes = [16, 64], strides = [1, 1]} : vector<32x64xf32> to vector<16x64xf32>
    %393 = tpu.concatenate %391, %392 in 1 : vector<16x64xf32>, vector<16x64xf32> -> vector<16x128xf32>
    %394 = vector.extract_strided_slice %365 {offsets = [0, 160], sizes = [1, 32], strides = [1, 1]} : vector<8x192xf32> to vector<1x32xf32>
    %395 = vector.shape_cast %394 : vector<1x32xf32> to vector<1x32x1xf32>
    %396 = vector.shape_cast %395 : vector<1x32x1xf32> to vector<1x32x1xf32>
    %397 = vector.broadcast %396 : vector<1x32x1xf32> to vector<1x32x64xf32>
    %398 = vector.shape_cast %397 : vector<1x32x64xf32> to vector<32x64xf32>
    %399 = vector.extract_strided_slice %398 {offsets = [0, 0], sizes = [16, 64], strides = [1, 1]} : vector<32x64xf32> to vector<16x64xf32>
    %400 = vector.extract_strided_slice %398 {offsets = [16, 0], sizes = [16, 64], strides = [1, 1]} : vector<32x64xf32> to vector<16x64xf32>
    %401 = tpu.concatenate %399, %400 in 1 : vector<16x64xf32>, vector<16x64xf32> -> vector<16x128xf32>
    %402 = arith.mulf %385, %381 : vector<16x128xf32>
    %403 = vector.extract_strided_slice %378 {offsets = [0, 0], sizes = [1, 128], strides = [1, 1]} : vector<8x128xf32> to vector<1x128xf32>
    %404 = vector.broadcast %403 : vector<1x128xf32> to vector<16x128xf32>
    %405 = arith.mulf %393, %404 : vector<16x128xf32>
    %406 = arith.addf %402, %405 : vector<16x128xf32>
    %407 = arith.mulf %406, %401 : vector<16x128xf32>
    %cst_75 = arith.constant dense<0.000000e+00> : vector<128xf32>
    %408 = vector.multi_reduction <add>, %407, %cst_75 [0] : vector<16x128xf32> to vector<128xf32>
    %409 = vector.shape_cast %408 : vector<128xf32> to vector<1x128xf32>
    %410 = vector.extract_strided_slice %377 {offsets = [1, 0], sizes = [1, 128], strides = [1, 1]} : vector<8x128xf32> to vector<1x128xf32>
    %411 = vector.broadcast %410 : vector<1x128xf32> to vector<16x128xf32>
    %412 = arith.mulf %411, %380 : vector<16x128xf32>
    %413 = math.exp %412 : vector<16x128xf32>
    %414 = vector.extract_strided_slice %365 {offsets = [1, 128], sizes = [1, 32], strides = [1, 1]} : vector<8x192xf32> to vector<1x32xf32>
    %415 = vector.shape_cast %414 : vector<1x32xf32> to vector<1x32x1xf32>
    %416 = vector.shape_cast %415 : vector<1x32x1xf32> to vector<1x32x1xf32>
    %417 = vector.broadcast %416 : vector<1x32x1xf32> to vector<1x32x64xf32>
    %418 = vector.shape_cast %417 : vector<1x32x64xf32> to vector<32x64xf32>
    %419 = vector.extract_strided_slice %418 {offsets = [0, 0], sizes = [16, 64], strides = [1, 1]} : vector<32x64xf32> to vector<16x64xf32>
    %420 = vector.extract_strided_slice %418 {offsets = [16, 0], sizes = [16, 64], strides = [1, 1]} : vector<32x64xf32> to vector<16x64xf32>
    %421 = tpu.concatenate %419, %420 in 1 : vector<16x64xf32>, vector<16x64xf32> -> vector<16x128xf32>
    %422 = vector.extract_strided_slice %365 {offsets = [1, 160], sizes = [1, 32], strides = [1, 1]} : vector<8x192xf32> to vector<1x32xf32>
    %423 = vector.shape_cast %422 : vector<1x32xf32> to vector<1x32x1xf32>
    %424 = vector.shape_cast %423 : vector<1x32x1xf32> to vector<1x32x1xf32>
    %425 = vector.broadcast %424 : vector<1x32x1xf32> to vector<1x32x64xf32>
    %426 = vector.shape_cast %425 : vector<1x32x64xf32> to vector<32x64xf32>
    %427 = vector.extract_strided_slice %426 {offsets = [0, 0], sizes = [16, 64], strides = [1, 1]} : vector<32x64xf32> to vector<16x64xf32>
    %428 = vector.extract_strided_slice %426 {offsets = [16, 0], sizes = [16, 64], strides = [1, 1]} : vector<32x64xf32> to vector<16x64xf32>
    %429 = tpu.concatenate %427, %428 in 1 : vector<16x64xf32>, vector<16x64xf32> -> vector<16x128xf32>
    %430 = arith.mulf %413, %406 : vector<16x128xf32>
    %431 = vector.extract_strided_slice %378 {offsets = [1, 0], sizes = [1, 128], strides = [1, 1]} : vector<8x128xf32> to vector<1x128xf32>
    %432 = vector.broadcast %431 : vector<1x128xf32> to vector<16x128xf32>
    %433 = arith.mulf %421, %432 : vector<16x128xf32>
    %434 = arith.addf %430, %433 : vector<16x128xf32>
    %435 = arith.mulf %434, %429 : vector<16x128xf32>
    %cst_76 = arith.constant dense<0.000000e+00> : vector<128xf32>
    %436 = vector.multi_reduction <add>, %435, %cst_76 [0] : vector<16x128xf32> to vector<128xf32>
    %437 = vector.shape_cast %436 : vector<128xf32> to vector<1x128xf32>
    %438 = vector.extract_strided_slice %377 {offsets = [2, 0], sizes = [1, 128], strides = [1, 1]} : vector<8x128xf32> to vector<1x128xf32>
    %439 = vector.broadcast %438 : vector<1x128xf32> to vector<16x128xf32>
    %440 = arith.mulf %439, %380 : vector<16x128xf32>
    %441 = math.exp %440 : vector<16x128xf32>
    %442 = vector.extract_strided_slice %365 {offsets = [2, 128], sizes = [1, 32], strides = [1, 1]} : vector<8x192xf32> to vector<1x32xf32>
    %443 = vector.shape_cast %442 : vector<1x32xf32> to vector<1x32x1xf32>
    %444 = vector.shape_cast %443 : vector<1x32x1xf32> to vector<1x32x1xf32>
    %445 = vector.broadcast %444 : vector<1x32x1xf32> to vector<1x32x64xf32>
    %446 = vector.shape_cast %445 : vector<1x32x64xf32> to vector<32x64xf32>
    %447 = vector.extract_strided_slice %446 {offsets = [0, 0], sizes = [16, 64], strides = [1, 1]} : vector<32x64xf32> to vector<16x64xf32>
    %448 = vector.extract_strided_slice %446 {offsets = [16, 0], sizes = [16, 64], strides = [1, 1]} : vector<32x64xf32> to vector<16x64xf32>
    %449 = tpu.concatenate %447, %448 in 1 : vector<16x64xf32>, vector<16x64xf32> -> vector<16x128xf32>
    %450 = vector.extract_strided_slice %365 {offsets = [2, 160], sizes = [1, 32], strides = [1, 1]} : vector<8x192xf32> to vector<1x32xf32>
    %451 = vector.shape_cast %450 : vector<1x32xf32> to vector<1x32x1xf32>
    %452 = vector.shape_cast %451 : vector<1x32x1xf32> to vector<1x32x1xf32>
    %453 = vector.broadcast %452 : vector<1x32x1xf32> to vector<1x32x64xf32>
    %454 = vector.shape_cast %453 : vector<1x32x64xf32> to vector<32x64xf32>
    %455 = vector.extract_strided_slice %454 {offsets = [0, 0], sizes = [16, 64], strides = [1, 1]} : vector<32x64xf32> to vector<16x64xf32>
    %456 = vector.extract_strided_slice %454 {offsets = [16, 0], sizes = [16, 64], strides = [1, 1]} : vector<32x64xf32> to vector<16x64xf32>
    %457 = tpu.concatenate %455, %456 in 1 : vector<16x64xf32>, vector<16x64xf32> -> vector<16x128xf32>
    %458 = arith.mulf %441, %434 : vector<16x128xf32>
    %459 = vector.extract_strided_slice %378 {offsets = [2, 0], sizes = [1, 128], strides = [1, 1]} : vector<8x128xf32> to vector<1x128xf32>
    %460 = vector.broadcast %459 : vector<1x128xf32> to vector<16x128xf32>
    %461 = arith.mulf %449, %460 : vector<16x128xf32>
    %462 = arith.addf %458, %461 : vector<16x128xf32>
    %463 = arith.mulf %462, %457 : vector<16x128xf32>
    %cst_77 = arith.constant dense<0.000000e+00> : vector<128xf32>
    %464 = vector.multi_reduction <add>, %463, %cst_77 [0] : vector<16x128xf32> to vector<128xf32>
    %465 = vector.shape_cast %464 : vector<128xf32> to vector<1x128xf32>
    %466 = vector.extract_strided_slice %377 {offsets = [3, 0], sizes = [1, 128], strides = [1, 1]} : vector<8x128xf32> to vector<1x128xf32>
    %467 = vector.broadcast %466 : vector<1x128xf32> to vector<16x128xf32>
    %468 = arith.mulf %467, %380 : vector<16x128xf32>
    %469 = math.exp %468 : vector<16x128xf32>
    %470 = vector.extract_strided_slice %365 {offsets = [3, 128], sizes = [1, 32], strides = [1, 1]} : vector<8x192xf32> to vector<1x32xf32>
    %471 = vector.shape_cast %470 : vector<1x32xf32> to vector<1x32x1xf32>
    %472 = vector.shape_cast %471 : vector<1x32x1xf32> to vector<1x32x1xf32>
    %473 = vector.broadcast %472 : vector<1x32x1xf32> to vector<1x32x64xf32>
    %474 = vector.shape_cast %473 : vector<1x32x64xf32> to vector<32x64xf32>
    %475 = vector.extract_strided_slice %474 {offsets = [0, 0], sizes = [16, 64], strides = [1, 1]} : vector<32x64xf32> to vector<16x64xf32>
    %476 = vector.extract_strided_slice %474 {offsets = [16, 0], sizes = [16, 64], strides = [1, 1]} : vector<32x64xf32> to vector<16x64xf32>
    %477 = tpu.concatenate %475, %476 in 1 : vector<16x64xf32>, vector<16x64xf32> -> vector<16x128xf32>
    %478 = vector.extract_strided_slice %365 {offsets = [3, 160], sizes = [1, 32], strides = [1, 1]} : vector<8x192xf32> to vector<1x32xf32>
    %479 = vector.shape_cast %478 : vector<1x32xf32> to vector<1x32x1xf32>
    %480 = vector.shape_cast %479 : vector<1x32x1xf32> to vector<1x32x1xf32>
    %481 = vector.broadcast %480 : vector<1x32x1xf32> to vector<1x32x64xf32>
    %482 = vector.shape_cast %481 : vector<1x32x64xf32> to vector<32x64xf32>
    %483 = vector.extract_strided_slice %482 {offsets = [0, 0], sizes = [16, 64], strides = [1, 1]} : vector<32x64xf32> to vector<16x64xf32>
    %484 = vector.extract_strided_slice %482 {offsets = [16, 0], sizes = [16, 64], strides = [1, 1]} : vector<32x64xf32> to vector<16x64xf32>
    %485 = tpu.concatenate %483, %484 in 1 : vector<16x64xf32>, vector<16x64xf32> -> vector<16x128xf32>
    %486 = arith.mulf %469, %462 : vector<16x128xf32>
    %487 = vector.extract_strided_slice %378 {offsets = [3, 0], sizes = [1, 128], strides = [1, 1]} : vector<8x128xf32> to vector<1x128xf32>
    %488 = vector.broadcast %487 : vector<1x128xf32> to vector<16x128xf32>
    %489 = arith.mulf %477, %488 : vector<16x128xf32>
    %490 = arith.addf %486, %489 : vector<16x128xf32>
    %491 = arith.mulf %490, %485 : vector<16x128xf32>
    %cst_78 = arith.constant dense<0.000000e+00> : vector<128xf32>
    %492 = vector.multi_reduction <add>, %491, %cst_78 [0] : vector<16x128xf32> to vector<128xf32>
    %493 = vector.shape_cast %492 : vector<128xf32> to vector<1x128xf32>
    %494 = vector.extract_strided_slice %377 {offsets = [4, 0], sizes = [1, 128], strides = [1, 1]} : vector<8x128xf32> to vector<1x128xf32>
    %495 = vector.broadcast %494 : vector<1x128xf32> to vector<16x128xf32>
    %496 = arith.mulf %495, %380 : vector<16x128xf32>
    %497 = math.exp %496 : vector<16x128xf32>
    %498 = vector.extract_strided_slice %365 {offsets = [4, 128], sizes = [1, 32], strides = [1, 1]} : vector<8x192xf32> to vector<1x32xf32>
    %499 = vector.shape_cast %498 : vector<1x32xf32> to vector<1x32x1xf32>
    %500 = vector.shape_cast %499 : vector<1x32x1xf32> to vector<1x32x1xf32>
    %501 = vector.broadcast %500 : vector<1x32x1xf32> to vector<1x32x64xf32>
    %502 = vector.shape_cast %501 : vector<1x32x64xf32> to vector<32x64xf32>
    %503 = vector.extract_strided_slice %502 {offsets = [0, 0], sizes = [16, 64], strides = [1, 1]} : vector<32x64xf32> to vector<16x64xf32>
    %504 = vector.extract_strided_slice %502 {offsets = [16, 0], sizes = [16, 64], strides = [1, 1]} : vector<32x64xf32> to vector<16x64xf32>
    %505 = tpu.concatenate %503, %504 in 1 : vector<16x64xf32>, vector<16x64xf32> -> vector<16x128xf32>
    %506 = vector.extract_strided_slice %365 {offsets = [4, 160], sizes = [1, 32], strides = [1, 1]} : vector<8x192xf32> to vector<1x32xf32>
    %507 = vector.shape_cast %506 : vector<1x32xf32> to vector<1x32x1xf32>
    %508 = vector.shape_cast %507 : vector<1x32x1xf32> to vector<1x32x1xf32>
    %509 = vector.broadcast %508 : vector<1x32x1xf32> to vector<1x32x64xf32>
    %510 = vector.shape_cast %509 : vector<1x32x64xf32> to vector<32x64xf32>
    %511 = vector.extract_strided_slice %510 {offsets = [0, 0], sizes = [16, 64], strides = [1, 1]} : vector<32x64xf32> to vector<16x64xf32>
    %512 = vector.extract_strided_slice %510 {offsets = [16, 0], sizes = [16, 64], strides = [1, 1]} : vector<32x64xf32> to vector<16x64xf32>
    %513 = tpu.concatenate %511, %512 in 1 : vector<16x64xf32>, vector<16x64xf32> -> vector<16x128xf32>
    %514 = arith.mulf %497, %490 : vector<16x128xf32>
    %515 = vector.extract_strided_slice %378 {offsets = [4, 0], sizes = [1, 128], strides = [1, 1]} : vector<8x128xf32> to vector<1x128xf32>
    %516 = vector.broadcast %515 : vector<1x128xf32> to vector<16x128xf32>
    %517 = arith.mulf %505, %516 : vector<16x128xf32>
    %518 = arith.addf %514, %517 : vector<16x128xf32>
    %519 = arith.mulf %518, %513 : vector<16x128xf32>
    %cst_79 = arith.constant dense<0.000000e+00> : vector<128xf32>
    %520 = vector.multi_reduction <add>, %519, %cst_79 [0] : vector<16x128xf32> to vector<128xf32>
    %521 = vector.shape_cast %520 : vector<128xf32> to vector<1x128xf32>
    %522 = vector.extract_strided_slice %377 {offsets = [5, 0], sizes = [1, 128], strides = [1, 1]} : vector<8x128xf32> to vector<1x128xf32>
    %523 = vector.broadcast %522 : vector<1x128xf32> to vector<16x128xf32>
    %524 = arith.mulf %523, %380 : vector<16x128xf32>
    %525 = math.exp %524 : vector<16x128xf32>
    %526 = vector.extract_strided_slice %365 {offsets = [5, 128], sizes = [1, 32], strides = [1, 1]} : vector<8x192xf32> to vector<1x32xf32>
    %527 = vector.shape_cast %526 : vector<1x32xf32> to vector<1x32x1xf32>
    %528 = vector.shape_cast %527 : vector<1x32x1xf32> to vector<1x32x1xf32>
    %529 = vector.broadcast %528 : vector<1x32x1xf32> to vector<1x32x64xf32>
    %530 = vector.shape_cast %529 : vector<1x32x64xf32> to vector<32x64xf32>
    %531 = vector.extract_strided_slice %530 {offsets = [0, 0], sizes = [16, 64], strides = [1, 1]} : vector<32x64xf32> to vector<16x64xf32>
    %532 = vector.extract_strided_slice %530 {offsets = [16, 0], sizes = [16, 64], strides = [1, 1]} : vector<32x64xf32> to vector<16x64xf32>
    %533 = tpu.concatenate %531, %532 in 1 : vector<16x64xf32>, vector<16x64xf32> -> vector<16x128xf32>
    %534 = vector.extract_strided_slice %365 {offsets = [5, 160], sizes = [1, 32], strides = [1, 1]} : vector<8x192xf32> to vector<1x32xf32>
    %535 = vector.shape_cast %534 : vector<1x32xf32> to vector<1x32x1xf32>
    %536 = vector.shape_cast %535 : vector<1x32x1xf32> to vector<1x32x1xf32>
    %537 = vector.broadcast %536 : vector<1x32x1xf32> to vector<1x32x64xf32>
    %538 = vector.shape_cast %537 : vector<1x32x64xf32> to vector<32x64xf32>
    %539 = vector.extract_strided_slice %538 {offsets = [0, 0], sizes = [16, 64], strides = [1, 1]} : vector<32x64xf32> to vector<16x64xf32>
    %540 = vector.extract_strided_slice %538 {offsets = [16, 0], sizes = [16, 64], strides = [1, 1]} : vector<32x64xf32> to vector<16x64xf32>
    %541 = tpu.concatenate %539, %540 in 1 : vector<16x64xf32>, vector<16x64xf32> -> vector<16x128xf32>
    %542 = arith.mulf %525, %518 : vector<16x128xf32>
    %543 = vector.extract_strided_slice %378 {offsets = [5, 0], sizes = [1, 128], strides = [1, 1]} : vector<8x128xf32> to vector<1x128xf32>
    %544 = vector.broadcast %543 : vector<1x128xf32> to vector<16x128xf32>
    %545 = arith.mulf %533, %544 : vector<16x128xf32>
    %546 = arith.addf %542, %545 : vector<16x128xf32>
    %547 = arith.mulf %546, %541 : vector<16x128xf32>
    %cst_80 = arith.constant dense<0.000000e+00> : vector<128xf32>
    %548 = vector.multi_reduction <add>, %547, %cst_80 [0] : vector<16x128xf32> to vector<128xf32>
    %549 = vector.shape_cast %548 : vector<128xf32> to vector<1x128xf32>
    %550 = vector.extract_strided_slice %377 {offsets = [6, 0], sizes = [1, 128], strides = [1, 1]} : vector<8x128xf32> to vector<1x128xf32>
    %551 = vector.broadcast %550 : vector<1x128xf32> to vector<16x128xf32>
    %552 = arith.mulf %551, %380 : vector<16x128xf32>
    %553 = math.exp %552 : vector<16x128xf32>
    %554 = vector.extract_strided_slice %365 {offsets = [6, 128], sizes = [1, 32], strides = [1, 1]} : vector<8x192xf32> to vector<1x32xf32>
    %555 = vector.shape_cast %554 : vector<1x32xf32> to vector<1x32x1xf32>
    %556 = vector.shape_cast %555 : vector<1x32x1xf32> to vector<1x32x1xf32>
    %557 = vector.broadcast %556 : vector<1x32x1xf32> to vector<1x32x64xf32>
    %558 = vector.shape_cast %557 : vector<1x32x64xf32> to vector<32x64xf32>
    %559 = vector.extract_strided_slice %558 {offsets = [0, 0], sizes = [16, 64], strides = [1, 1]} : vector<32x64xf32> to vector<16x64xf32>
    %560 = vector.extract_strided_slice %558 {offsets = [16, 0], sizes = [16, 64], strides = [1, 1]} : vector<32x64xf32> to vector<16x64xf32>
    %561 = tpu.concatenate %559, %560 in 1 : vector<16x64xf32>, vector<16x64xf32> -> vector<16x128xf32>
    %562 = vector.extract_strided_slice %365 {offsets = [6, 160], sizes = [1, 32], strides = [1, 1]} : vector<8x192xf32> to vector<1x32xf32>
    %563 = vector.shape_cast %562 : vector<1x32xf32> to vector<1x32x1xf32>
    %564 = vector.shape_cast %563 : vector<1x32x1xf32> to vector<1x32x1xf32>
    %565 = vector.broadcast %564 : vector<1x32x1xf32> to vector<1x32x64xf32>
    %566 = vector.shape_cast %565 : vector<1x32x64xf32> to vector<32x64xf32>
    %567 = vector.extract_strided_slice %566 {offsets = [0, 0], sizes = [16, 64], strides = [1, 1]} : vector<32x64xf32> to vector<16x64xf32>
    %568 = vector.extract_strided_slice %566 {offsets = [16, 0], sizes = [16, 64], strides = [1, 1]} : vector<32x64xf32> to vector<16x64xf32>
    %569 = tpu.concatenate %567, %568 in 1 : vector<16x64xf32>, vector<16x64xf32> -> vector<16x128xf32>
    %570 = arith.mulf %553, %546 : vector<16x128xf32>
    %571 = vector.extract_strided_slice %378 {offsets = [6, 0], sizes = [1, 128], strides = [1, 1]} : vector<8x128xf32> to vector<1x128xf32>
    %572 = vector.broadcast %571 : vector<1x128xf32> to vector<16x128xf32>
    %573 = arith.mulf %561, %572 : vector<16x128xf32>
    %574 = arith.addf %570, %573 : vector<16x128xf32>
    %575 = arith.mulf %574, %569 : vector<16x128xf32>
    %cst_81 = arith.constant dense<0.000000e+00> : vector<128xf32>
    %576 = vector.multi_reduction <add>, %575, %cst_81 [0] : vector<16x128xf32> to vector<128xf32>
    %577 = vector.shape_cast %576 : vector<128xf32> to vector<1x128xf32>
    %578 = vector.extract_strided_slice %377 {offsets = [7, 0], sizes = [1, 128], strides = [1, 1]} : vector<8x128xf32> to vector<1x128xf32>
    %579 = vector.broadcast %578 : vector<1x128xf32> to vector<16x128xf32>
    %580 = arith.mulf %579, %380 : vector<16x128xf32>
    %581 = math.exp %580 : vector<16x128xf32>
    %582 = vector.extract_strided_slice %365 {offsets = [7, 128], sizes = [1, 32], strides = [1, 1]} : vector<8x192xf32> to vector<1x32xf32>
    %583 = vector.shape_cast %582 : vector<1x32xf32> to vector<1x32x1xf32>
    %584 = vector.shape_cast %583 : vector<1x32x1xf32> to vector<1x32x1xf32>
    %585 = vector.broadcast %584 : vector<1x32x1xf32> to vector<1x32x64xf32>
    %586 = vector.shape_cast %585 : vector<1x32x64xf32> to vector<32x64xf32>
    %587 = vector.extract_strided_slice %586 {offsets = [0, 0], sizes = [16, 64], strides = [1, 1]} : vector<32x64xf32> to vector<16x64xf32>
    %588 = vector.extract_strided_slice %586 {offsets = [16, 0], sizes = [16, 64], strides = [1, 1]} : vector<32x64xf32> to vector<16x64xf32>
    %589 = tpu.concatenate %587, %588 in 1 : vector<16x64xf32>, vector<16x64xf32> -> vector<16x128xf32>
    %590 = vector.extract_strided_slice %365 {offsets = [7, 160], sizes = [1, 32], strides = [1, 1]} : vector<8x192xf32> to vector<1x32xf32>
    %591 = vector.shape_cast %590 : vector<1x32xf32> to vector<1x32x1xf32>
    %592 = vector.shape_cast %591 : vector<1x32x1xf32> to vector<1x32x1xf32>
    %593 = vector.broadcast %592 : vector<1x32x1xf32> to vector<1x32x64xf32>
    %594 = vector.shape_cast %593 : vector<1x32x64xf32> to vector<32x64xf32>
    %595 = vector.extract_strided_slice %594 {offsets = [0, 0], sizes = [16, 64], strides = [1, 1]} : vector<32x64xf32> to vector<16x64xf32>
    %596 = vector.extract_strided_slice %594 {offsets = [16, 0], sizes = [16, 64], strides = [1, 1]} : vector<32x64xf32> to vector<16x64xf32>
    %597 = tpu.concatenate %595, %596 in 1 : vector<16x64xf32>, vector<16x64xf32> -> vector<16x128xf32>
    %598 = arith.mulf %581, %574 : vector<16x128xf32>
    %599 = vector.extract_strided_slice %378 {offsets = [7, 0], sizes = [1, 128], strides = [1, 1]} : vector<8x128xf32> to vector<1x128xf32>
    %600 = vector.broadcast %599 : vector<1x128xf32> to vector<16x128xf32>
    %601 = arith.mulf %589, %600 : vector<16x128xf32>
    %602 = arith.addf %598, %601 : vector<16x128xf32>
    %603 = arith.mulf %602, %597 : vector<16x128xf32>
    %cst_82 = arith.constant dense<0.000000e+00> : vector<128xf32>
    %604 = vector.multi_reduction <add>, %603, %cst_82 [0] : vector<16x128xf32> to vector<128xf32>
    %605 = vector.shape_cast %604 : vector<128xf32> to vector<1x128xf32>
    %606 = tpu.concatenate %409, %437, %465, %493, %521, %549, %577, %605 in 0 : vector<1x128xf32>, vector<1x128xf32>, vector<1x128xf32>, vector<1x128xf32>, vector<1x128xf32>, vector<1x128xf32>, vector<1x128xf32>, vector<1x128xf32> -> vector<8x128xf32>
    %c1_83 = arith.constant 1 : index
    %c0_84 = arith.constant 0 : index
    %c0_85 = arith.constant 0 : index
    %607 = vector.load %arg9[%c1_83, %c0_84, %c0_85] : memref<2x1x128xf32, #tpu.memory_space<vmem>>, vector<1x1x128xf32>
    %608 = vector.shape_cast %607 : vector<1x1x128xf32> to vector<1x128xf32>
    %609 = vector.broadcast %608 : vector<1x128xf32> to vector<8x128xf32>
    %610 = arith.mulf %361, %609 : vector<8x128xf32>
    %611 = arith.addf %606, %610 : vector<8x128xf32>
    %612 = arith.negf %324 : vector<8x128xf32>
    %613 = math.exp %612 : vector<8x128xf32>
    %cst_86 = arith.constant 1.000000e+00 : f32
    %614 = vector.broadcast %cst_86 : f32 to vector<8x128xf32>
    %615 = arith.addf %614, %613 : vector<8x128xf32>
    %616 = arith.divf %614, %615 : vector<8x128xf32>
    %617 = arith.mulf %324, %616 : vector<8x128xf32>
    %618 = arith.mulf %611, %617 : vector<8x128xf32>
    %619 = arith.truncf %618 : vector<8x128xf32> to vector<8x128xbf16>
    %c1_87 = arith.constant 1 : index
    %c0_88 = arith.constant 0 : index
    %c0_89 = arith.constant 0 : index
    %620 = vector.load %arg10[%c1_87, %c0_88, %c0_89] : memref<2x128x64xbf16, #tpu.memory_space<vmem>>, vector<1x128x64xbf16>
    %621 = vector.shape_cast %620 : vector<1x128x64xbf16> to vector<128x64xbf16>
    %cst_90 = arith.constant dense<0.000000e+00> : vector<8x64xf32>
    %622 = tpu.matmul %619, %621, %cst_90 {dimension_numbers = #tpu.dot_dimension_numbers<[1], [0], [0], [1], [0, 0, 1, 1], [], []>} : vector<8x128xbf16>, vector<128x64xbf16>, vector<8x64xf32> -> vector<8x64xf32>
    %623 = arith.addf %312, %622 : vector<8x64xf32>
    %624 = arith.mulf %623, %623 : vector<8x64xf32>
    %cst_91 = arith.constant dense<0.000000e+00> : vector<8x64xf32>
    %625 = tpu.matmul %624, %0, %cst_91 {dimension_numbers = #tpu.dot_dimension_numbers<[1], [0], [0], [1], [0, 0, 1, 1], [], []>} : vector<8x64xf32>, vector<64x64xf32>, vector<8x64xf32> -> vector<8x64xf32>
    %cst_92 = arith.constant 9.99999974E-6 : f32
    %626 = vector.broadcast %cst_92 : f32 to vector<8x64xf32>
    %627 = arith.addf %625, %626 : vector<8x64xf32>
    %628 = math.rsqrt %627 : vector<8x64xf32>
    %629 = arith.mulf %623, %628 : vector<8x64xf32>
    %630 = arith.truncf %629 : vector<8x64xf32> to vector<8x64xbf16>
    %c0_93 = arith.constant 0 : index
    %c0_94 = arith.constant 0 : index
    %631 = vector.load %arg11[%c0_93, %c0_94] : memref<64x256xbf16, #tpu.memory_space<vmem>>, vector<64x256xbf16>
    %cst_95 = arith.constant dense<0.000000e+00> : vector<8x256xf32>
    %632 = tpu.matmul %630, %631, %cst_95 {dimension_numbers = #tpu.dot_dimension_numbers<[1], [0], [0], [1], [0, 0, 1, 1], [], []>} : vector<8x64xbf16>, vector<64x256xbf16>, vector<8x256xf32> -> vector<8x256xf32>
    %c0_96 = arith.constant 0 : index
    %c0_97 = arith.constant 0 : index
    %633 = vector.load %arg12[%c0_96, %c0_97] : memref<8x256xf32, #tpu.memory_space<vmem>>, vector<8x256xf32>
    tpu.vector_store %arg12[%c0_96, %c0_97], %632 {strides = array<i32>} : memref<8x256xf32, #tpu.memory_space<vmem>>, vector<8x256xf32>,
    return
  }
  func.func @transform_0(%arg0: i32) -> (i32, i32) {
    %c0_i32 = arith.constant 0 : i32
    %c0_i32_0 = arith.constant 0 : i32
    %c0_i32_1 = arith.constant 0 : i32
    return %c0_i32, %c0_i32_0 : i32, i32
  }
  func.func @transform_1(%arg0: i32) -> (i32, i32) {
    %c0_i32 = arith.constant 0 : i32
    %c0_i32_0 = arith.constant 0 : i32
    %c0_i32_1 = arith.constant 0 : i32
    return %c0_i32, %c0_i32_0 : i32, i32
  }
  func.func @transform_2(%arg0: i32) -> (i32, i32, i32) {
    %c0_i32 = arith.constant 0 : i32
    %c0_i32_0 = arith.constant 0 : i32
    %c0_i32_1 = arith.constant 0 : i32
    %c0_i32_2 = arith.constant 0 : i32
    return %c0_i32, %c0_i32_0, %c0_i32_1 : i32, i32, i32
  }
  func.func @transform_3(%arg0: i32) -> (i32, i32, i32) {
    %c0_i32 = arith.constant 0 : i32
    %c0_i32_0 = arith.constant 0 : i32
    %c0_i32_1 = arith.constant 0 : i32
    %c0_i32_2 = arith.constant 0 : i32
    return %c0_i32, %c0_i32_0, %c0_i32_1 : i32, i32, i32
  }
  func.func @transform_4(%arg0: i32) -> (i32, i32, i32) {
    %c0_i32 = arith.constant 0 : i32
    %c0_i32_0 = arith.constant 0 : i32
    %c0_i32_1 = arith.constant 0 : i32
    %c0_i32_2 = arith.constant 0 : i32
    return %c0_i32, %c0_i32_0, %c0_i32_1 : i32, i32, i32
  }
  func.func @transform_5(%arg0: i32) -> (i32, i32, i32) {
    %c0_i32 = arith.constant 0 : i32
    %c0_i32_0 = arith.constant 0 : i32
    %c0_i32_1 = arith.constant 0 : i32
    %c0_i32_2 = arith.constant 0 : i32
    return %c0_i32, %c0_i32_0, %c0_i32_1 : i32, i32, i32
  }
  func.func @transform_6(%arg0: i32) -> (i32, i32, i32) {
    %c0_i32 = arith.constant 0 : i32
    %c0_i32_0 = arith.constant 0 : i32
    %c0_i32_1 = arith.constant 0 : i32
    %c0_i32_2 = arith.constant 0 : i32
    return %c0_i32, %c0_i32_0, %c0_i32_1 : i32, i32, i32
  }
  func.func @transform_7(%arg0: i32) -> (i32, i32, i32) {
    %c0_i32 = arith.constant 0 : i32
    %c0_i32_0 = arith.constant 0 : i32
    %c0_i32_1 = arith.constant 0 : i32
    %c0_i32_2 = arith.constant 0 : i32
    return %c0_i32, %c0_i32_0, %c0_i32_1 : i32, i32, i32
  }
  func.func @transform_8(%arg0: i32) -> (i32, i32, i32) {
    %c0_i32 = arith.constant 0 : i32
    %c0_i32_0 = arith.constant 0 : i32
    %c0_i32_1 = arith.constant 0 : i32
    %c0_i32_2 = arith.constant 0 : i32
    return %c0_i32, %c0_i32_0, %c0_i32_1 : i32, i32, i32
  }
  func.func @transform_9(%arg0: i32) -> (i32, i32, i32) {
    %c0_i32 = arith.constant 0 : i32
    %c0_i32_0 = arith.constant 0 : i32
    %c0_i32_1 = arith.constant 0 : i32
    %c0_i32_2 = arith.constant 0 : i32
    return %c0_i32, %c0_i32_0, %c0_i32_1 : i32, i32, i32
  }
  func.func @transform_10(%arg0: i32) -> (i32, i32) {
    %c0_i32 = arith.constant 0 : i32
    %c0_i32_0 = arith.constant 0 : i32
    %c0_i32_1 = arith.constant 0 : i32
    return %c0_i32, %c0_i32_0 : i32, i32
  }
  func.func @transform_11(%arg0: i32) -> (i32, i32) {
    %c0_i32 = arith.constant 0 : i32
    %c0_i32_0 = arith.constant 0 : i32
    %c0_i32_1 = arith.constant 0 : i32
    return %c0_i32, %c0_i32_0 : i32, i32
  }
}

</mosaic_0001>

<llo_original>
// kernel: mamba_lm_forward.1
$region0: #{mamba_lm_forward.1}
  #allocation0 [shape = 'u32[]', space=smem, size = 0x4, offset = 0x4, fixed_abs, tag = 'smem constant byte address 0x4 - core index']
  #allocation1 [shape = 'u32[144,128]{1,0:T(1,128)}', space=vmem, size = 0x12000, scoped, tag = 'internal scratch']
  %s0 = inlined_call_operand.vmem [shape: f32[8,64], index: 0, kind: input, shape index: {}]
  %s1 = inlined_call_operand.vmem [shape: f32[64,64], index: 1, kind: input, shape index: {}]
  %s2 = inlined_call_operand.vmem [shape: bf16[2,64,256], index: 2, kind: input, shape index: {}]
  %s3 = inlined_call_operand.vmem [shape: f32[2,4,128], index: 3, kind: input, shape index: {}]
  %s4 = inlined_call_operand.vmem [shape: f32[2,1,128], index: 4, kind: input, shape index: {}]
  %s5 = inlined_call_operand.vmem [shape: bf16[2,128,192], index: 5, kind: input, shape index: {}]
  %s6 = inlined_call_operand.vmem [shape: f32[2,1,128], index: 6, kind: input, shape index: {}]
  %s7 = inlined_call_operand.vmem [shape: f32[2,16,128], index: 7, kind: input, shape index: {}]
  %s8 = inlined_call_operand.vmem [shape: f32[2,1,128], index: 8, kind: input, shape index: {}]
  %s9 = inlined_call_operand.vmem [shape: bf16[2,128,64], index: 9, kind: input, shape index: {}]
  %s10 = inlined_call_operand.vmem [shape: bf16[64,256], index: 10, kind: input, shape index: {}]
  %s11 = inlined_call_operand.hbm [shape: f32[8,256], index: 11, kind: output, shape index: {}]
  %s12 = sld [smem:[#allocation0]]
  $region54: #{mamba_lm_forward.1} parent=0
    _
  %s14 = ssub.s32 1, %s12
  %s15 = scalar_select 0, %s14, %s12
  $region1: #{mamba_lm_forward.1} parent=0
    #allocation2 [shape = 'u8[8192]{0}', space=vmem, size = 0x2000, scoped, tag = 'output window, operand 0, single buffered']
    #allocation3 [shape = 's32[1]{0}', space=sflag, size = 0x4, scoped, tag = 'scoped memory for mamba_lm_forward.1']
    %16 = vsyncpa [#allocation3], 0
    // Predicated region
    $region2: #{mamba_lm_forward.1} parent=1 // pred_check
      _
    $region3: #{mamba_lm_forward.1} parent=1 // pred_check_branch
      %18 = sbr.rel (0) target = $region5
    $region4: #{mamba_lm_forward.1} parent=1 // pred_region
      _
    $region5: #{mamba_lm_forward.1} parent=1 // pred_fallthru
      _
    // Predicated region
    $region6: #{mamba_lm_forward.1} parent=1 // pred_check
      _
    $region7: #{mamba_lm_forward.1} parent=1 // pred_check_branch
      %20 = sbr.rel (0) target = $region9
    $region8: #{mamba_lm_forward.1} parent=1 // pred_region
      _
    $region9: #{mamba_lm_forward.1} parent=1 // pred_fallthru
      _
    // Predicated region
    $region10: #{mamba_lm_forward.1} parent=1 // pred_check
      _
    $region11: #{mamba_lm_forward.1} parent=1 // pred_check_branch
      %22 = sbr.rel (0) target = $region13
    $region12: #{mamba_lm_forward.1} parent=1 // pred_region
      _
    $region13: #{mamba_lm_forward.1} parent=1 // pred_fallthru
      _
    // Predicated region
    $region14: #{mamba_lm_forward.1} parent=1 // pred_check
      _
    $region15: #{mamba_lm_forward.1} parent=1 // pred_check_branch
      %24 = sbr.rel (0) target = $region17
    $region16: #{mamba_lm_forward.1} parent=1 // pred_region
      _
    $region17: #{mamba_lm_forward.1} parent=1 // pred_fallthru
      _
    // Predicated region
    $region18: #{mamba_lm_forward.1} parent=1 // pred_check
      _
    $region19: #{mamba_lm_forward.1} parent=1 // pred_check_branch
      %26 = sbr.rel (0) target = $region21
    $region20: #{mamba_lm_forward.1} parent=1 // pred_region
      _
    $region21: #{mamba_lm_forward.1} parent=1 // pred_fallthru
      _
    // Predicated region
    $region22: #{mamba_lm_forward.1} parent=1 // pred_check
      _
    $region23: #{mamba_lm_forward.1} parent=1 // pred_check_branch
      %28 = sbr.rel (0) target = $region25
    $region24: #{mamba_lm_forward.1} parent=1 // pred_region
      _
    $region25: #{mamba_lm_forward.1} parent=1 // pred_fallthru
      _
    // Predicated region
    $region26: #{mamba_lm_forward.1} parent=1 // pred_check
      _
    $region27: #{mamba_lm_forward.1} parent=1 // pred_check_branch
      %30 = sbr.rel (0) target = $region29
    $region28: #{mamba_lm_forward.1} parent=1 // pred_region
      _
    $region29: #{mamba_lm_forward.1} parent=1 // pred_fallthru
      _
    // Predicated region
    $region30: #{mamba_lm_forward.1} parent=1 // pred_check
      _
    $region31: #{mamba_lm_forward.1} parent=1 // pred_check_branch
      %32 = sbr.rel (0) target = $region33
    $region32: #{mamba_lm_forward.1} parent=1 // pred_region
      _
    $region33: #{mamba_lm_forward.1} parent=1 // pred_fallthru
      _
    // Predicated region
    $region34: #{mamba_lm_forward.1} parent=1 // pred_check
      _
    $region35: #{mamba_lm_forward.1} parent=1 // pred_check_branch
      %34 = sbr.rel (0) target = $region37
    $region36: #{mamba_lm_forward.1} parent=1 // pred_region
      _
    $region37: #{mamba_lm_forward.1} parent=1 // pred_fallthru
      _
    // Predicated region
    $region38: #{mamba_lm_forward.1} parent=1 // pred_check
      _
    $region39: #{mamba_lm_forward.1} parent=1 // pred_check_branch
      %36 = sbr.rel (0) target = $region41
    $region40: #{mamba_lm_forward.1} parent=1 // pred_region
      _
    $region41: #{mamba_lm_forward.1} parent=1 // pred_fallthru
      _
    // Predicated region
    $region42: #{mamba_lm_forward.1} parent=1 // pred_check
      _
    $region43: #{mamba_lm_forward.1} parent=1 // pred_check_branch
      %38 = sbr.rel (0) target = $region45
    $region44: #{mamba_lm_forward.1} parent=1 // pred_region
      _
    $region45: #{mamba_lm_forward.1} parent=1 // pred_fallthru
      _
    %v40 = vld [vmem:[%s1] sm:$0xff]
    %v41 = vld [vmem:[%s1 + $0x8] sm:$0xff]
    %v42 = vld [vmem:[%s1 + $0x10] sm:$0xff]
    %v43 = vld [vmem:[%s1 + $0x18] sm:$0xff]
    %v44 = vld [vmem:[%s1 + $0x20] sm:$0xff]
    %v45 = vld [vmem:[%s1 + $0x28] sm:$0xff]
    %v46 = vld [vmem:[%s1 + $0x30] sm:$0xff]
    %v47 = vld [vmem:[%s1 + $0x38] sm:$0xff]
    %v48 = vld [vmem:[%s0] sm:$0xff]
    %v49 = vmul.f32 %v48, %v48
    %vm50 = vcmask 523264
    %v52 = vsel %vm50, %v49, 0
    %54 = vmatprep.subr.mxu0 0.0
    %55 = vmatpush1.msra.mxu0 0.0
    %56 = vmatprep.subr.mxu0 0.0
    %57 = vmatpush1.msra.mxu0 0.0
    %58 = vmatprep.subr.mxu0 0.0
    %59 = vmatpush1.msra.mxu0 0.0
    %60 = vmatprep.subr.mxu0 0.0
    %61 = vmatpush1.msra.mxu0 0.0
    %62 = vmatprep.subr.mxu0 0.0
    %63 = vmatpush1.msra.mxu0 0.0
    %64 = vmatprep.subr.mxu0 0.0
    %65 = vmatpush1.msra.mxu0 0.0
    %66 = vmatprep.subr.mxu0 0.0
    %67 = vmatpush1.msra.mxu0 0.0
    %68 = vmatprep.subr.mxu0 0.0
    %69 = vmatpush1.msra.mxu0 0.0
    %70 = vmatprep.subr.mxu0 0.0
    %71 = vmatpush1.msra.mxu0 %v47
    %72 = vmatprep.subr.mxu0 0.0
    %73 = vmatpush1.msra.mxu0 %v46
    %74 = vmatprep.subr.mxu0 0.0
    %75 = vmatpush1.msra.mxu0 %v45
    %76 = vmatprep.subr.mxu0 0.0
    %77 = vmatpush1.msra.mxu0 %v44
    %78 = vmatprep.subr.mxu0 0.0
    %79 = vmatpush1.msra.mxu0 %v43
    %80 = vmatprep.subr.mxu0 0.0
    %81 = vmatpush1.msra.mxu0 %v42
    %82 = vmatprep.subr.mxu0 0.0
    %83 = vmatpush1.msra.mxu0 %v41
    %84 = vmatprep.subr.mxu0 0.0
    %85 = vmatpush1.msra.mxu0 %v40
    %86 = vmatprep.subr.mxu0 0.0
    %87 = vmatpush2.msra.mxu0 0.0
    %88 = vmatprep.subr.mxu0 0.0
    %89 = vmatpush2.msra.mxu0 0.0
    %90 = vmatprep.subr.mxu0 0.0
    %91 = vmatpush2.msra.mxu0 0.0
    %92 = vmatprep.subr.mxu0 0.0
    %93 = vmatpush2.msra.mxu0 0.0
    %94 = vmatprep.subr.mxu0 0.0
    %95 = vmatpush2.msra.mxu0 0.0
    %96 = vmatprep.subr.mxu0 0.0
    %97 = vmatpush2.msra.mxu0 0.0
    %98 = vmatprep.subr.mxu0 0.0
    %99 = vmatpush2.msra.mxu0 0.0
    %100 = vmatprep.subr.mxu0 0.0
    %101 = vmatpush2.msra.mxu0 0.0
    %102 = vmatprep.subr.mxu0 0.0
    %103 = vmatpush2.msra.mxu0 0.0
    %104 = vmatprep.subr.mxu0 0.0
    %105 = vmatpush2.msra.mxu0 0.0
    %106 = vmatprep.subr.mxu0 0.0
    %107 = vmatpush2.msra.mxu0 0.0
    %108 = vmatprep.subr.mxu0 0.0
    %109 = vmatpush2.msra.mxu0 0.0
    %110 = vmatprep.subr.mxu0 0.0
    %111 = vmatpush2.msra.mxu0 0.0
    %112 = vmatprep.subr.mxu0 0.0
    %113 = vmatpush2.msra.mxu0 0.0
    %114 = vmatprep.subr.mxu0 0.0
    %115 = vmatpush2.msra.mxu0 0.0
    %116 = vmatprep.subr.mxu0 0.0
    %117 = vmatpush2.msra.mxu0 0.0
    %118 = vmatprep.mubr.f32.mxu0 0.0
    %119 = vmatmul.mubr.f32.gmra.mxu0 %v52
    %v120 = vpop.f32.mrf.mxu0
    %v121 = vadd.f32 1e-05, %v120
    %v122 = vpop.f32.mrf.mxu0
    %123 = vdwg.mxu0
    %v124 = vrsqrt.pop %v121
    %v125 = vmul.f32 %v48, %v124
    %v126 = vpack.c.bf16 %v125, %v125
    %v127 = vld [vmem:[%s2] sm:$0xff]
    %v128 = vld [vmem:[%s2 + $0x8] sm:$0xff]
    %v129 = vld [vmem:[%s2 + $0x10] sm:$0xff]
    %v130 = vld [vmem:[%s2 + $0x18] sm:$0xff]
    %v131 = vld [vmem:[%s2 + $0x20] sm:$0xff]
    %v132 = vld [vmem:[%s2 + $0x28] sm:$0xff]
    %v133 = vld [vmem:[%s2 + $0x30] sm:$0xff]
    %v134 = vld [vmem:[%s2 + $0x38] sm:$0xff]
    %v143 = vunpack.c.l.b16 %v127
    %v144 = vunpack.c.h.b16 %v127
    %v145 = vunpack.c.l.b16 %v128
    %v146 = vunpack.c.h.b16 %v128
    %v147 = vunpack.c.l.b16 %v129
    %v148 = vunpack.c.h.b16 %v129
    %v149 = vunpack.c.l.b16 %v130
    %v150 = vunpack.c.h.b16 %v130
    %v151 = vunpack.c.l.b16 %v131
    %v152 = vunpack.c.h.b16 %v131
    %v153 = vunpack.c.l.b16 %v132
    %v154 = vunpack.c.h.b16 %v132
    %v155 = vunpack.c.l.b16 %v133
    %v156 = vunpack.c.h.b16 %v133
    %v157 = vunpack.c.l.b16 %v134
    %v158 = vunpack.c.h.b16 %v134
    %v159 = vpack.c.b16 %v145, %v143
    %v160 = vpack.c.b16 %v146, %v144
    %v161 = vpack.c.b16 %v149, %v147
    %v162 = vpack.c.b16 %v150, %v148
    %v163 = vpack.c.b16 %v153, %v151
    %v164 = vpack.c.b16 %v154, %v152
    %v165 = vpack.c.b16 %v157, %v155
    %v166 = vpack.c.b16 %v158, %v156
    %v176 = vsel %vm50, %v126, 0
    %178 = vmatprep.subr.bf16.mxu0 0
    %179 = vmatpush1.bf16.msra.mxu0 0
    %180 = vmatprep.subr.bf16.mxu0 0
    %181 = vmatpush1.bf16.msra.mxu0 0
    %182 = vmatprep.subr.bf16.mxu0 0
    %183 = vmatpush1.bf16.msra.mxu0 0
    %184 = vmatprep.subr.bf16.mxu0 0
    %185 = vmatpush1.bf16.msra.mxu0 0
    %186 = vmatprep.subr.bf16.mxu0 %v166
    %187 = vmatpush1.bf16.msra.mxu0 %v165
    %188 = vmatprep.subr.bf16.mxu0 %v164
    %189 = vmatpush1.bf16.msra.mxu0 %v163
    %190 = vmatprep.subr.bf16.mxu0 %v162
    %191 = vmatpush1.bf16.msra.mxu0 %v161
    %192 = vmatprep.subr.bf16.mxu0 %v160
    %193 = vmatpush1.bf16.msra.mxu0 %v159
    %194 = vmatprep.subr.bf16.mxu0 0
    %195 = vmatpush2.bf16.msra.mxu0 0
    %196 = vmatprep.subr.bf16.mxu0 0
    %197 = vmatpush2.bf16.msra.mxu0 0
    %198 = vmatprep.subr.bf16.mxu0 0
    %199 = vmatpush2.bf16.msra.mxu0 0
    %200 = vmatprep.subr.bf16.mxu0 0
    %201 = vmatpush2.bf16.msra.mxu0 0
    %202 = vmatprep.subr.bf16.mxu0 0
    %203 = vmatpush2.bf16.msra.mxu0 0
    %204 = vmatprep.subr.bf16.mxu0 0
    %205 = vmatpush2.bf16.msra.mxu0 0
    %206 = vmatprep.subr.bf16.mxu0 0
    %207 = vmatpush2.bf16.msra.mxu0 0
    %208 = vmatprep.subr.bf16.mxu0 0
    %209 = vmatpush2.bf16.msra.mxu0 0
    %210 = vmatprep.mubr.bf16.mxu0 0
    %211 = vmatmul.mubr.bf16.gmra.mxu0 %v176
    %v212 = vpop.f32.mrf.mxu0
    %v213 = vadd.f32 0.0, %v212
    %v214 = vpop.f32.mrf.mxu0
    %v215 = vadd.f32 0.0, %v214
    %v216 = vpop.f32.mrf.mxu0
    %v217 = vpop.f32.mrf.mxu0
    %218 = vdwg.mxu0
    %v219 = vld [vmem:[%s3] sm:$0xf]
    %v220 = vld [vmem:[%s4] sm:$0x1]
    %v222 = vlaneseq
    %v223 = vshrl.u32 %v222, 7
    %v224 = vsub.s32 0, %v223
    %v225 = vrot.slane %v220, %v224
    %v228 = vrot.slane %v213, 5
    %vm230 = vcmask 1042432
    %v231 = vsel %vm230, 0.0, %v228
    %v232 = vlaneseq
    %v233 = vshrl.u32 %v232, 7
    %v234 = vsub.s32 0, %v233
    %v235 = vrot.slane %v219, %v234
    %v236 = vmul.f32 %v231, %v235
    %v237 = vadd.f32 %v225, %v236
    %v238 = vrot.slane %v213, 6
    %vm240 = vcmask 1041408
    %v241 = vsel %vm240, 0.0, %v238
    %v242 = vlaneseq
    %v243 = vshrl.u32 %v242, 7
    %v244 = vsub.s32 1, %v243
    %v245 = vrot.slane %v219, %v244
    %v246 = vmul.f32 %v241, %v245
    %v247 = vadd.f32 %v237, %v246
    %v248 = vrot.slane %v213, 7
    %vm250 = vcmask 1040384
    %v251 = vsel %vm250, 0.0, %v248
    %v252 = vlaneseq
    %v253 = vshrl.u32 %v252, 7
    %v254 = vsub.s32 2, %v253
    %v255 = vrot.slane %v219, %v254
    %v256 = vmul.f32 %v251, %v255
    %v257 = vadd.f32 %v247, %v256
    %v258 = vlaneseq
    %v259 = vshrl.u32 %v258, 7
    %v260 = vsub.s32 3, %v259
    %v261 = vrot.slane %v219, %v260
    %v262 = vmul.f32 %v213, %v261
    %v263 = vadd.f32 %v257, %v262
    %v264 = vxor.u32 %v263, 2147483648
    %v265 = vmul.f32 %v264, 1.442695
    %v266 = vpow.pop %v265
    %v267 = vadd.f32 %v266, 1.0
    %v268 = vrcp.pop %v267
    %v269 = vmul.f32 1.0, %v268
    %v270 = vmul.f32 %v263, %v269
    %v271 = vpack.c.bf16 %v270, %v270
    %v272 = vld [vmem:[%s5] sm:$0xff]
    %v273 = vld [vmem:[%s5 + $0x8] sm:$0xff]
    %v274 = vld [vmem:[%s5 + $0x10] sm:$0xff]
    %v275 = vld [vmem:[%s5 + $0x18] sm:$0xff]
    %v276 = vld [vmem:[%s5 + $0x20] sm:$0xff]
    %v277 = vld [vmem:[%s5 + $0x28] sm:$0xff]
    %v278 = vld [vmem:[%s5 + $0x30] sm:$0xff]
    %v279 = vld [vmem:[%s5 + $0x38] sm:$0xff]
    %v280 = vld [vmem:[%s5 + $0x40] sm:$0xff]
    %v281 = vld [vmem:[%s5 + $0x48] sm:$0xff]
    %v282 = vld [vmem:[%s5 + $0x50] sm:$0xff]
    %v283 = vld [vmem:[%s5 + $0x58] sm:$0xff]
    %v284 = vld [vmem:[%s5 + $0x60] sm:$0xff]
    %v285 = vld [vmem:[%s5 + $0x68] sm:$0xff]
    %v286 = vld [vmem:[%s5 + $0x70] sm:$0xff]
    %v287 = vld [vmem:[%s5 + $0x78] sm:$0xff]
    %v304 = vunpack.c.l.b16 %v272
    %v305 = vunpack.c.h.b16 %v272
    %v306 = vunpack.c.l.b16 %v273
    %v307 = vunpack.c.h.b16 %v273
    %v308 = vunpack.c.l.b16 %v274
    %v309 = vunpack.c.h.b16 %v274
    %v310 = vunpack.c.l.b16 %v275
    %v311 = vunpack.c.h.b16 %v275
    %v312 = vunpack.c.l.b16 %v276
    %v313 = vunpack.c.h.b16 %v276
    %v314 = vunpack.c.l.b16 %v277
    %v315 = vunpack.c.h.b16 %v277
    %v316 = vunpack.c.l.b16 %v278
    %v317 = vunpack.c.h.b16 %v278
    %v318 = vunpack.c.l.b16 %v279
    %v319 = vunpack.c.h.b16 %v279
    %v320 = vunpack.c.l.b16 %v280
    %v321 = vunpack.c.h.b16 %v280
    %v322 = vunpack.c.l.b16 %v281
    %v323 = vunpack.c.h.b16 %v281
    %v324 = vunpack.c.l.b16 %v282
    %v325 = vunpack.c.h.b16 %v282
    %v326 = vunpack.c.l.b16 %v283
    %v327 = vunpack.c.h.b16 %v283
    %v328 = vunpack.c.l.b16 %v284
    %v329 = vunpack.c.h.b16 %v284
    %v330 = vunpack.c.l.b16 %v285
    %v331 = vunpack.c.h.b16 %v285
    %v332 = vunpack.c.l.b16 %v286
    %v333 = vunpack.c.h.b16 %v286
    %v334 = vunpack.c.l.b16 %v287
    %v335 = vunpack.c.h.b16 %v287
    %v336 = vpack.c.b16 %v306, %v304
    %v337 = vpack.c.b16 %v307, %v305
    %v338 = vpack.c.b16 %v310, %v308
    %v339 = vpack.c.b16 %v311, %v309
    %v340 = vpack.c.b16 %v314, %v312
    %v341 = vpack.c.b16 %v315, %v313
    %v342 = vpack.c.b16 %v318, %v316
    %v343 = vpack.c.b16 %v319, %v317
    %v344 = vpack.c.b16 %v322, %v320
    %v345 = vpack.c.b16 %v323, %v321
    %v346 = vpack.c.b16 %v326, %v324
    %v347 = vpack.c.b16 %v327, %v325
    %v348 = vpack.c.b16 %v330, %v328
    %v349 = vpack.c.b16 %v331, %v329
    %v350 = vpack.c.b16 %v334, %v332
    %v351 = vpack.c.b16 %v335, %v333
    %368 = vmatprep.subr.bf16.mxu0 %v351
    %369 = vmatpush1.bf16.msra.mxu0 %v350
    %370 = vmatprep.subr.bf16.mxu0 %v349
    %371 = vmatpush1.bf16.msra.mxu0 %v348
    %372 = vmatprep.subr.bf16.mxu0 %v347
    %373 = vmatpush1.bf16.msra.mxu0 %v346
    %374 = vmatprep.subr.bf16.mxu0 %v345
    %375 = vmatpush1.bf16.msra.mxu0 %v344
    %376 = vmatprep.subr.bf16.mxu0 %v343
    %377 = vmatpush1.bf16.msra.mxu0 %v342
    %378 = vmatprep.subr.bf16.mxu0 %v341
    %379 = vmatpush1.bf16.msra.mxu0 %v340
    %380 = vmatprep.subr.bf16.mxu0 %v339
    %381 = vmatpush1.bf16.msra.mxu0 %v338
    %382 = vmatprep.subr.bf16.mxu0 %v337
    %383 = vmatpush1.bf16.msra.mxu0 %v336
    %384 = vmatprep.subr.bf16.mxu0 0
    %385 = vmatpush2.bf16.msra.mxu0 0
    %386 = vmatprep.subr.bf16.mxu0 0
    %387 = vmatpush2.bf16.msra.mxu0 0
    %388 = vmatprep.subr.bf16.mxu0 0
    %389 = vmatpush2.bf16.msra.mxu0 0
    %390 = vmatprep.subr.bf16.mxu0 0
    %391 = vmatpush2.bf16.msra.mxu0 0
    %392 = vmatprep.subr.bf16.mxu0 0
    %393 = vmatpush2.bf16.msra.mxu0 0
    %394 = vmatprep.subr.bf16.mxu0 0
    %395 = vmatpush2.bf16.msra.mxu0 0
    %396 = vmatprep.subr.bf16.mxu0 0
    %397 = vmatpush2.bf16.msra.mxu0 0
    %398 = vmatprep.subr.bf16.mxu0 0
    %399 = vmatpush2.bf16.msra.mxu0 0
    %400 = vmatprep.mubr.bf16.mxu0 0
    %401 = vmatmul.mubr.bf16.gmra.mxu0 %v271
    %v402 = vpop.f32.mrf.mxu0
    %v403 = vadd.f32 0.0, %v402
    %v404 = vpop.f32.mrf.mxu0
    %v405 = vadd.f32 0.0, %v404
    %v406 = vpop.f32.mrf.mxu0
    %v407 = vpop.f32.mrf.mxu0
    %408 = vdwg.mxu0
    %v409 = vld [vmem:[%s6] sm:$0x1]
    %v411 = vlaneseq
    %v412 = vshrl.u32 %v411, 7
    %v413 = vsub.s32 0, %v412
    %v414 = vrot.slane %v409, %v413
    %v416 = vadd.f32 %v403, %v414
    %vm417 = vcmp.gt.f32.partialorder %v416, 20.0
    %v418 = vmin.f32 %v416, 20.0
    %v419 = vmul.f32 %v418, 1.442695
    %v420 = vpow.pop %v419
    %v421 = vadd.f32 %v420, 1.0
    %v422 = vlog2.pop %v421
    %v423 = vmul.f32 %v422, 0.6931472
    %v424 = vmul.f32 -0.5, %v420
    %v425 = vadd.f32 %v424, 1.0
    %v426 = vmul.f32 %v425, %v420
    %v427 = vand.u32 2147483647, %v420
    %vm428 = vcmp.lt.f32.partialorder %v427, 0.0004427343
    %v429 = vsel %vm428, %v426, %v423
    %v430 = vsel %vm417, %v416, %v429
    %v431 = vmul.f32 %v430, %v270
    %v432 = vld [vmem:[%s7] sm:$0xff]
    %v433 = vld [vmem:[%s7 + $0x8] sm:$0xff]
    %v434 = vlaneseq
    %v435 = vshrl.u32 %v434, 7
    %v436 = vsub.s32 0, %v435
    %v437 = vrot.slane %v430, %v436
    %v438 = vmul.f32 %v437, %v432
    %v439 = vmul.f32 %v437, %v433
    %v440 = vmul.f32 %v438, 1.442695
    %v441 = vpow.pop %v440
    %v442 = vmul.f32 %v439, 1.442695
    %v443 = vpow.pop %v442
    %v444 = vlaneseq
    %v445 = vshrl.u32 %v444, 7
    %v446 = vsub.s32 0, %v445
    %v447 = vrot.slane %v405, %v446
    %449 = vbcast.lane.b32.xlu0 %v447, 256
    %v450 = vpop.permute.xlu0 %449
    %s452 = sor.u32 256, 8
    %453 = vbcast.lane.b32.xlu0 %v447, %s452
    %v454 = vpop.permute.xlu0 %453
    %s456 = sor.u32 256, 16
    %457 = vbcast.lane.b32.xlu0 %v447, %s456
    %v458 = vpop.permute.xlu0 %457
    %s460 = sor.u32 256, 24
    %461 = vbcast.lane.b32.xlu0 %v447, %s460
    %v462 = vpop.permute.xlu0 %461
    %v463 = vsel %vm50, %v450, %v458
    %v464 = vsel %vm50, %v454, %v462
    %s466 = sor.u32 256, 32
    %467 = vbcast.lane.b32.xlu0 %v447, %s466
    %v468 = vpop.permute.xlu0 %467
    %s470 = sor.u32 256, 40
    %471 = vbcast.lane.b32.xlu0 %v447, %s470
    %v472 = vpop.permute.xlu0 %471
    %s474 = sor.u32 256, 48
    %475 = vbcast.lane.b32.xlu0 %v447, %s474
    %v476 = vpop.permute.xlu0 %475
    %s478 = sor.u32 256, 56
    %479 = vbcast.lane.b32.xlu0 %v447, %s478
    %v480 = vpop.permute.xlu0 %479
    %v481 = vsel %vm50, %v468, %v476
    %v482 = vsel %vm50, %v472, %v480
    %v483 = vmul.f32 %v441, 0.0
    %v484 = vmul.f32 %v443, 0.0
    %v485 = vlaneseq
    %v486 = vshrl.u32 %v485, 7
    %v487 = vsub.s32 0, %v486
    %v488 = vrot.slane %v431, %v487
    %v489 = vmul.f32 %v463, %v488
    %v490 = vmul.f32 %v464, %v488
    %v491 = vadd.f32 %v483, %v489
    %v492 = vadd.f32 %v484, %v490
    %v493 = vmul.f32 %v491, %v481
    %v494 = vmul.f32 %v492, %v482
    %v495 = vadd.f32 %v493, %v494
    %v496 = vrot.slane %v495, 4
    %v497 = vadd.f32 %v495, %v496
    %v498 = vrot.slane %v497, 2
    %v499 = vadd.f32 %v497, %v498
    %v500 = vrot.slane %v499, 1
    %v501 = vadd.f32 %v499, %v500
    %v502 = vlaneseq
    %v503 = vshrl.u32 %v502, 7
    %v504 = vsub.s32 1, %v503
    %v505 = vrot.slane %v430, %v504
    %v506 = vmul.f32 %v505, %v432
    %v507 = vmul.f32 %v505, %v433
    %v508 = vmul.f32 %v506, 1.442695
    %v509 = vpow.pop %v508
    %v510 = vmul.f32 %v507, 1.442695
    %v511 = vpow.pop %v510
    %v512 = vlaneseq
    %v513 = vshrl.u32 %v512, 7
    %v514 = vsub.s32 1, %v513
    %v515 = vrot.slane %v405, %v514
    %517 = vbcast.lane.b32.xlu0 %v515, 256
    %v518 = vpop.permute.xlu0 %517
    %s520 = sor.u32 256, 8
    %521 = vbcast.lane.b32.xlu0 %v515, %s520
    %v522 = vpop.permute.xlu0 %521
    %s524 = sor.u32 256, 16
    %525 = vbcast.lane.b32.xlu0 %v515, %s524
    %v526 = vpop.permute.xlu0 %525
    %s528 = sor.u32 256, 24
    %529 = vbcast.lane.b32.xlu0 %v515, %s528
    %v530 = vpop.permute.xlu0 %529
    %v531 = vsel %vm50, %v518, %v526
    %v532 = vsel %vm50, %v522, %v530
    %s534 = sor.u32 256, 32
    %535 = vbcast.lane.b32.xlu0 %v515, %s534
    %v536 = vpop.permute.xlu0 %535
    %s538 = sor.u32 256, 40
    %539 = vbcast.lane.b32.xlu0 %v515, %s538
    %v540 = vpop.permute.xlu0 %539
    %s542 = sor.u32 256, 48
    %543 = vbcast.lane.b32.xlu0 %v515, %s542
    %v544 = vpop.permute.xlu0 %543
    %s546 = sor.u32 256, 56
    %547 = vbcast.lane.b32.xlu0 %v515, %s546
    %v548 = vpop.permute.xlu0 %547
    %v549 = vsel %vm50, %v536, %v544
    %v550 = vsel %vm50, %v540, %v548
    %v551 = vmul.f32 %v509, %v491
    %v552 = vmul.f32 %v511, %v492
    %v553 = vlaneseq
    %v554 = vshrl.u32 %v553, 7
    %v555 = vsub.s32 1, %v554
    %v556 = vrot.slane %v431, %v555
    %v557 = vmul.f32 %v531, %v556
    %v558 = vmul.f32 %v532, %v556
    %v559 = vadd.f32 %v551, %v557
    %v560 = vadd.f32 %v552, %v558
    %v561 = vmul.f32 %v559, %v549
    %v562 = vmul.f32 %v560, %v550
    %v563 = vadd.f32 %v561, %v562
    %v564 = vrot.slane %v563, 4
    %v565 = vadd.f32 %v563, %v564
    %v566 = vrot.slane %v565, 2
    %v567 = vadd.f32 %v565, %v566
    %v568 = vrot.slane %v567, 1
    %v569 = vadd.f32 %v567, %v568
    %v570 = vlaneseq
    %v571 = vshrl.u32 %v570, 7
    %v572 = vsub.s32 2, %v571
    %v573 = vrot.slane %v430, %v572
    %v574 = vmul.f32 %v573, %v432
    %v575 = vmul.f32 %v573, %v433
    %v576 = vmul.f32 %v574, 1.442695
    %v577 = vpow.pop %v576
    %v578 = vmul.f32 %v575, 1.442695
    %v579 = vpow.pop %v578
    %v580 = vlaneseq
    %v581 = vshrl.u32 %v580, 7
    %v582 = vsub.s32 2, %v581
    %v583 = vrot.slane %v405, %v582
    %585 = vbcast.lane.b32.xlu0 %v583, 256
    %v586 = vpop.permute.xlu0 %585
    %s588 = sor.u32 256, 8
    %589 = vbcast.lane.b32.xlu0 %v583, %s588
    %v590 = vpop.permute.xlu0 %589
    %s592 = sor.u32 256, 16
    %593 = vbcast.lane.b32.xlu0 %v583, %s592
    %v594 = vpop.permute.xlu0 %593
    %s596 = sor.u32 256, 24
    %597 = vbcast.lane.b32.xlu0 %v583, %s596
    %v598 = vpop.permute.xlu0 %597
    %v599 = vsel %vm50, %v586, %v594
    %v600 = vsel %vm50, %v590, %v598
    %s602 = sor.u32 256, 32
    %603 = vbcast.lane.b32.xlu0 %v583, %s602
    %v604 = vpop.permute.xlu0 %603
    %s606 = sor.u32 256, 40
    %607 = vbcast.lane.b32.xlu0 %v583, %s606
    %v608 = vpop.permute.xlu0 %607
    %s610 = sor.u32 256, 48
    %611 = vbcast.lane.b32.xlu0 %v583, %s610
    %v612 = vpop.permute.xlu0 %611
    %s614 = sor.u32 256, 56
    %615 = vbcast.lane.b32.xlu0 %v583, %s614
    %v616 = vpop.permute.xlu0 %615
    %v617 = vsel %vm50, %v604, %v612
    %v618 = vsel %vm50, %v608, %v616
    %v619 = vmul.f32 %v577, %v559
    %v620 = vmul.f32 %v579, %v560
    %v621 = vlaneseq
    %v622 = vshrl.u32 %v621, 7
    %v623 = vsub.s32 2, %v622
    %v624 = vrot.slane %v431, %v623
    %v625 = vmul.f32 %v599, %v624
    %v626 = vmul.f32 %v600, %v624
    %v627 = vadd.f32 %v619, %v625
    %v628 = vadd.f32 %v620, %v626
    %v629 = vmul.f32 %v627, %v617
    %v630 = vmul.f32 %v628, %v618
    %v631 = vadd.f32 %v629, %v630
    %v632 = vrot.slane %v631, 4
    %v633 = vadd.f32 %v631, %v632
    %v634 = vrot.slane %v633, 2
    %v635 = vadd.f32 %v633, %v634
    %v636 = vrot.slane %v635, 1
    %v637 = vadd.f32 %v635, %v636
    %v638 = vlaneseq
    %v639 = vshrl.u32 %v638, 7
    %v640 = vsub.s32 3, %v639
    %v641 = vrot.slane %v430, %v640
    %v642 = vmul.f32 %v641, %v432
    %v643 = vmul.f32 %v641, %v433
    %v644 = vmul.f32 %v642, 1.442695
    %v645 = vpow.pop %v644
    %v646 = vmul.f32 %v643, 1.442695
    %v647 = vpow.pop %v646
    %v648 = vlaneseq
    %v649 = vshrl.u32 %v648, 7
    %v650 = vsub.s32 3, %v649
    %v651 = vrot.slane %v405, %v650
    %653 = vbcast.lane.b32.xlu0 %v651, 256
    %v654 = vpop.permute.xlu0 %653
    %s656 = sor.u32 256, 8
    %657 = vbcast.lane.b32.xlu0 %v651, %s656
    %v658 = vpop.permute.xlu0 %657
    %s660 = sor.u32 256, 16
    %661 = vbcast.lane.b32.xlu0 %v651, %s660
    %v662 = vpop.permute.xlu0 %661
    %s664 = sor.u32 256, 24
    %665 = vbcast.lane.b32.xlu0 %v651, %s664
    %v666 = vpop.permute.xlu0 %665
    %v667 = vsel %vm50, %v654, %v662
    %v668 = vsel %vm50, %v658, %v666
    %s670 = sor.u32 256, 32
    %671 = vbcast.lane.b32.xlu0 %v651, %s670
    %v672 = vpop.permute.xlu0 %671
    %s674 = sor.u32 256, 40
    %675 = vbcast.lane.b32.xlu0 %v651, %s674
    %v676 = vpop.permute.xlu0 %675
    %s678 = sor.u32 256, 48
    %679 = vbcast.lane.b32.xlu0 %v651, %s678
    %v680 = vpop.permute.xlu0 %679
    %s682 = sor.u32 256, 56
    %683 = vbcast.lane.b32.xlu0 %v651, %s682
    %v684 = vpop.permute.xlu0 %683
    %v685 = vsel %vm50, %v672, %v680
    %v686 = vsel %vm50, %v676, %v684
    %v687 = vmul.f32 %v645, %v627
    %v688 = vmul.f32 %v647, %v628
    %v689 = vlaneseq
    %v690 = vshrl.u32 %v689, 7
    %v691 = vsub.s32 3, %v690
    %v692 = vrot.slane %v431, %v691
    %v693 = vmul.f32 %v667, %v692
    %v694 = vmul.f32 %v668, %v692
    %v695 = vadd.f32 %v687, %v693
    %v696 = vadd.f32 %v688, %v694
    %v697 = vmul.f32 %v695, %v685
    %v698 = vmul.f32 %v696, %v686
    %v699 = vadd.f32 %v697, %v698
    %v700 = vrot.slane %v699, 4
    %v701 = vadd.f32 %v699, %v700
    %v702 = vrot.slane %v701, 2
    %v703 = vadd.f32 %v701, %v702
    %v704 = vrot.slane %v703, 1
    %v705 = vadd.f32 %v703, %v704
    %v706 = vlaneseq
    %v707 = vshrl.u32 %v706, 7
    %v708 = vsub.s32 4, %v707
    %v709 = vrot.slane %v430, %v708
    %v710 = vmul.f32 %v709, %v432
    %v711 = vmul.f32 %v709, %v433
    %v712 = vmul.f32 %v710, 1.442695
    %v713 = vpow.pop %v712
    %v714 = vmul.f32 %v711, 1.442695
    %v715 = vpow.pop %v714
    %v716 = vlaneseq
    %v717 = vshrl.u32 %v716, 7
    %v718 = vsub.s32 4, %v717
    %v719 = vrot.slane %v405, %v718
    %721 = vbcast.lane.b32.xlu0 %v719, 256
    %v722 = vpop.permute.xlu0 %721
    %s724 = sor.u32 256, 8
    %725 = vbcast.lane.b32.xlu0 %v719, %s724
    %v726 = vpop.permute.xlu0 %725
    %s728 = sor.u32 256, 16
    %729 = vbcast.lane.b32.xlu0 %v719, %s728
    %v730 = vpop.permute.xlu0 %729
    %s732 = sor.u32 256, 24
    %733 = vbcast.lane.b32.xlu0 %v719, %s732
    %v734 = vpop.permute.xlu0 %733
    %v735 = vsel %vm50, %v722, %v730
    %v736 = vsel %vm50, %v726, %v734
    %s738 = sor.u32 256, 32
    %739 = vbcast.lane.b32.xlu0 %v719, %s738
    %v740 = vpop.permute.xlu0 %739
    %s742 = sor.u32 256, 40
    %743 = vbcast.lane.b32.xlu0 %v719, %s742
    %v744 = vpop.permute.xlu0 %743
    %s746 = sor.u32 256, 48
    %747 = vbcast.lane.b32.xlu0 %v719, %s746
    %v748 = vpop.permute.xlu0 %747
    %s750 = sor.u32 256, 56
    %751 = vbcast.lane.b32.xlu0 %v719, %s750
    %v752 = vpop.permute.xlu0 %751
    %v753 = vsel %vm50, %v740, %v748
    %v754 = vsel %vm50, %v744, %v752
    %v755 = vmul.f32 %v713, %v695
    %v756 = vmul.f32 %v715, %v696
    %v757 = vlaneseq
    %v758 = vshrl.u32 %v757, 7
    %v759 = vsub.s32 4, %v758
    %v760 = vrot.slane %v431, %v759
    %v761 = vmul.f32 %v735, %v760
    %v762 = vmul.f32 %v736, %v760
    %v763 = vadd.f32 %v755, %v761
    %v764 = vadd.f32 %v756, %v762
    %v765 = vmul.f32 %v763, %v753
    %v766 = vmul.f32 %v764, %v754
    %v767 = vadd.f32 %v765, %v766
    %v768 = vrot.slane %v767, 4
    %v769 = vadd.f32 %v767, %v768
    %v770 = vrot.slane %v769, 2
    %v771 = vadd.f32 %v769, %v770
    %v772 = vrot.slane %v771, 1
    %v773 = vadd.f32 %v771, %v772
    %v774 = vlaneseq
    %v775 = vshrl.u32 %v774, 7
    %v776 = vsub.s32 5, %v775
    %v777 = vrot.slane %v430, %v776
    %v778 = vmul.f32 %v777, %v432
    %v779 = vmul.f32 %v777, %v433
    %v780 = vmul.f32 %v778, 1.442695
    %v781 = vpow.pop %v780
    %v782 = vmul.f32 %v779, 1.442695
    %v783 = vpow.pop %v782
    %v784 = vlaneseq
    %v785 = vshrl.u32 %v784, 7
    %v786 = vsub.s32 5, %v785
    %v787 = vrot.slane %v405, %v786
    %789 = vbcast.lane.b32.xlu0 %v787, 256
    %v790 = vpop.permute.xlu0 %789
    %s792 = sor.u32 256, 8
    %793 = vbcast.lane.b32.xlu0 %v787, %s792
    %v794 = vpop.permute.xlu0 %793
    %s796 = sor.u32 256, 16
    %797 = vbcast.lane.b32.xlu0 %v787, %s796
    %v798 = vpop.permute.xlu0 %797
    %s800 = sor.u32 256, 24
    %801 = vbcast.lane.b32.xlu0 %v787, %s800
    %v802 = vpop.permute.xlu0 %801
    %v803 = vsel %vm50, %v790, %v798
    %v804 = vsel %vm50, %v794, %v802
    %s806 = sor.u32 256, 32
    %807 = vbcast.lane.b32.xlu0 %v787, %s806
    %v808 = vpop.permute.xlu0 %807
    %s810 = sor.u32 256, 40
    %811 = vbcast.lane.b32.xlu0 %v787, %s810
    %v812 = vpop.permute.xlu0 %811
    %s814 = sor.u32 256, 48
    %815 = vbcast.lane.b32.xlu0 %v787, %s814
    %v816 = vpop.permute.xlu0 %815
    %s818 = sor.u32 256, 56
    %819 = vbcast.lane.b32.xlu0 %v787, %s818
    %v820 = vpop.permute.xlu0 %819
    %v821 = vsel %vm50, %v808, %v816
    %v822 = vsel %vm50, %v812, %v820
    %v823 = vmul.f32 %v781, %v763
    %v824 = vmul.f32 %v783, %v764
    %v825 = vlaneseq
    %v826 = vshrl.u32 %v825, 7
    %v827 = vsub.s32 5, %v826
    %v828 = vrot.slane %v431, %v827
    %v829 = vmul.f32 %v803, %v828
    %v830 = vmul.f32 %v804, %v828
    %v831 = vadd.f32 %v823, %v829
    %v832 = vadd.f32 %v824, %v830
    %v833 = vmul.f32 %v831, %v821
    %v834 = vmul.f32 %v832, %v822
    %v835 = vadd.f32 %v833, %v834
    %v836 = vrot.slane %v835, 4
    %v837 = vadd.f32 %v835, %v836
    %v838 = vrot.slane %v837, 2
    %v839 = vadd.f32 %v837, %v838
    %v840 = vrot.slane %v839, 1
    %v841 = vadd.f32 %v839, %v840
    %v842 = vlaneseq
    %v843 = vshrl.u32 %v842, 7
    %v844 = vsub.s32 6, %v843
    %v845 = vrot.slane %v430, %v844
    %v846 = vmul.f32 %v845, %v432
    %v847 = vmul.f32 %v845, %v433
    %v848 = vmul.f32 %v846, 1.442695
    %v849 = vpow.pop %v848
    %v850 = vmul.f32 %v847, 1.442695
    %v851 = vpow.pop %v850
    %v852 = vlaneseq
    %v853 = vshrl.u32 %v852, 7
    %v854 = vsub.s32 6, %v853
    %v855 = vrot.slane %v405, %v854
    %857 = vbcast.lane.b32.xlu0 %v855, 256
    %v858 = vpop.permute.xlu0 %857
    %s860 = sor.u32 256, 8
    %861 = vbcast.lane.b32.xlu0 %v855, %s860
    %v862 = vpop.permute.xlu0 %861
    %s864 = sor.u32 256, 16
    %865 = vbcast.lane.b32.xlu0 %v855, %s864
    %v866 = vpop.permute.xlu0 %865
    %s868 = sor.u32 256, 24
    %869 = vbcast.lane.b32.xlu0 %v855, %s868
    %v870 = vpop.permute.xlu0 %869
    %v871 = vsel %vm50, %v858, %v866
    %v872 = vsel %vm50, %v862, %v870
    %s874 = sor.u32 256, 32
    %875 = vbcast.lane.b32.xlu0 %v855, %s874
    %v876 = vpop.permute.xlu0 %875
    %s878 = sor.u32 256, 40
    %879 = vbcast.lane.b32.xlu0 %v855, %s878
    %v880 = vpop.permute.xlu0 %879
    %s882 = sor.u32 256, 48
    %883 = vbcast.lane.b32.xlu0 %v855, %s882
    %v884 = vpop.permute.xlu0 %883
    %s886 = sor.u32 256, 56
    %887 = vbcast.lane.b32.xlu0 %v855, %s886
    %v888 = vpop.permute.xlu0 %887
    %v889 = vsel %vm50, %v876, %v884
    %v890 = vsel %vm50, %v880, %v888
    %v891 = vmul.f32 %v849, %v831
    %v892 = vmul.f32 %v851, %v832
    %v893 = vlaneseq
    %v894 = vshrl.u32 %v893, 7
    %v895 = vsub.s32 6, %v894
    %v896 = vrot.slane %v431, %v895
    %v897 = vmul.f32 %v871, %v896
    %v898 = vmul.f32 %v872, %v896
    %v899 = vadd.f32 %v891, %v897
    %v900 = vadd.f32 %v892, %v898
    %v901 = vmul.f32 %v899, %v889
    %v902 = vmul.f32 %v900, %v890
    %v903 = vadd.f32 %v901, %v902
    %v904 = vrot.slane %v903, 4
    %v905 = vadd.f32 %v903, %v904
    %v906 = vrot.slane %v905, 2
    %v907 = vadd.f32 %v905, %v906
    %v908 = vrot.slane %v907, 1
    %v909 = vadd.f32 %v907, %v908
    %v910 = vlaneseq
    %v911 = vshrl.u32 %v910, 7
    %v912 = vsub.s32 7, %v911
    %v913 = vrot.slane %v430, %v912
    %v914 = vmul.f32 %v913, %v432
    %v915 = vmul.f32 %v913, %v433
    %v916 = vmul.f32 %v914, 1.442695
    %v917 = vpow.pop %v916
    %v918 = vmul.f32 %v915, 1.442695
    %v919 = vpow.pop %v918
    %v920 = vlaneseq
    %v921 = vshrl.u32 %v920, 7
    %v922 = vsub.s32 7, %v921
    %v923 = vrot.slane %v405, %v922
    %925 = vbcast.lane.b32.xlu0 %v923, 256
    %v926 = vpop.permute.xlu0 %925
    %s928 = sor.u32 256, 8
    %929 = vbcast.lane.b32.xlu0 %v923, %s928
    %v930 = vpop.permute.xlu0 %929
    %s932 = sor.u32 256, 16
    %933 = vbcast.lane.b32.xlu0 %v923, %s932
    %v934 = vpop.permute.xlu0 %933
    %s936 = sor.u32 256, 24
    %937 = vbcast.lane.b32.xlu0 %v923, %s936
    %v938 = vpop.permute.xlu0 %937
    %v939 = vsel %vm50, %v926, %v934
    %v940 = vsel %vm50, %v930, %v938
    %s942 = sor.u32 256, 32
    %943 = vbcast.lane.b32.xlu0 %v923, %s942
    %v944 = vpop.permute.xlu0 %943
    %s946 = sor.u32 256, 40
    %947 = vbcast.lane.b32.xlu0 %v923, %s946
    %v948 = vpop.permute.xlu0 %947
    %s950 = sor.u32 256, 48
    %951 = vbcast.lane.b32.xlu0 %v923, %s950
    %v952 = vpop.permute.xlu0 %951
    %s954 = sor.u32 256, 56
    %955 = vbcast.lane.b32.xlu0 %v923, %s954
    %v956 = vpop.permute.xlu0 %955
    %v957 = vsel %vm50, %v944, %v952
    %v958 = vsel %vm50, %v948, %v956
    %v959 = vmul.f32 %v917, %v899
    %v960 = vmul.f32 %v919, %v900
    %v961 = vlaneseq
    %v962 = vshrl.u32 %v961, 7
    %v963 = vsub.s32 7, %v962
    %v964 = vrot.slane %v431, %v963
    %v965 = vmul.f32 %v939, %v964
    %v966 = vmul.f32 %v940, %v964
    %v967 = vadd.f32 %v959, %v965
    %v968 = vadd.f32 %v960, %v966
    %v969 = vmul.f32 %v967, %v957
    %v970 = vmul.f32 %v968, %v958
    %v971 = vadd.f32 %v969, %v970
    %v972 = vrot.slane %v971, 4
    %v973 = vadd.f32 %v971, %v972
    %v974 = vrot.slane %v973, 2
    %v975 = vadd.f32 %v973, %v974
    %v976 = vrot.slane %v975, 1
    %v977 = vadd.f32 %v975, %v976
    %v978 = vsel %vm250, %v501, %v569
    %v979 = vsel %vm240, %v978, %v637
    %v980 = vsel %vm230, %v979, %v705
    %vm981 = vcmask 1043456
    %v982 = vsel %vm981, %v980, %v773
    %vm983 = vcmask 1044480
    %v984 = vsel %vm983, %v982, %v841
    %vm985 = vcmask 1045504
    %v986 = vsel %vm985, %v984, %v909
    %vm987 = vcmask 1046528
    %v988 = vsel %vm987, %v986, %v977
    %v989 = vld [vmem:[%s8] sm:$0x1]
    %v991 = vlaneseq
    %v992 = vshrl.u32 %v991, 7
    %v993 = vsub.s32 0, %v992
    %v994 = vrot.slane %v989, %v993
    %v996 = vmul.f32 %v270, %v994
    %v997 = vadd.f32 %v988, %v996
    %v998 = vxor.u32 %v215, 2147483648
    %v999 = vmul.f32 %v998, 1.442695
    %v1000 = vpow.pop %v999
    %v1001 = vadd.f32 %v1000, 1.0
    %v1002 = vrcp.pop %v1001
    %v1003 = vmul.f32 1.0, %v1002
    %v1004 = vmul.f32 %v215, %v1003
    %v1005 = vmul.f32 %v997, %v1004
    %v1006 = vpack.c.bf16 %v1005, %v1005
    %v1007 = vld [vmem:[%s9] sm:$0xf]
    %v1008 = vld [vmem:[%s9 + $0x4] sm:$0xf]
    %v1009 = vld [vmem:[%s9 + $0x8] sm:$0xf]
    %v1010 = vld [vmem:[%s9 + $0xc] sm:$0xf]
    %v1011 = vld [vmem:[%s9 + $0x10] sm:$0xf]
    %v1012 = vld [vmem:[%s9 + $0x14] sm:$0xf]
    %v1013 = vld [vmem:[%s9 + $0x18] sm:$0xf]
    %v1014 = vld [vmem:[%s9 + $0x1c] sm:$0xf]
    %v1015 = vld [vmem:[%s9 + $0x20] sm:$0xf]
    %v1016 = vld [vmem:[%s9 + $0x24] sm:$0xf]
    %v1017 = vld [vmem:[%s9 + $0x28] sm:$0xf]
    %v1018 = vld [vmem:[%s9 + $0x2c] sm:$0xf]
    %v1019 = vld [vmem:[%s9 + $0x30] sm:$0xf]
    %v1020 = vld [vmem:[%s9 + $0x34] sm:$0xf]
    %v1021 = vld [vmem:[%s9 + $0x38] sm:$0xf]
    %v1022 = vld [vmem:[%s9 + $0x3c] sm:$0xf]
    %v1039 = vunpack.c.l.b16 %v1007
    %v1040 = vunpack.c.l.b16 %v1008
    %v1041 = vunpack.c.l.b16 %v1009
    %v1042 = vunpack.c.l.b16 %v1010
    %v1043 = vunpack.c.l.b16 %v1011
    %v1044 = vunpack.c.l.b16 %v1012
    %v1045 = vunpack.c.l.b16 %v1013
    %v1046 = vunpack.c.l.b16 %v1014
    %v1047 = vunpack.c.l.b16 %v1015
    %v1048 = vunpack.c.l.b16 %v1016
    %v1049 = vunpack.c.l.b16 %v1017
    %v1050 = vunpack.c.l.b16 %v1018
    %v1051 = vunpack.c.l.b16 %v1019
    %v1052 = vunpack.c.l.b16 %v1020
    %v1053 = vunpack.c.l.b16 %v1021
    %v1054 = vunpack.c.l.b16 %v1022
    %v1055 = vpack.c.b16 %v1040, %v1039
    %v1056 = vpack.c.b16 %v1042, %v1041
    %v1057 = vpack.c.b16 %v1044, %v1043
    %v1058 = vpack.c.b16 %v1046, %v1045
    %v1059 = vpack.c.b16 %v1048, %v1047
    %v1060 = vpack.c.b16 %v1050, %v1049
    %v1061 = vpack.c.b16 %v1052, %v1051
    %v1062 = vpack.c.b16 %v1054, %v1053
    %1071 = vmatprep.subr.bf16.mxu0 0
    %1072 = vmatpush1.bf16.msra.mxu0 %v1062
    %1073 = vmatprep.subr.bf16.mxu0 0
    %1074 = vmatpush1.bf16.msra.mxu0 %v1061
    %1075 = vmatprep.subr.bf16.mxu0 0
    %1076 = vmatpush1.bf16.msra.mxu0 %v1060
    %1077 = vmatprep.subr.bf16.mxu0 0
    %1078 = vmatpush1.bf16.msra.mxu0 %v1059
    %1079 = vmatprep.subr.bf16.mxu0 0
    %1080 = vmatpush1.bf16.msra.mxu0 %v1058
    %1081 = vmatprep.subr.bf16.mxu0 0
    %1082 = vmatpush1.bf16.msra.mxu0 %v1057
    %1083 = vmatprep.subr.bf16.mxu0 0
    %1084 = vmatpush1.bf16.msra.mxu0 %v1056
    %1085 = vmatprep.subr.bf16.mxu0 0
    %1086 = vmatpush1.bf16.msra.mxu0 %v1055
    %1087 = vmatprep.subr.bf16.mxu0 0
    %1088 = vmatpush2.bf16.msra.mxu0 0
    %1089 = vmatprep.subr.bf16.mxu0 0
    %1090 = vmatpush2.bf16.msra.mxu0 0
    %1091 = vmatprep.subr.bf16.mxu0 0
    %1092 = vmatpush2.bf16.msra.mxu0 0
    %1093 = vmatprep.subr.bf16.mxu0 0
    %1094 = vmatpush2.bf16.msra.mxu0 0
    %1095 = vmatprep.subr.bf16.mxu0 0
    %1096 = vmatpush2.bf16.msra.mxu0 0
    %1097 = vmatprep.subr.bf16.mxu0 0
    %1098 = vmatpush2.bf16.msra.mxu0 0
    %1099 = vmatprep.subr.bf16.mxu0 0
    %1100 = vmatpush2.bf16.msra.mxu0 0
    %1101 = vmatprep.subr.bf16.mxu0 0
    %1102 = vmatpush2.bf16.msra.mxu0 0
    %1103 = vmatprep.mubr.bf16.mxu0 0
    %1104 = vmatmul.mubr.bf16.gmra.mxu0 %v1006
    %v1105 = vpop.f32.mrf.mxu0
    %v1106 = vadd.f32 0.0, %v1105
    %v1107 = vpop.f32.mrf.mxu0
    %v1108 = vpop.f32.mrf.mxu0
    %v1109 = vpop.f32.mrf.mxu0
    %1110 = vdwg.mxu0
    %v1111 = vadd.f32 %v48, %v1106
    %v1112 = vmul.f32 %v1111, %v1111
    %v1114 = vsel %vm50, %v1112, 0
    %1116 = vmatprep.subr.mxu0 0.0
    %1117 = vmatpush1.msra.mxu0 0.0
    %1118 = vmatprep.subr.mxu0 0.0
    %1119 = vmatpush1.msra.mxu0 0.0
    %1120 = vmatprep.subr.mxu0 0.0
    %1121 = vmatpush1.msra.mxu0 0.0
    %1122 = vmatprep.subr.mxu0 0.0
    %1123 = vmatpush1.msra.mxu0 0.0
    %1124 = vmatprep.subr.mxu0 0.0
    %1125 = vmatpush1.msra.mxu0 0.0
    %1126 = vmatprep.subr.mxu0 0.0
    %1127 = vmatpush1.msra.mxu0 0.0
    %1128 = vmatprep.subr.mxu0 0.0
    %1129 = vmatpush1.msra.mxu0 0.0
    %1130 = vmatprep.subr.mxu0 0.0
    %1131 = vmatpush1.msra.mxu0 0.0
    %1132 = vmatprep.subr.mxu0 0.0
    %1133 = vmatpush1.msra.mxu0 %v47
    %1134 = vmatprep.subr.mxu0 0.0
    %1135 = vmatpush1.msra.mxu0 %v46
    %1136 = vmatprep.subr.mxu0 0.0
    %1137 = vmatpush1.msra.mxu0 %v45
    %1138 = vmatprep.subr.mxu0 0.0
    %1139 = vmatpush1.msra.mxu0 %v44
    %1140 = vmatprep.subr.mxu0 0.0
    %1141 = vmatpush1.msra.mxu0 %v43
    %1142 = vmatprep.subr.mxu0 0.0
    %1143 = vmatpush1.msra.mxu0 %v42
    %1144 = vmatprep.subr.mxu0 0.0
    %1145 = vmatpush1.msra.mxu0 %v41
    %1146 = vmatprep.subr.mxu0 0.0
    %1147 = vmatpush1.msra.mxu0 %v40
    %1148 = vmatprep.subr.mxu0 0.0
    %1149 = vmatpush2.msra.mxu0 0.0
    %1150 = vmatprep.subr.mxu0 0.0
    %1151 = vmatpush2.msra.mxu0 0.0
    %1152 = vmatprep.subr.mxu0 0.0
    %1153 = vmatpush2.msra.mxu0 0.0
    %1154 = vmatprep.subr.mxu0 0.0
    %1155 = vmatpush2.msra.mxu0 0.0
    %1156 = vmatprep.subr.mxu0 0.0
    %1157 = vmatpush2.msra.mxu0 0.0
    %1158 = vmatprep.subr.mxu0 0.0
    %1159 = vmatpush2.msra.mxu0 0.0
    %1160 = vmatprep.subr.mxu0 0.0
    %1161 = vmatpush2.msra.mxu0 0.0
    %1162 = vmatprep.subr.mxu0 0.0
    %1163 = vmatpush2.msra.mxu0 0.0
    %1164 = vmatprep.subr.mxu0 0.0
    %1165 = vmatpush2.msra.mxu0 0.0
    %1166 = vmatprep.subr.mxu0 0.0
    %1167 = vmatpush2.msra.mxu0 0.0
    %1168 = vmatprep.subr.mxu0 0.0
    %1169 = vmatpush2.msra.mxu0 0.0
    %1170 = vmatprep.subr.mxu0 0.0
    %1171 = vmatpush2.msra.mxu0 0.0
    %1172 = vmatprep.subr.mxu0 0.0
    %1173 = vmatpush2.msra.mxu0 0.0
    %1174 = vmatprep.subr.mxu0 0.0
    %1175 = vmatpush2.msra.mxu0 0.0
    %1176 = vmatprep.subr.mxu0 0.0
    %1177 = vmatpush2.msra.mxu0 0.0
    %1178 = vmatprep.subr.mxu0 0.0
    %1179 = vmatpush2.msra.mxu0 0.0
    %1180 = vmatprep.mubr.f32.mxu0 0.0
    %1181 = vmatmul.mubr.f32.gmra.mxu0 %v1114
    %v1182 = vpop.f32.mrf.mxu0
    %v1183 = vadd.f32 1e-05, %v1182
    %v1184 = vpop.f32.mrf.mxu0
    %1185 = vdwg.mxu0
    %v1186 = vrsqrt.pop %v1183
    %v1187 = vmul.f32 %v1111, %v1186
    %v1188 = vpack.c.bf16 %v1187, %v1187
    %s1189 = scalar_lea.vmem %s2, 64
    %v1190 = vld [vmem:[%s1189] sm:$0xff]
    %v1191 = vld [vmem:[%s1189 + $0x8] sm:$0xff]
    %v1192 = vld [vmem:[%s1189 + $0x10] sm:$0xff]
    %v1193 = vld [vmem:[%s1189 + $0x18] sm:$0xff]
    %v1194 = vld [vmem:[%s1189 + $0x20] sm:$0xff]
    %v1195 = vld [vmem:[%s1189 + $0x28] sm:$0xff]
    %v1196 = vld [vmem:[%s1189 + $0x30] sm:$0xff]
    %v1197 = vld [vmem:[%s1189 + $0x38] sm:$0xff]
    %v1206 = vunpack.c.l.b16 %v1190
    %v1207 = vunpack.c.h.b16 %v1190
    %v1208 = vunpack.c.l.b16 %v1191
    %v1209 = vunpack.c.h.b16 %v1191
    %v1210 = vunpack.c.l.b16 %v1192
    %v1211 = vunpack.c.h.b16 %v1192
    %v1212 = vunpack.c.l.b16 %v1193
    %v1213 = vunpack.c.h.b16 %v1193
    %v1214 = vunpack.c.l.b16 %v1194
    %v1215 = vunpack.c.h.b16 %v1194
    %v1216 = vunpack.c.l.b16 %v1195
    %v1217 = vunpack.c.h.b16 %v1195
    %v1218 = vunpack.c.l.b16 %v1196
    %v1219 = vunpack.c.h.b16 %v1196
    %v1220 = vunpack.c.l.b16 %v1197
    %v1221 = vunpack.c.h.b16 %v1197
    %v1222 = vpack.c.b16 %v1208, %v1206
    %v1223 = vpack.c.b16 %v1209, %v1207
    %v1224 = vpack.c.b16 %v1212, %v1210
    %v1225 = vpack.c.b16 %v1213, %v1211
    %v1226 = vpack.c.b16 %v1216, %v1214
    %v1227 = vpack.c.b16 %v1217, %v1215
    %v1228 = vpack.c.b16 %v1220, %v1218
    %v1229 = vpack.c.b16 %v1221, %v1219
    %v1239 = vsel %vm50, %v1188, 0
    %1241 = vmatprep.subr.bf16.mxu0 0
    %1242 = vmatpush1.bf16.msra.mxu0 0
    %1243 = vmatprep.subr.bf16.mxu0 0
    %1244 = vmatpush1.bf16.msra.mxu0 0
    %1245 = vmatprep.subr.bf16.mxu0 0
    %1246 = vmatpush1.bf16.msra.mxu0 0
    %1247 = vmatprep.subr.bf16.mxu0 0
    %1248 = vmatpush1.bf16.msra.mxu0 0
    %1249 = vmatprep.subr.bf16.mxu0 %v1229
    %1250 = vmatpush1.bf16.msra.mxu0 %v1228
    %1251 = vmatprep.subr.bf16.mxu0 %v1227
    %1252 = vmatpush1.bf16.msra.mxu0 %v1226
    %1253 = vmatprep.subr.bf16.mxu0 %v1225
    %1254 = vmatpush1.bf16.msra.mxu0 %v1224
    %1255 = vmatprep.subr.bf16.mxu0 %v1223
    %1256 = vmatpush1.bf16.msra.mxu0 %v1222
    %1257 = vmatprep.subr.bf16.mxu0 0
    %1258 = vmatpush2.bf16.msra.mxu0 0
    %1259 = vmatprep.subr.bf16.mxu0 0
    %1260 = vmatpush2.bf16.msra.mxu0 0
    %1261 = vmatprep.subr.bf16.mxu0 0
    %1262 = vmatpush2.bf16.msra.mxu0 0
    %1263 = vmatprep.subr.bf16.mxu0 0
    %1264 = vmatpush2.bf16.msra.mxu0 0
    %1265 = vmatprep.subr.bf16.mxu0 0
    %1266 = vmatpush2.bf16.msra.mxu0 0
    %1267 = vmatprep.subr.bf16.mxu0 0
    %1268 = vmatpush2.bf16.msra.mxu0 0
    %1269 = vmatprep.subr.bf16.mxu0 0
    %1270 = vmatpush2.bf16.msra.mxu0 0
    %1271 = vmatprep.subr.bf16.mxu0 0
    %1272 = vmatpush2.bf16.msra.mxu0 0
    %1273 = vmatprep.mubr.bf16.mxu0 0
    %1274 = vmatmul.mubr.bf16.gmra.mxu0 %v1239
    %v1275 = vpop.f32.mrf.mxu0
    %v1276 = vadd.f32 0.0, %v1275
    %v1277 = vpop.f32.mrf.mxu0
    %v1278 = vadd.f32 0.0, %v1277
    %v1279 = vpop.f32.mrf.mxu0
    %v1280 = vpop.f32.mrf.mxu0
    %1281 = vdwg.mxu0
    %s1282 = scalar_lea.vmem %s3, 4
    %v1283 = vld [vmem:[%s1282] sm:$0xf]
    %s1284 = scalar_lea.vmem %s4, 1
    %v1285 = vld [vmem:[%s1284] sm:$0x1]
    %v1287 = vlaneseq
    %v1288 = vshrl.u32 %v1287, 7
    %v1289 = vsub.s32 0, %v1288
    %v1290 = vrot.slane %v1285, %v1289
    %v1293 = vrot.slane %v1276, 5
    %v1295 = vsel %vm230, 0.0, %v1293
    %v1296 = vlaneseq
    %v1297 = vshrl.u32 %v1296, 7
    %v1298 = vsub.s32 0, %v1297
    %v1299 = vrot.slane %v1283, %v1298
    %v1300 = vmul.f32 %v1295, %v1299
    %v1301 = vadd.f32 %v1290, %v1300
    %v1302 = vrot.slane %v1276, 6
    %v1304 = vsel %vm240, 0.0, %v1302
    %v1305 = vlaneseq
    %v1306 = vshrl.u32 %v1305, 7
    %v1307 = vsub.s32 1, %v1306
    %v1308 = vrot.slane %v1283, %v1307
    %v1309 = vmul.f32 %v1304, %v1308
    %v1310 = vadd.f32 %v1301, %v1309
    %v1311 = vrot.slane %v1276, 7
    %v1313 = vsel %vm250, 0.0, %v1311
    %v1314 = vlaneseq
    %v1315 = vshrl.u32 %v1314, 7
    %v1316 = vsub.s32 2, %v1315
    %v1317 = vrot.slane %v1283, %v1316
    %v1318 = vmul.f32 %v1313, %v1317
    %v1319 = vadd.f32 %v1310, %v1318
    %v1320 = vlaneseq
    %v1321 = vshrl.u32 %v1320, 7
    %v1322 = vsub.s32 3, %v1321
    %v1323 = vrot.slane %v1283, %v1322
    %v1324 = vmul.f32 %v1276, %v1323
    %v1325 = vadd.f32 %v1319, %v1324
    %v1326 = vxor.u32 %v1325, 2147483648
    %v1327 = vmul.f32 %v1326, 1.442695
    %v1328 = vpow.pop %v1327
    %v1329 = vadd.f32 %v1328, 1.0
    %v1330 = vrcp.pop %v1329
    %v1331 = vmul.f32 1.0, %v1330
    %v1332 = vmul.f32 %v1325, %v1331
    %v1333 = vpack.c.bf16 %v1332, %v1332
    %s1334 = scalar_lea.vmem %s5, 128
    %v1335 = vld [vmem:[%s1334] sm:$0xff]
    %v1336 = vld [vmem:[%s1334 + $0x8] sm:$0xff]
    %v1337 = vld [vmem:[%s1334 + $0x10] sm:$0xff]
    %v1338 = vld [vmem:[%s1334 + $0x18] sm:$0xff]
    %v1339 = vld [vmem:[%s1334 + $0x20] sm:$0xff]
    %v1340 = vld [vmem:[%s1334 + $0x28] sm:$0xff]
    %v1341 = vld [vmem:[%s1334 + $0x30] sm:$0xff]
    %v1342 = vld [vmem:[%s1334 + $0x38] sm:$0xff]
    %v1343 = vld [vmem:[%s1334 + $0x40] sm:$0xff]
    %v1344 = vld [vmem:[%s1334 + $0x48] sm:$0xff]
    %v1345 = vld [vmem:[%s1334 + $0x50] sm:$0xff]
    %v1346 = vld [vmem:[%s1334 + $0x58] sm:$0xff]
    %v1347 = vld [vmem:[%s1334 + $0x60] sm:$0xff]
    %v1348 = vld [vmem:[%s1334 + $0x68] sm:$0xff]
    %v1349 = vld [vmem:[%s1334 + $0x70] sm:$0xff]
    %v1350 = vld [vmem:[%s1334 + $0x78] sm:$0xff]
    %v1367 = vunpack.c.l.b16 %v1335
    %v1368 = vunpack.c.h.b16 %v1335
    %v1369 = vunpack.c.l.b16 %v1336
    %v1370 = vunpack.c.h.b16 %v1336
    %v1371 = vunpack.c.l.b16 %v1337
    %v1372 = vunpack.c.h.b16 %v1337
    %v1373 = vunpack.c.l.b16 %v1338
    %v1374 = vunpack.c.h.b16 %v1338
    %v1375 = vunpack.c.l.b16 %v1339
    %v1376 = vunpack.c.h.b16 %v1339
    %v1377 = vunpack.c.l.b16 %v1340
    %v1378 = vunpack.c.h.b16 %v1340
    %v1379 = vunpack.c.l.b16 %v1341
    %v1380 = vunpack.c.h.b16 %v1341
    %v1381 = vunpack.c.l.b16 %v1342
    %v1382 = vunpack.c.h.b16 %v1342
    %v1383 = vunpack.c.l.b16 %v1343
    %v1384 = vunpack.c.h.b16 %v1343
    %v1385 = vunpack.c.l.b16 %v1344
    %v1386 = vunpack.c.h.b16 %v1344
    %v1387 = vunpack.c.l.b16 %v1345
    %v1388 = vunpack.c.h.b16 %v1345
    %v1389 = vunpack.c.l.b16 %v1346
    %v1390 = vunpack.c.h.b16 %v1346
    %v1391 = vunpack.c.l.b16 %v1347
    %v1392 = vunpack.c.h.b16 %v1347
    %v1393 = vunpack.c.l.b16 %v1348
    %v1394 = vunpack.c.h.b16 %v1348
    %v1395 = vunpack.c.l.b16 %v1349
    %v1396 = vunpack.c.h.b16 %v1349
    %v1397 = vunpack.c.l.b16 %v1350
    %v1398 = vunpack.c.h.b16 %v1350
    %v1399 = vpack.c.b16 %v1369, %v1367
    %v1400 = vpack.c.b16 %v1370, %v1368
    %v1401 = vpack.c.b16 %v1373, %v1371
    %v1402 = vpack.c.b16 %v1374, %v1372
    %v1403 = vpack.c.b16 %v1377, %v1375
    %v1404 = vpack.c.b16 %v1378, %v1376
    %v1405 = vpack.c.b16 %v1381, %v1379
    %v1406 = vpack.c.b16 %v1382, %v1380
    %v1407 = vpack.c.b16 %v1385, %v1383
    %v1408 = vpack.c.b16 %v1386, %v1384
    %v1409 = vpack.c.b16 %v1389, %v1387
    %v1410 = vpack.c.b16 %v1390, %v1388
    %v1411 = vpack.c.b16 %v1393, %v1391
    %v1412 = vpack.c.b16 %v1394, %v1392
    %v1413 = vpack.c.b16 %v1397, %v1395
    %v1414 = vpack.c.b16 %v1398, %v1396
    %1431 = vmatprep.subr.bf16.mxu0 %v1414
    %1432 = vmatpush1.bf16.msra.mxu0 %v1413
    %1433 = vmatprep.subr.bf16.mxu0 %v1412
    %1434 = vmatpush1.bf16.msra.mxu0 %v1411
    %1435 = vmatprep.subr.bf16.mxu0 %v1410
    %1436 = vmatpush1.bf16.msra.mxu0 %v1409
    %1437 = vmatprep.subr.bf16.mxu0 %v1408
    %1438 = vmatpush1.bf16.msra.mxu0 %v1407
    %1439 = vmatprep.subr.bf16.mxu0 %v1406
    %1440 = vmatpush1.bf16.msra.mxu0 %v1405
    %1441 = vmatprep.subr.bf16.mxu0 %v1404
    %1442 = vmatpush1.bf16.msra.mxu0 %v1403
    %1443 = vmatprep.subr.bf16.mxu0 %v1402
    %1444 = vmatpush1.bf16.msra.mxu0 %v1401
    %1445 = vmatprep.subr.bf16.mxu0 %v1400
    %1446 = vmatpush1.bf16.msra.mxu0 %v1399
    %1447 = vmatprep.subr.bf16.mxu0 0
    %1448 = vmatpush2.bf16.msra.mxu0 0
    %1449 = vmatprep.subr.bf16.mxu0 0
    %1450 = vmatpush2.bf16.msra.mxu0 0
    %1451 = vmatprep.subr.bf16.mxu0 0
    %1452 = vmatpush2.bf16.msra.mxu0 0
    %1453 = vmatprep.subr.bf16.mxu0 0
    %1454 = vmatpush2.bf16.msra.mxu0 0
    %1455 = vmatprep.subr.bf16.mxu0 0
    %1456 = vmatpush2.bf16.msra.mxu0 0
    %1457 = vmatprep.subr.bf16.mxu0 0
    %1458 = vmatpush2.bf16.msra.mxu0 0
    %1459 = vmatprep.subr.bf16.mxu0 0
    %1460 = vmatpush2.bf16.msra.mxu0 0
    %1461 = vmatprep.subr.bf16.mxu0 0
    %1462 = vmatpush2.bf16.msra.mxu0 0
    %1463 = vmatprep.mubr.bf16.mxu0 0
    %1464 = vmatmul.mubr.bf16.gmra.mxu0 %v1333
    %v1465 = vpop.f32.mrf.mxu0
    %v1466 = vadd.f32 0.0, %v1465
    %v1467 = vpop.f32.mrf.mxu0
    %v1468 = vadd.f32 0.0, %v1467
    %v1469 = vpop.f32.mrf.mxu0
    %v1470 = vpop.f32.mrf.mxu0
    %1471 = vdwg.mxu0
    %s1472 = scalar_lea.vmem %s6, 1
    %v1473 = vld [vmem:[%s1472] sm:$0x1]
    %v1475 = vlaneseq
    %v1476 = vshrl.u32 %v1475, 7
    %v1477 = vsub.s32 0, %v1476
    %v1478 = vrot.slane %v1473, %v1477
    %v1480 = vadd.f32 %v1466, %v1478
    %vm1481 = vcmp.gt.f32.partialorder %v1480, 20.0
    %v1482 = vmin.f32 %v1480, 20.0
    %v1483 = vmul.f32 %v1482, 1.442695
    %v1484 = vpow.pop %v1483
    %v1485 = vadd.f32 %v1484, 1.0
    %v1486 = vlog2.pop %v1485
    %v1487 = vmul.f32 %v1486, 0.6931472
    %v1488 = vmul.f32 -0.5, %v1484
    %v1489 = vadd.f32 %v1488, 1.0
    %v1490 = vmul.f32 %v1489, %v1484
    %v1491 = vand.u32 2147483647, %v1484
    %vm1492 = vcmp.lt.f32.partialorder %v1491, 0.0004427343
    %v1493 = vsel %vm1492, %v1490, %v1487
    %v1494 = vsel %vm1481, %v1480, %v1493
    %v1495 = vmul.f32 %v1494, %v1332
    %s1496 = scalar_lea.vmem %s7, 16
    %v1497 = vld [vmem:[%s1496] sm:$0xff]
    %v1498 = vld [vmem:[%s1496 + $0x8] sm:$0xff]
    %v1499 = vlaneseq
    %v1500 = vshrl.u32 %v1499, 7
    %v1501 = vsub.s32 0, %v1500
    %v1502 = vrot.slane %v1494, %v1501
    %v1503 = vmul.f32 %v1502, %v1497
    %v1504 = vmul.f32 %v1502, %v1498
    %v1505 = vmul.f32 %v1503, 1.442695
    %v1506 = vpow.pop %v1505
    %v1507 = vmul.f32 %v1504, 1.442695
    %v1508 = vpow.pop %v1507
    %v1509 = vlaneseq
    %v1510 = vshrl.u32 %v1509, 7
    %v1511 = vsub.s32 0, %v1510
    %v1512 = vrot.slane %v1468, %v1511
    %1514 = vbcast.lane.b32.xlu0 %v1512, 256
    %v1515 = vpop.permute.xlu0 %1514
    %s1517 = sor.u32 256, 8
    %1518 = vbcast.lane.b32.xlu0 %v1512, %s1517
    %v1519 = vpop.permute.xlu0 %1518
    %s1521 = sor.u32 256, 16
    %1522 = vbcast.lane.b32.xlu0 %v1512, %s1521
    %v1523 = vpop.permute.xlu0 %1522
    %s1525 = sor.u32 256, 24
    %1526 = vbcast.lane.b32.xlu0 %v1512, %s1525
    %v1527 = vpop.permute.xlu0 %1526
    %v1528 = vsel %vm50, %v1515, %v1523
    %v1529 = vsel %vm50, %v1519, %v1527
    %s1531 = sor.u32 256, 32
    %1532 = vbcast.lane.b32.xlu0 %v1512, %s1531
    %v1533 = vpop.permute.xlu0 %1532
    %s1535 = sor.u32 256, 40
    %1536 = vbcast.lane.b32.xlu0 %v1512, %s1535
    %v1537 = vpop.permute.xlu0 %1536
    %s1539 = sor.u32 256, 48
    %1540 = vbcast.lane.b32.xlu0 %v1512, %s1539
    %v1541 = vpop.permute.xlu0 %1540
    %s1543 = sor.u32 256, 56
    %1544 = vbcast.lane.b32.xlu0 %v1512, %s1543
    %v1545 = vpop.permute.xlu0 %1544
    %v1546 = vsel %vm50, %v1533, %v1541
    %v1547 = vsel %vm50, %v1537, %v1545
    %v1548 = vmul.f32 %v1506, 0.0
    %v1549 = vmul.f32 %v1508, 0.0
    %v1550 = vlaneseq
    %v1551 = vshrl.u32 %v1550, 7
    %v1552 = vsub.s32 0, %v1551
    %v1553 = vrot.slane %v1495, %v1552
    %v1554 = vmul.f32 %v1528, %v1553
    %v1555 = vmul.f32 %v1529, %v1553
    %v1556 = vadd.f32 %v1548, %v1554
    %v1557 = vadd.f32 %v1549, %v1555
    %v1558 = vmul.f32 %v1556, %v1546
    %v1559 = vmul.f32 %v1557, %v1547
    %v1560 = vadd.f32 %v1558, %v1559
    %v1561 = vrot.slane %v1560, 4
    %v1562 = vadd.f32 %v1560, %v1561
    %v1563 = vrot.slane %v1562, 2
    %v1564 = vadd.f32 %v1562, %v1563
    %v1565 = vrot.slane %v1564, 1
    %v1566 = vadd.f32 %v1564, %v1565
    %v1567 = vlaneseq
    %v1568 = vshrl.u32 %v1567, 7
    %v1569 = vsub.s32 1, %v1568
    %v1570 = vrot.slane %v1494, %v1569
    %v1571 = vmul.f32 %v1570, %v1497
    %v1572 = vmul.f32 %v1570, %v1498
    %v1573 = vmul.f32 %v1571, 1.442695
    %v1574 = vpow.pop %v1573
    %v1575 = vmul.f32 %v1572, 1.442695
    %v1576 = vpow.pop %v1575
    %v1577 = vlaneseq
    %v1578 = vshrl.u32 %v1577, 7
    %v1579 = vsub.s32 1, %v1578
    %v1580 = vrot.slane %v1468, %v1579
    %1582 = vbcast.lane.b32.xlu0 %v1580, 256
    %v1583 = vpop.permute.xlu0 %1582
    %s1585 = sor.u32 256, 8
    %1586 = vbcast.lane.b32.xlu0 %v1580, %s1585
    %v1587 = vpop.permute.xlu0 %1586
    %s1589 = sor.u32 256, 16
    %1590 = vbcast.lane.b32.xlu0 %v1580, %s1589
    %v1591 = vpop.permute.xlu0 %1590
    %s1593 = sor.u32 256, 24
    %1594 = vbcast.lane.b32.xlu0 %v1580, %s1593
    %v1595 = vpop.permute.xlu0 %1594
    %v1596 = vsel %vm50, %v1583, %v1591
    %v1597 = vsel %vm50, %v1587, %v1595
    %s1599 = sor.u32 256, 32
    %1600 = vbcast.lane.b32.xlu0 %v1580, %s1599
    %v1601 = vpop.permute.xlu0 %1600
    %s1603 = sor.u32 256, 40
    %1604 = vbcast.lane.b32.xlu0 %v1580, %s1603
    %v1605 = vpop.permute.xlu0 %1604
    %s1607 = sor.u32 256, 48
    %1608 = vbcast.lane.b32.xlu0 %v1580, %s1607
    %v1609 = vpop.permute.xlu0 %1608
    %s1611 = sor.u32 256, 56
    %1612 = vbcast.lane.b32.xlu0 %v1580, %s1611
    %v1613 = vpop.permute.xlu0 %1612
    %v1614 = vsel %vm50, %v1601, %v1609
    %v1615 = vsel %vm50, %v1605, %v1613
    %v1616 = vmul.f32 %v1574, %v1556
    %v1617 = vmul.f32 %v1576, %v1557
    %v1618 = vlaneseq
    %v1619 = vshrl.u32 %v1618, 7
    %v1620 = vsub.s32 1, %v1619
    %v1621 = vrot.slane %v1495, %v1620
    %v1622 = vmul.f32 %v1596, %v1621
    %v1623 = vmul.f32 %v1597, %v1621
    %v1624 = vadd.f32 %v1616, %v1622
    %v1625 = vadd.f32 %v1617, %v1623
    %v1626 = vmul.f32 %v1624, %v1614
    %v1627 = vmul.f32 %v1625, %v1615
    %v1628 = vadd.f32 %v1626, %v1627
    %v1629 = vrot.slane %v1628, 4
    %v1630 = vadd.f32 %v1628, %v1629
    %v1631 = vrot.slane %v1630, 2
    %v1632 = vadd.f32 %v1630, %v1631
    %v1633 = vrot.slane %v1632, 1
    %v1634 = vadd.f32 %v1632, %v1633
    %v1635 = vlaneseq
    %v1636 = vshrl.u32 %v1635, 7
    %v1637 = vsub.s32 2, %v1636
    %v1638 = vrot.slane %v1494, %v1637
    %v1639 = vmul.f32 %v1638, %v1497
    %v1640 = vmul.f32 %v1638, %v1498
    %v1641 = vmul.f32 %v1639, 1.442695
    %v1642 = vpow.pop %v1641
    %v1643 = vmul.f32 %v1640, 1.442695
    %v1644 = vpow.pop %v1643
    %v1645 = vlaneseq
    %v1646 = vshrl.u32 %v1645, 7
    %v1647 = vsub.s32 2, %v1646
    %v1648 = vrot.slane %v1468, %v1647
    %1650 = vbcast.lane.b32.xlu0 %v1648, 256
    %v1651 = vpop.permute.xlu0 %1650
    %s1653 = sor.u32 256, 8
    %1654 = vbcast.lane.b32.xlu0 %v1648, %s1653
    %v1655 = vpop.permute.xlu0 %1654
    %s1657 = sor.u32 256, 16
    %1658 = vbcast.lane.b32.xlu0 %v1648, %s1657
    %v1659 = vpop.permute.xlu0 %1658
    %s1661 = sor.u32 256, 24
    %1662 = vbcast.lane.b32.xlu0 %v1648, %s1661
    %v1663 = vpop.permute.xlu0 %1662
    %v1664 = vsel %vm50, %v1651, %v1659
    %v1665 = vsel %vm50, %v1655, %v1663
    %s1667 = sor.u32 256, 32
    %1668 = vbcast.lane.b32.xlu0 %v1648, %s1667
    %v1669 = vpop.permute.xlu0 %1668
    %s1671 = sor.u32 256, 40
    %1672 = vbcast.lane.b32.xlu0 %v1648, %s1671
    %v1673 = vpop.permute.xlu0 %1672
    %s1675 = sor.u32 256, 48
    %1676 = vbcast.lane.b32.xlu0 %v1648, %s1675
    %v1677 = vpop.permute.xlu0 %1676
    %s1679 = sor.u32 256, 56
    %1680 = vbcast.lane.b32.xlu0 %v1648, %s1679
    %v1681 = vpop.permute.xlu0 %1680
    %v1682 = vsel %vm50, %v1669, %v1677
    %v1683 = vsel %vm50, %v1673, %v1681
    %v1684 = vmul.f32 %v1642, %v1624
    %v1685 = vmul.f32 %v1644, %v1625
    %v1686 = vlaneseq
    %v1687 = vshrl.u32 %v1686, 7
    %v1688 = vsub.s32 2, %v1687
    %v1689 = vrot.slane %v1495, %v1688
    %v1690 = vmul.f32 %v1664, %v1689
    %v1691 = vmul.f32 %v1665, %v1689
    %v1692 = vadd.f32 %v1684, %v1690
    %v1693 = vadd.f32 %v1685, %v1691
    %v1694 = vmul.f32 %v1692, %v1682
    %v1695 = vmul.f32 %v1693, %v1683
    %v1696 = vadd.f32 %v1694, %v1695
    %v1697 = vrot.slane %v1696, 4
    %v1698 = vadd.f32 %v1696, %v1697
    %v1699 = vrot.slane %v1698, 2
    %v1700 = vadd.f32 %v1698, %v1699
    %v1701 = vrot.slane %v1700, 1
    %v1702 = vadd.f32 %v1700, %v1701
    %v1703 = vlaneseq
    %v1704 = vshrl.u32 %v1703, 7
    %v1705 = vsub.s32 3, %v1704
    %v1706 = vrot.slane %v1494, %v1705
    %v1707 = vmul.f32 %v1706, %v1497
    %v1708 = vmul.f32 %v1706, %v1498
    %v1709 = vmul.f32 %v1707, 1.442695
    %v1710 = vpow.pop %v1709
    %v1711 = vmul.f32 %v1708, 1.442695
    %v1712 = vpow.pop %v1711
    %v1713 = vlaneseq
    %v1714 = vshrl.u32 %v1713, 7
    %v1715 = vsub.s32 3, %v1714
    %v1716 = vrot.slane %v1468, %v1715
    %1718 = vbcast.lane.b32.xlu0 %v1716, 256
    %v1719 = vpop.permute.xlu0 %1718
    %s1721 = sor.u32 256, 8
    %1722 = vbcast.lane.b32.xlu0 %v1716, %s1721
    %v1723 = vpop.permute.xlu0 %1722
    %s1725 = sor.u32 256, 16
    %1726 = vbcast.lane.b32.xlu0 %v1716, %s1725
    %v1727 = vpop.permute.xlu0 %1726
    %s1729 = sor.u32 256, 24
    %1730 = vbcast.lane.b32.xlu0 %v1716, %s1729
    %v1731 = vpop.permute.xlu0 %1730
    %v1732 = vsel %vm50, %v1719, %v1727
    %v1733 = vsel %vm50, %v1723, %v1731
    %s1735 = sor.u32 256, 32
    %1736 = vbcast.lane.b32.xlu0 %v1716, %s1735
    %v1737 = vpop.permute.xlu0 %1736
    %s1739 = sor.u32 256, 40
    %1740 = vbcast.lane.b32.xlu0 %v1716, %s1739
    %v1741 = vpop.permute.xlu0 %1740
    %s1743 = sor.u32 256, 48
    %1744 = vbcast.lane.b32.xlu0 %v1716, %s1743
    %v1745 = vpop.permute.xlu0 %1744
    %s1747 = sor.u32 256, 56
    %1748 = vbcast.lane.b32.xlu0 %v1716, %s1747
    %v1749 = vpop.permute.xlu0 %1748
    %v1750 = vsel %vm50, %v1737, %v1745
    %v1751 = vsel %vm50, %v1741, %v1749
    %v1752 = vmul.f32 %v1710, %v1692
    %v1753 = vmul.f32 %v1712, %v1693
    %v1754 = vlaneseq
    %v1755 = vshrl.u32 %v1754, 7
    %v1756 = vsub.s32 3, %v1755
    %v1757 = vrot.slane %v1495, %v1756
    %v1758 = vmul.f32 %v1732, %v1757
    %v1759 = vmul.f32 %v1733, %v1757
    %v1760 = vadd.f32 %v1752, %v1758
    %v1761 = vadd.f32 %v1753, %v1759
    %v1762 = vmul.f32 %v1760, %v1750
    %v1763 = vmul.f32 %v1761, %v1751
    %v1764 = vadd.f32 %v1762, %v1763
    %v1765 = vrot.slane %v1764, 4
    %v1766 = vadd.f32 %v1764, %v1765
    %v1767 = vrot.slane %v1766, 2
    %v1768 = vadd.f32 %v1766, %v1767
    %v1769 = vrot.slane %v1768, 1
    %v1770 = vadd.f32 %v1768, %v1769
    %v1771 = vlaneseq
    %v1772 = vshrl.u32 %v1771, 7
    %v1773 = vsub.s32 4, %v1772
    %v1774 = vrot.slane %v1494, %v1773
    %v1775 = vmul.f32 %v1774, %v1497
    %v1776 = vmul.f32 %v1774, %v1498
    %v1777 = vmul.f32 %v1775, 1.442695
    %v1778 = vpow.pop %v1777
    %v1779 = vmul.f32 %v1776, 1.442695
    %v1780 = vpow.pop %v1779
    %v1781 = vlaneseq
    %v1782 = vshrl.u32 %v1781, 7
    %v1783 = vsub.s32 4, %v1782
    %v1784 = vrot.slane %v1468, %v1783
    %1786 = vbcast.lane.b32.xlu0 %v1784, 256
    %v1787 = vpop.permute.xlu0 %1786
    %s1789 = sor.u32 256, 8
    %1790 = vbcast.lane.b32.xlu0 %v1784, %s1789
    %v1791 = vpop.permute.xlu0 %1790
    %s1793 = sor.u32 256, 16
    %1794 = vbcast.lane.b32.xlu0 %v1784, %s1793
    %v1795 = vpop.permute.xlu0 %1794
    %s1797 = sor.u32 256, 24
    %1798 = vbcast.lane.b32.xlu0 %v1784, %s1797
    %v1799 = vpop.permute.xlu0 %1798
    %v1800 = vsel %vm50, %v1787, %v1795
    %v1801 = vsel %vm50, %v1791, %v1799
    %s1803 = sor.u32 256, 32
    %1804 = vbcast.lane.b32.xlu0 %v1784, %s1803
    %v1805 = vpop.permute.xlu0 %1804
    %s1807 = sor.u32 256, 40
    %1808 = vbcast.lane.b32.xlu0 %v1784, %s1807
    %v1809 = vpop.permute.xlu0 %1808
    %s1811 = sor.u32 256, 48
    %1812 = vbcast.lane.b32.xlu0 %v1784, %s1811
    %v1813 = vpop.permute.xlu0 %1812
    %s1815 = sor.u32 256, 56
    %1816 = vbcast.lane.b32.xlu0 %v1784, %s1815
    %v1817 = vpop.permute.xlu0 %1816
    %v1818 = vsel %vm50, %v1805, %v1813
    %v1819 = vsel %vm50, %v1809, %v1817
    %v1820 = vmul.f32 %v1778, %v1760
    %v1821 = vmul.f32 %v1780, %v1761
    %v1822 = vlaneseq
    %v1823 = vshrl.u32 %v1822, 7
    %v1824 = vsub.s32 4, %v1823
    %v1825 = vrot.slane %v1495, %v1824
    %v1826 = vmul.f32 %v1800, %v1825
    %v1827 = vmul.f32 %v1801, %v1825
    %v1828 = vadd.f32 %v1820, %v1826
    %v1829 = vadd.f32 %v1821, %v1827
    %v1830 = vmul.f32 %v1828, %v1818
    %v1831 = vmul.f32 %v1829, %v1819
    %v1832 = vadd.f32 %v1830, %v1831
    %v1833 = vrot.slane %v1832, 4
    %v1834 = vadd.f32 %v1832, %v1833
    %v1835 = vrot.slane %v1834, 2
    %v1836 = vadd.f32 %v1834, %v1835
    %v1837 = vrot.slane %v1836, 1
    %v1838 = vadd.f32 %v1836, %v1837
    %v1839 = vlaneseq
    %v1840 = vshrl.u32 %v1839, 7
    %v1841 = vsub.s32 5, %v1840
    %v1842 = vrot.slane %v1494, %v1841
    %v1843 = vmul.f32 %v1842, %v1497
    %v1844 = vmul.f32 %v1842, %v1498
    %v1845 = vmul.f32 %v1843, 1.442695
    %v1846 = vpow.pop %v1845
    %v1847 = vmul.f32 %v1844, 1.442695
    %v1848 = vpow.pop %v1847
    %v1849 = vlaneseq
    %v1850 = vshrl.u32 %v1849, 7
    %v1851 = vsub.s32 5, %v1850
    %v1852 = vrot.slane %v1468, %v1851
    %1854 = vbcast.lane.b32.xlu0 %v1852, 256
    %v1855 = vpop.permute.xlu0 %1854
    %s1857 = sor.u32 256, 8
    %1858 = vbcast.lane.b32.xlu0 %v1852, %s1857
    %v1859 = vpop.permute.xlu0 %1858
    %s1861 = sor.u32 256, 16
    %1862 = vbcast.lane.b32.xlu0 %v1852, %s1861
    %v1863 = vpop.permute.xlu0 %1862
    %s1865 = sor.u32 256, 24
    %1866 = vbcast.lane.b32.xlu0 %v1852, %s1865
    %v1867 = vpop.permute.xlu0 %1866
    %v1868 = vsel %vm50, %v1855, %v1863
    %v1869 = vsel %vm50, %v1859, %v1867
    %s1871 = sor.u32 256, 32
    %1872 = vbcast.lane.b32.xlu0 %v1852, %s1871
    %v1873 = vpop.permute.xlu0 %1872
    %s1875 = sor.u32 256, 40
    %1876 = vbcast.lane.b32.xlu0 %v1852, %s1875
    %v1877 = vpop.permute.xlu0 %1876
    %s1879 = sor.u32 256, 48
    %1880 = vbcast.lane.b32.xlu0 %v1852, %s1879
    %v1881 = vpop.permute.xlu0 %1880
    %s1883 = sor.u32 256, 56
    %1884 = vbcast.lane.b32.xlu0 %v1852, %s1883
    %v1885 = vpop.permute.xlu0 %1884
    %v1886 = vsel %vm50, %v1873, %v1881
    %v1887 = vsel %vm50, %v1877, %v1885
    %v1888 = vmul.f32 %v1846, %v1828
    %v1889 = vmul.f32 %v1848, %v1829
    %v1890 = vlaneseq
    %v1891 = vshrl.u32 %v1890, 7
    %v1892 = vsub.s32 5, %v1891
    %v1893 = vrot.slane %v1495, %v1892
    %v1894 = vmul.f32 %v1868, %v1893
    %v1895 = vmul.f32 %v1869, %v1893
    %v1896 = vadd.f32 %v1888, %v1894
    %v1897 = vadd.f32 %v1889, %v1895
    %v1898 = vmul.f32 %v1896, %v1886
    %v1899 = vmul.f32 %v1897, %v1887
    %v1900 = vadd.f32 %v1898, %v1899
    %v1901 = vrot.slane %v1900, 4
    %v1902 = vadd.f32 %v1900, %v1901
    %v1903 = vrot.slane %v1902, 2
    %v1904 = vadd.f32 %v1902, %v1903
    %v1905 = vrot.slane %v1904, 1
    %v1906 = vadd.f32 %v1904, %v1905
    %v1907 = vlaneseq
    %v1908 = vshrl.u32 %v1907, 7
    %v1909 = vsub.s32 6, %v1908
    %v1910 = vrot.slane %v1494, %v1909
    %v1911 = vmul.f32 %v1910, %v1497
    %v1912 = vmul.f32 %v1910, %v1498
    %v1913 = vmul.f32 %v1911, 1.442695
    %v1914 = vpow.pop %v1913
    %v1915 = vmul.f32 %v1912, 1.442695
    %v1916 = vpow.pop %v1915
    %v1917 = vlaneseq
    %v1918 = vshrl.u32 %v1917, 7
    %v1919 = vsub.s32 6, %v1918
    %v1920 = vrot.slane %v1468, %v1919
    %1922 = vbcast.lane.b32.xlu0 %v1920, 256
    %v1923 = vpop.permute.xlu0 %1922
    %s1925 = sor.u32 256, 8
    %1926 = vbcast.lane.b32.xlu0 %v1920, %s1925
    %v1927 = vpop.permute.xlu0 %1926
    %s1929 = sor.u32 256, 16
    %1930 = vbcast.lane.b32.xlu0 %v1920, %s1929
    %v1931 = vpop.permute.xlu0 %1930
    %s1933 = sor.u32 256, 24
    %1934 = vbcast.lane.b32.xlu0 %v1920, %s1933
    %v1935 = vpop.permute.xlu0 %1934
    %v1936 = vsel %vm50, %v1923, %v1931
    %v1937 = vsel %vm50, %v1927, %v1935
    %s1939 = sor.u32 256, 32
    %1940 = vbcast.lane.b32.xlu0 %v1920, %s1939
    %v1941 = vpop.permute.xlu0 %1940
    %s1943 = sor.u32 256, 40
    %1944 = vbcast.lane.b32.xlu0 %v1920, %s1943
    %v1945 = vpop.permute.xlu0 %1944
    %s1947 = sor.u32 256, 48
    %1948 = vbcast.lane.b32.xlu0 %v1920, %s1947
    %v1949 = vpop.permute.xlu0 %1948
    %s1951 = sor.u32 256, 56
    %1952 = vbcast.lane.b32.xlu0 %v1920, %s1951
    %v1953 = vpop.permute.xlu0 %1952
    %v1954 = vsel %vm50, %v1941, %v1949
    %v1955 = vsel %vm50, %v1945, %v1953
    %v1956 = vmul.f32 %v1914, %v1896
    %v1957 = vmul.f32 %v1916, %v1897
    %v1958 = vlaneseq
    %v1959 = vshrl.u32 %v1958, 7
    %v1960 = vsub.s32 6, %v1959
    %v1961 = vrot.slane %v1495, %v1960
    %v1962 = vmul.f32 %v1936, %v1961
    %v1963 = vmul.f32 %v1937, %v1961
    %v1964 = vadd.f32 %v1956, %v1962
    %v1965 = vadd.f32 %v1957, %v1963
    %v1966 = vmul.f32 %v1964, %v1954
    %v1967 = vmul.f32 %v1965, %v1955
    %v1968 = vadd.f32 %v1966, %v1967
    %v1969 = vrot.slane %v1968, 4
    %v1970 = vadd.f32 %v1968, %v1969
    %v1971 = vrot.slane %v1970, 2
    %v1972 = vadd.f32 %v1970, %v1971
    %v1973 = vrot.slane %v1972, 1
    %v1974 = vadd.f32 %v1972, %v1973
    %v1975 = vlaneseq
    %v1976 = vshrl.u32 %v1975, 7
    %v1977 = vsub.s32 7, %v1976
    %v1978 = vrot.slane %v1494, %v1977
    %v1979 = vmul.f32 %v1978, %v1497
    %v1980 = vmul.f32 %v1978, %v1498
    %v1981 = vmul.f32 %v1979, 1.442695
    %v1982 = vpow.pop %v1981
    %v1983 = vmul.f32 %v1980, 1.442695
    %v1984 = vpow.pop %v1983
    %v1985 = vlaneseq
    %v1986 = vshrl.u32 %v1985, 7
    %v1987 = vsub.s32 7, %v1986
    %v1988 = vrot.slane %v1468, %v1987
    %1990 = vbcast.lane.b32.xlu0 %v1988, 256
    %v1991 = vpop.permute.xlu0 %1990
    %s1993 = sor.u32 256, 8
    %1994 = vbcast.lane.b32.xlu0 %v1988, %s1993
    %v1995 = vpop.permute.xlu0 %1994
    %s1997 = sor.u32 256, 16
    %1998 = vbcast.lane.b32.xlu0 %v1988, %s1997
    %v1999 = vpop.permute.xlu0 %1998
    %s2001 = sor.u32 256, 24
    %2002 = vbcast.lane.b32.xlu0 %v1988, %s2001
    %v2003 = vpop.permute.xlu0 %2002
    %v2004 = vsel %vm50, %v1991, %v1999
    %v2005 = vsel %vm50, %v1995, %v2003
    %s2007 = sor.u32 256, 32
    %2008 = vbcast.lane.b32.xlu0 %v1988, %s2007
    %v2009 = vpop.permute.xlu0 %2008
    %s2011 = sor.u32 256, 40
    %2012 = vbcast.lane.b32.xlu0 %v1988, %s2011
    %v2013 = vpop.permute.xlu0 %2012
    %s2015 = sor.u32 256, 48
    %2016 = vbcast.lane.b32.xlu0 %v1988, %s2015
    %v2017 = vpop.permute.xlu0 %2016
    %s2019 = sor.u32 256, 56
    %2020 = vbcast.lane.b32.xlu0 %v1988, %s2019
    %v2021 = vpop.permute.xlu0 %2020
    %v2022 = vsel %vm50, %v2009, %v2017
    %v2023 = vsel %vm50, %v2013, %v2021
    %v2024 = vmul.f32 %v1982, %v1964
    %v2025 = vmul.f32 %v1984, %v1965
    %v2026 = vlaneseq
    %v2027 = vshrl.u32 %v2026, 7
    %v2028 = vsub.s32 7, %v2027
    %v2029 = vrot.slane %v1495, %v2028
    %v2030 = vmul.f32 %v2004, %v2029
    %v2031 = vmul.f32 %v2005, %v2029
    %v2032 = vadd.f32 %v2024, %v2030
    %v2033 = vadd.f32 %v2025, %v2031
    %v2034 = vmul.f32 %v2032, %v2022
    %v2035 = vmul.f32 %v2033, %v2023
    %v2036 = vadd.f32 %v2034, %v2035
    %v2037 = vrot.slane %v2036, 4
    %v2038 = vadd.f32 %v2036, %v2037
    %v2039 = vrot.slane %v2038, 2
    %v2040 = vadd.f32 %v2038, %v2039
    %v2041 = vrot.slane %v2040, 1
    %v2042 = vadd.f32 %v2040, %v2041
    %v2043 = vsel %vm250, %v1566, %v1634
    %v2044 = vsel %vm240, %v2043, %v1702
    %v2045 = vsel %vm230, %v2044, %v1770
    %v2046 = vsel %vm981, %v2045, %v1838
    %v2047 = vsel %vm983, %v2046, %v1906
    %v2048 = vsel %vm985, %v2047, %v1974
    %v2049 = vsel %vm987, %v2048, %v2042
    %s2050 = scalar_lea.vmem %s8, 1
    %v2051 = vld [vmem:[%s2050] sm:$0x1]
    %v2053 = vlaneseq
    %v2054 = vshrl.u32 %v2053, 7
    %v2055 = vsub.s32 0, %v2054
    %v2056 = vrot.slane %v2051, %v2055
    %v2058 = vmul.f32 %v1332, %v2056
    %v2059 = vadd.f32 %v2049, %v2058
    %v2060 = vxor.u32 %v1278, 2147483648
    %v2061 = vmul.f32 %v2060, 1.442695
    %v2062 = vpow.pop %v2061
    %v2063 = vadd.f32 %v2062, 1.0
    %v2064 = vrcp.pop %v2063
    %v2065 = vmul.f32 1.0, %v2064
    %v2066 = vmul.f32 %v1278, %v2065
    %v2067 = vmul.f32 %v2059, %v2066
    %v2068 = vpack.c.bf16 %v2067, %v2067
    %s2069 = scalar_lea.vmem %s9, 64
    %v2070 = vld [vmem:[%s2069] sm:$0xf]
    %v2071 = vld [vmem:[%s2069 + $0x4] sm:$0xf]
    %v2072 = vld [vmem:[%s2069 + $0x8] sm:$0xf]
    %v2073 = vld [vmem:[%s2069 + $0xc] sm:$0xf]
    %v2074 = vld [vmem:[%s2069 + $0x10] sm:$0xf]
    %v2075 = vld [vmem:[%s2069 + $0x14] sm:$0xf]
    %v2076 = vld [vmem:[%s2069 + $0x18] sm:$0xf]
    %v2077 = vld [vmem:[%s2069 + $0x1c] sm:$0xf]
    %v2078 = vld [vmem:[%s2069 + $0x20] sm:$0xf]
    %v2079 = vld [vmem:[%s2069 + $0x24] sm:$0xf]
    %v2080 = vld [vmem:[%s2069 + $0x28] sm:$0xf]
    %v2081 = vld [vmem:[%s2069 + $0x2c] sm:$0xf]
    %v2082 = vld [vmem:[%s2069 + $0x30] sm:$0xf]
    %v2083 = vld [vmem:[%s2069 + $0x34] sm:$0xf]
    %v2084 = vld [vmem:[%s2069 + $0x38] sm:$0xf]
    %v2085 = vld [vmem:[%s2069 + $0x3c] sm:$0xf]
    %v2102 = vunpack.c.l.b16 %v2070
    %v2103 = vunpack.c.l.b16 %v2071
    %v2104 = vunpack.c.l.b16 %v2072
    %v2105 = vunpack.c.l.b16 %v2073
    %v2106 = vunpack.c.l.b16 %v2074
    %v2107 = vunpack.c.l.b16 %v2075
    %v2108 = vunpack.c.l.b16 %v2076
    %v2109 = vunpack.c.l.b16 %v2077
    %v2110 = vunpack.c.l.b16 %v2078
    %v2111 = vunpack.c.l.b16 %v2079
    %v2112 = vunpack.c.l.b16 %v2080
    %v2113 = vunpack.c.l.b16 %v2081
    %v2114 = vunpack.c.l.b16 %v2082
    %v2115 = vunpack.c.l.b16 %v2083
    %v2116 = vunpack.c.l.b16 %v2084
    %v2117 = vunpack.c.l.b16 %v2085
    %v2118 = vpack.c.b16 %v2103, %v2102
    %v2119 = vpack.c.b16 %v2105, %v2104
    %v2120 = vpack.c.b16 %v2107, %v2106
    %v2121 = vpack.c.b16 %v2109, %v2108
    %v2122 = vpack.c.b16 %v2111, %v2110
    %v2123 = vpack.c.b16 %v2113, %v2112
    %v2124 = vpack.c.b16 %v2115, %v2114
    %v2125 = vpack.c.b16 %v2117, %v2116
    %2134 = vmatprep.subr.bf16.mxu0 0
    %2135 = vmatpush1.bf16.msra.mxu0 %v2125
    %2136 = vmatprep.subr.bf16.mxu0 0
    %2137 = vmatpush1.bf16.msra.mxu0 %v2124
    %2138 = vmatprep.subr.bf16.mxu0 0
    %2139 = vmatpush1.bf16.msra.mxu0 %v2123
    %2140 = vmatprep.subr.bf16.mxu0 0
    %2141 = vmatpush1.bf16.msra.mxu0 %v2122
    %2142 = vmatprep.subr.bf16.mxu0 0
    %2143 = vmatpush1.bf16.msra.mxu0 %v2121
    %2144 = vmatprep.subr.bf16.mxu0 0
    %2145 = vmatpush1.bf16.msra.mxu0 %v2120
    %2146 = vmatprep.subr.bf16.mxu0 0
    %2147 = vmatpush1.bf16.msra.mxu0 %v2119
    %2148 = vmatprep.subr.bf16.mxu0 0
    %2149 = vmatpush1.bf16.msra.mxu0 %v2118
    %2150 = vmatprep.subr.bf16.mxu0 0
    %2151 = vmatpush2.bf16.msra.mxu0 0
    %2152 = vmatprep.subr.bf16.mxu0 0
    %2153 = vmatpush2.bf16.msra.mxu0 0
    %2154 = vmatprep.subr.bf16.mxu0 0
    %2155 = vmatpush2.bf16.msra.mxu0 0
    %2156 = vmatprep.subr.bf16.mxu0 0
    %2157 = vmatpush2.bf16.msra.mxu0 0
    %2158 = vmatprep.subr.bf16.mxu0 0
    %2159 = vmatpush2.bf16.msra.mxu0 0
    %2160 = vmatprep.subr.bf16.mxu0 0
    %2161 = vmatpush2.bf16.msra.mxu0 0
    %2162 = vmatprep.subr.bf16.mxu0 0
    %2163 = vmatpush2.bf16.msra.mxu0 0
    %2164 = vmatprep.subr.bf16.mxu0 0
    %2165 = vmatpush2.bf16.msra.mxu0 0
    %2166 = vmatprep.mubr.bf16.mxu0 0
    %2167 = vmatmul.mubr.bf16.gmra.mxu0 %v2068
    %v2168 = vpop.f32.mrf.mxu0
    %v2169 = vadd.f32 0.0, %v2168
    %v2170 = vpop.f32.mrf.mxu0
    %v2171 = vpop.f32.mrf.mxu0
    %v2172 = vpop.f32.mrf.mxu0
    %2173 = vdwg.mxu0
    %v2174 = vadd.f32 %v1111, %v2169
    %v2175 = vmul.f32 %v2174, %v2174
    %v2177 = vsel %vm50, %v2175, 0
    %2179 = vmatprep.subr.mxu0 0.0
    %2180 = vmatpush1.msra.mxu0 0.0
    %2181 = vmatprep.subr.mxu0 0.0
    %2182 = vmatpush1.msra.mxu0 0.0
    %2183 = vmatprep.subr.mxu0 0.0
    %2184 = vmatpush1.msra.mxu0 0.0
    %2185 = vmatprep.subr.mxu0 0.0
    %2186 = vmatpush1.msra.mxu0 0.0
    %2187 = vmatprep.subr.mxu0 0.0
    %2188 = vmatpush1.msra.mxu0 0.0
    %2189 = vmatprep.subr.mxu0 0.0
    %2190 = vmatpush1.msra.mxu0 0.0
    %2191 = vmatprep.subr.mxu0 0.0
    %2192 = vmatpush1.msra.mxu0 0.0
    %2193 = vmatprep.subr.mxu0 0.0
    %2194 = vmatpush1.msra.mxu0 0.0
    %2195 = vmatprep.subr.mxu0 0.0
    %2196 = vmatpush1.msra.mxu0 %v47
    %2197 = vmatprep.subr.mxu0 0.0
    %2198 = vmatpush1.msra.mxu0 %v46
    %2199 = vmatprep.subr.mxu0 0.0
    %2200 = vmatpush1.msra.mxu0 %v45
    %2201 = vmatprep.subr.mxu0 0.0
    %2202 = vmatpush1.msra.mxu0 %v44
    %2203 = vmatprep.subr.mxu0 0.0
    %2204 = vmatpush1.msra.mxu0 %v43
    %2205 = vmatprep.subr.mxu0 0.0
    %2206 = vmatpush1.msra.mxu0 %v42
    %2207 = vmatprep.subr.mxu0 0.0
    %2208 = vmatpush1.msra.mxu0 %v41
    %2209 = vmatprep.subr.mxu0 0.0
    %2210 = vmatpush1.msra.mxu0 %v40
    %2211 = vmatprep.subr.mxu0 0.0
    %2212 = vmatpush2.msra.mxu0 0.0
    %2213 = vmatprep.subr.mxu0 0.0
    %2214 = vmatpush2.msra.mxu0 0.0
    %2215 = vmatprep.subr.mxu0 0.0
    %2216 = vmatpush2.msra.mxu0 0.0
    %2217 = vmatprep.subr.mxu0 0.0
    %2218 = vmatpush2.msra.mxu0 0.0
    %2219 = vmatprep.subr.mxu0 0.0
    %2220 = vmatpush2.msra.mxu0 0.0
    %2221 = vmatprep.subr.mxu0 0.0
    %2222 = vmatpush2.msra.mxu0 0.0
    %2223 = vmatprep.subr.mxu0 0.0
    %2224 = vmatpush2.msra.mxu0 0.0
    %2225 = vmatprep.subr.mxu0 0.0
    %2226 = vmatpush2.msra.mxu0 0.0
    %2227 = vmatprep.subr.mxu0 0.0
    %2228 = vmatpush2.msra.mxu0 0.0
    %2229 = vmatprep.subr.mxu0 0.0
    %2230 = vmatpush2.msra.mxu0 0.0
    %2231 = vmatprep.subr.mxu0 0.0
    %2232 = vmatpush2.msra.mxu0 0.0
    %2233 = vmatprep.subr.mxu0 0.0
    %2234 = vmatpush2.msra.mxu0 0.0
    %2235 = vmatprep.subr.mxu0 0.0
    %2236 = vmatpush2.msra.mxu0 0.0
    %2237 = vmatprep.subr.mxu0 0.0
    %2238 = vmatpush2.msra.mxu0 0.0
    %2239 = vmatprep.subr.mxu0 0.0
    %2240 = vmatpush2.msra.mxu0 0.0
    %2241 = vmatprep.subr.mxu0 0.0
    %2242 = vmatpush2.msra.mxu0 0.0
    %2243 = vmatprep.mubr.f32.mxu0 0.0
    %2244 = vmatmul.mubr.f32.gmra.mxu0 %v2177
    %v2245 = vpop.f32.mrf.mxu0
    %v2246 = vadd.f32 1e-05, %v2245
    %v2247 = vpop.f32.mrf.mxu0
    %2248 = vdwg.mxu0
    %v2249 = vrsqrt.pop %v2246
    %v2250 = vmul.f32 %v2174, %v2249
    %v2251 = vpack.c.bf16 %v2250, %v2250
    %v2252 = vld [vmem:[%s10] sm:$0xff]
    %v2253 = vld [vmem:[%s10 + $0x8] sm:$0xff]
    %v2254 = vld [vmem:[%s10 + $0x10] sm:$0xff]
    %v2255 = vld [vmem:[%s10 + $0x18] sm:$0xff]
    %v2256 = vld [vmem:[%s10 + $0x20] sm:$0xff]
    %v2257 = vld [vmem:[%s10 + $0x28] sm:$0xff]
    %v2258 = vld [vmem:[%s10 + $0x30] sm:$0xff]
    %v2259 = vld [vmem:[%s10 + $0x38] sm:$0xff]
    %v2268 = vunpack.c.l.b16 %v2252
    %v2269 = vunpack.c.h.b16 %v2252
    %v2270 = vunpack.c.l.b16 %v2253
    %v2271 = vunpack.c.h.b16 %v2253
    %v2272 = vunpack.c.l.b16 %v2254
    %v2273 = vunpack.c.h.b16 %v2254
    %v2274 = vunpack.c.l.b16 %v2255
    %v2275 = vunpack.c.h.b16 %v2255
    %v2276 = vunpack.c.l.b16 %v2256
    %v2277 = vunpack.c.h.b16 %v2256
    %v2278 = vunpack.c.l.b16 %v2257
    %v2279 = vunpack.c.h.b16 %v2257
    %v2280 = vunpack.c.l.b16 %v2258
    %v2281 = vunpack.c.h.b16 %v2258
    %v2282 = vunpack.c.l.b16 %v2259
    %v2283 = vunpack.c.h.b16 %v2259
    %v2284 = vpack.c.b16 %v2270, %v2268
    %v2285 = vpack.c.b16 %v2271, %v2269
    %v2286 = vpack.c.b16 %v2274, %v2272
    %v2287 = vpack.c.b16 %v2275, %v2273
    %v2288 = vpack.c.b16 %v2278, %v2276
    %v2289 = vpack.c.b16 %v2279, %v2277
    %v2290 = vpack.c.b16 %v2282, %v2280
    %v2291 = vpack.c.b16 %v2283, %v2281
    %v2301 = vsel %vm50, %v2251, 0
    %2303 = vmatprep.subr.bf16.mxu0 0
    %2304 = vmatpush1.bf16.msra.mxu0 0
    %2305 = vmatprep.subr.bf16.mxu0 0
    %2306 = vmatpush1.bf16.msra.mxu0 0
    %2307 = vmatprep.subr.bf16.mxu0 0
    %2308 = vmatpush1.bf16.msra.mxu0 0
    %2309 = vmatprep.subr.bf16.mxu0 0
    %2310 = vmatpush1.bf16.msra.mxu0 0
    %2311 = vmatprep.subr.bf16.mxu0 %v2291
    %2312 = vmatpush1.bf16.msra.mxu0 %v2290
    %2313 = vmatprep.subr.bf16.mxu0 %v2289
    %2314 = vmatpush1.bf16.msra.mxu0 %v2288
    %2315 = vmatprep.subr.bf16.mxu0 %v2287
    %2316 = vmatpush1.bf16.msra.mxu0 %v2286
    %2317 = vmatprep.subr.bf16.mxu0 %v2285
    %2318 = vmatpush1.bf16.msra.mxu0 %v2284
    %2319 = vmatprep.subr.bf16.mxu0 0
    %2320 = vmatpush2.bf16.msra.mxu0 0
    %2321 = vmatprep.subr.bf16.mxu0 0
    %2322 = vmatpush2.bf16.msra.mxu0 0
    %2323 = vmatprep.subr.bf16.mxu0 0
    %2324 = vmatpush2.bf16.msra.mxu0 0
    %2325 = vmatprep.subr.bf16.mxu0 0
    %2326 = vmatpush2.bf16.msra.mxu0 0
    %2327 = vmatprep.subr.bf16.mxu0 0
    %2328 = vmatpush2.bf16.msra.mxu0 0
    %2329 = vmatprep.subr.bf16.mxu0 0
    %2330 = vmatpush2.bf16.msra.mxu0 0
    %2331 = vmatprep.subr.bf16.mxu0 0
    %2332 = vmatpush2.bf16.msra.mxu0 0
    %2333 = vmatprep.subr.bf16.mxu0 0
    %2334 = vmatpush2.bf16.msra.mxu0 0
    %2335 = vmatprep.mubr.bf16.mxu0 0
    %2336 = vmatmul.mubr.bf16.gmra.mxu0 %v2301
    %v2337 = vpop.f32.mrf.mxu0
    %v2338 = vadd.f32 0.0, %v2337
    %v2339 = vpop.f32.mrf.mxu0
    %v2340 = vadd.f32 0.0, %v2339
    %v2341 = vpop.f32.mrf.mxu0
    %v2342 = vpop.f32.mrf.mxu0
    %2343 = vdwg.mxu0
    %2344 = vst [vmem:[#allocation2] sm:$0xff] %v2338
    %2345 = vst [vmem:[#allocation2 + $0x8] sm:$0xff] %v2340
    // Predicated region
    $region46: #{mamba_lm_forward.1} parent=1 // pred_check
      _
    $region47: #{mamba_lm_forward.1} parent=1 // pred_check_branch
      %2347 = sbr.rel (0) target = $region49
    $region48: #{mamba_lm_forward.1} parent=1 // pred_region
      %s2349 = ssub.s32 256, 256
      %2350 = vsyncadd [#allocation3], %s2349
      %s2352 = sshll.u32 [#allocation2], 4
      %s2353 = int_to_ptr.vmem [resolvable:$true] %s2352
      %2355 = dma.vmem_to_hbm [thread:$0]  %s2353, 256, %s11, [#allocation3]
    $region49: #{mamba_lm_forward.1} parent=1 // pred_fallthru
      _
    // Predicated region
    $region50: #{mamba_lm_forward.1} parent=1 // pred_check
      _
    $region51: #{mamba_lm_forward.1} parent=1 // pred_check_branch
      %2357 = sbr.rel (0) target = $region53
    $region52: #{mamba_lm_forward.1} parent=1 // pred_region
      %2358 = dma.done [#allocation3], 256
    $region53: #{mamba_lm_forward.1} parent=1 // pred_fallthru
      _
    %2359 = vsyncpa [#allocation3], 1

</llo_original>
